<compile_context>
chip_gen: v7x
topology: tpu7x:2x2x1
jax: 0.10.0
libtpu: 0.0.40
codegen_flags: <defaults>
</compile_context>

<pallas_src>
import functools

import jax
import jax.numpy as jnp
from jax.experimental import pallas as pl
from jax.experimental.pallas import tpu as pltpu

C_IN = 448              # channels entering the final conv stage of efficientnet_b4
C_FEAT = 1792           # efficientnet_b4 feature width
HID = 384               # meta branch width
NUM_CLASSES = 33
NUM_CLASSES_PAD = 128   # lane-dense logits width (sliced back to 33 in wrapper)
CHUNK_N = 256           # strip-mine width over the 1792 conv output channels
BN_EPS = 1e-3           # torchvision EfficientNet BatchNorm eps
LN_EPS = 1e-5           # nn.LayerNorm default eps
NORM_EPS = 1e-12        # epsilon for L2 normalization (avoids 0-norm NaN)


def _layer_norm(x, g, b, eps=LN_EPS):
    mu = jnp.mean(x, axis=-1, keepdims=True)
    xc = x - mu
    var = jnp.mean(xc * xc, axis=-1, keepdims=True)
    return xc * jax.lax.rsqrt(var + eps) * g + b


# ---------------------------------------------------------------------------
# Kernel 1: final EfficientNet stage (1x1 conv + folded BN + SiLU) + avg pool
# ---------------------------------------------------------------------------
def _conv_pool_kernel(x_ref, w_ref, out_ref, acc_ref, *, inv_hw, chunk_n,
                      bf16_silu):
    """grid = (B, HW_pad // TH); batch axis 'parallel', spatial 'arbitrary'.

    x_ref  : (1, TH, 449) bf16  -- column 448 is the ones column (BN shift).
    w_ref  : (449, 1792)  bf16  -- BN-folded conv weight, bias as last K row.
    out_ref: (1, 1, 1792) f32   -- pooled (mean over H*W) feature.
    acc_ref: (1, 1792)    f32   -- running spatial sum scratch.
    """
    j = pl.program_id(1)
    nj = pl.num_programs(1)

    @pl.when(j == 0)
    def _():
        acc_ref[...] = jnp.zeros_like(acc_ref)

    x = x_ref[0]                                   # (TH, 449) bf16
    n_chunks = w_ref.shape[1] // chunk_n

    def _chunk(c, carry):
        n0 = pl.multiple_of(c * chunk_n, chunk_n)
        # (TH, 449) @ (449, chunk_n) on the MXU with f32 accumulation; the BN
        # shift rides along as K row 448 against the ones column of x.
        h = jnp.dot(x, w_ref[:, pl.ds(n0, chunk_n)],
                    preferred_element_type=jnp.float32)
        if bf16_silu:
            hb = h.astype(jnp.bfloat16)            # v6e/v7x: bf16 EUP/VALU ~2x
            act = (hb * jax.nn.sigmoid(hb)).astype(jnp.float32)
        else:                                      # v5e: no bf16 EUP/VPU
            act = h * jax.nn.sigmoid(h)
        # Padded spatial rows (if any) are all-zero including the ones column,
        # so h == 0 there and SiLU(0) == 0: they contribute nothing here.
        acc_ref[:, pl.ds(n0, chunk_n)] += jnp.sum(act, axis=0, keepdims=True)
        return carry

    jax.lax.fori_loop(0, n_chunks, _chunk, 0, unroll=True)

    @pl.when(j == nj - 1)
    def _():
        out_ref[0] = (acc_ref[...] * inv_hw).astype(out_ref.dtype)


# ---------------------------------------------------------------------------
# Kernel 2: ARC head, batched over B (single invocation, everything in VMEM)
# ---------------------------------------------------------------------------
def _head_kernel(feat_ref, meta_ref,
                 w1_ref, b1_ref, g1_ref, be1_ref,
                 rw1_ref, rb1_ref, rg1_ref, rbe1_ref,
                 rw2_ref, rb2_ref, rg2_ref, rbe2_ref,
                 cwf_ref, cwm_ref, out_ref):
    # L2-normalize ONLY the 1792-d image feature (matches the PyTorch forward:
    # out_meta is concatenated un-normalized; class_weight rows are normalized
    # over the full 2176 dims in the wrapper).
    feat = feat_ref[...]                                        # (B, 1792) f32
    feat = feat * jax.lax.rsqrt(
        jnp.sum(feat * feat, axis=-1, keepdims=True) + NORM_EPS)

    # meta branch: Linear(2,384) -> ReLU -> LayerNorm -> ResNormLayer(384).
    # meta/w1 are zero-padded to K=8 in the wrapper (standard-shaped tiny dot).
    h1 = jnp.dot(meta_ref[...], w1_ref[...],
                 preferred_element_type=jnp.float32) + b1_ref[...]  # (B, 384)
    h1 = jnp.maximum(h1, 0.0)
    h1 = _layer_norm(h1, g1_ref[...], be1_ref[...])

    y = jnp.dot(h1, rw1_ref[...],
                preferred_element_type=jnp.float32) + rb1_ref[...]
    y = jnp.maximum(y, 0.0)
    y = _layer_norm(y, rg1_ref[...], rbe1_ref[...])
    y = jnp.dot(y, rw2_ref[...],
                preferred_element_type=jnp.float32) + rb2_ref[...]
    y = jnp.maximum(y, 0.0)
    y = _layer_norm(y, rg2_ref[...], rbe2_ref[...])
    meta_out = h1 + y                                           # (B, 384)

    # cosine head: cwf/cwm are pre-L2-normalized (over all 2176 dims), scaled
    # by exp(logit_scale), transposed, and zero-padded to lane-dense N=128.
    logits = (jnp.dot(feat, cwf_ref[...], preferred_element_type=jnp.float32)
              + jnp.dot(meta_out, cwm_ref[...],
                        preferred_element_type=jnp.float32))    # (B, 128)
    out_ref[...] = logits.astype(out_ref.dtype)


# ---------------------------------------------------------------------------
# Wrapper
# ---------------------------------------------------------------------------
def _pick_row_tile(hw, max_tile=512):
    """Returns (TH, HW_pad): MXU-M-aligned row tile and (possibly padded) HW."""
    if hw <= max_tile:
        return hw, hw                       # full extent, no padding
    for align in (256, 128, 8):             # prefer MXU-M-aligned divisors
        for cand in range(max_tile, align - 1, -align):
            if hw % cand == 0:
                return cand, hw
    th = 256                                # no clean divisor: pad (safe, see
    return th, ((hw + th - 1) // th) * th   # padded-row note in the kernel)


def _resident_spec(shape):
    """Grid-invariant operand: constant index_map; single pipeline buffer
    (the second buffer would be dead VMEM since the block never changes)."""
    idx = lambda b, j: (0,) * len(shape)
    try:
        return pl.BlockSpec(shape, idx, pipeline_mode=pl.Buffered(1))
    except Exception:       # older jax without pipeline_mode / Buffered(1)
        return pl.BlockSpec(shape, idx)


def arc_efficientnet_forward(x_feat_nchw, meta, params, *, max_row_tile=512,
                             bf16_silu=True):
    """x_feat_nchw: (B, 448, H, W) NCHW feature map feeding the final conv
    stage.  meta: (B, >=2); only meta[:, :2] is used (matches PyTorch).
    Set bf16_silu=False on v5e (no bf16 EUP/VPU)."""
    B, c_in, H, W = x_feat_nchw.shape
    assert c_in == C_IN
    assert C_FEAT % CHUNK_N == 0
    HW = H * W
    TH, HW_pad = _pick_row_tile(HW, max_row_tile)
    n_hw = HW_pad // TH

    # ---- fold BN(eval) into the conv; fold the shift as an extra K row -----
    scale = params["bn_gamma"] * jax.lax.rsqrt(params["bn_var"] + BN_EPS)
    w_folded = params["conv_w"] * scale                          # (448, 1792)
    shift = params["bn_beta"] - params["bn_mean"] * scale        # (1, 1792)
    w_aug = jnp.concatenate([w_folded, shift], axis=0).astype(jnp.bfloat16)

    # ---- class weights: normalize rows over all 2176 dims (as in torch),
    # fold exp(logit_scale), split into feat/meta halves, transpose, pad N=128.
    cw = params["class_weight"]
    cw = cw * jax.lax.rsqrt(jnp.sum(cw * cw, axis=-1, keepdims=True) + NORM_EPS)
    cw = (cw * jnp.exp(params["logit_scale"])).astype(jnp.float32)
    cwf_t = jnp.zeros((C_FEAT, NUM_CLASSES_PAD), jnp.float32)
    cwf_t = cwf_t.at[:, :NUM_CLASSES].set(cw[:, :C_FEAT].T)
    cwm_t = jnp.zeros((HID, NUM_CLASSES_PAD), jnp.float32)
    cwm_t = cwm_t.at[:, :NUM_CLASSES].set(cw[:, C_FEAT:].T)

    # ---- meta branch first layer: pad K 2 -> 8 for a standard-shaped dot ---
    meta2 = meta[:, :2].astype(jnp.float32)
    meta_pad = jnp.zeros((B, 8), jnp.float32).at[:, :2].set(meta2)
    w1_pad = jnp.zeros((8, HID), jnp.float32).at[:2, :].set(params["meta_w1"])

    # ---- activation layout plumbing: bf16 BEFORE the transpose -------------
    # TODO(synk): the transpose is still a separate XLA op (one HBM round trip
    # of the feature map, now at 2 bytes/elem); ideally the backbone emits
    # channels-last directly.
    x = x_feat_nchw.astype(jnp.bfloat16)
    x = jnp.transpose(x, (0, 2, 3, 1)).reshape(B, HW, C_IN)
    ones = jnp.ones((B, HW, 1), jnp.bfloat16)
    x = jnp.concatenate([x, ones], axis=-1)                      # (B, HW, 449)
    if HW_pad != HW:
        x = jnp.pad(x, ((0, 0), (0, HW_pad - HW), (0, 0)))       # zero rows

    conv_kernel = functools.partial(
        _conv_pool_kernel, inv_hw=1.0 / HW, chunk_n=CHUNK_N, bf16_silu=bf16_silu)

    pooled = pl.pallas_call(
        conv_kernel,
        out_shape=jax.ShapeDtypeStruct((B, 1, C_FEAT), jnp.float32),
        grid_spec=pltpu.PrefetchScalarGridSpec(
            num_scalar_prefetch=0,
            grid=(B, n_hw),
            in_specs=[pl.BlockSpec((1, TH, C_IN + 1), lambda b, j: (b, j, 0)),
                      _resident_spec((C_IN + 1, C_FEAT))],
            out_specs=pl.BlockSpec((1, 1, C_FEAT), lambda b, j: (b, 0, 0)),
            scratch_shapes=[pltpu.VMEM((1, C_FEAT), jnp.float32)]),
        compiler_params=pltpu.CompilerParams(
            dimension_semantics=("parallel", "arbitrary"),
            vmem_limit_bytes=32 * 1024 * 1024),
    )(x, w_aug)
    pooled = pooled.reshape(B, C_FEAT)

    head_params = (w1_pad, params["meta_b1"],
                   params["meta_ln_g"], params["meta_ln_b"],
                   params["res_w1"], params["res_b1"],
                   params["res_ln1_g"], params["res_ln1_b"],
                   params["res_w2"], params["res_b2"],
                   params["res_ln2_g"], params["res_ln2_b"])

    # Head batched over B in one tiny VMEM-resident call (default whole-array
    # specs): ~2.5 MB of operands, M=B matmuls.
    logits = pl.pallas_call(
        _head_kernel,
        out_shape=jax.ShapeDtypeStruct((B, NUM_CLASSES_PAD), jnp.float32),
    )(pooled, meta_pad, *head_params, cwf_t, cwm_t)

    return logits[:, :NUM_CLASSES]


def init_params(key):
    ks = jax.random.split(key, 12)

    def nrm(k, shape, s=0.05):
        return (jax.random.normal(k, shape) * s).astype(jnp.float32)

    return dict(
        # final Conv2dNormActivation(448 -> 1792): torch weight (1792,448,1,1)
        # stored here as (in, out) for x @ W.
        conv_w=nrm(ks[0], (C_IN, C_FEAT)),
        bn_gamma=jnp.ones((1, C_FEAT), jnp.float32),
        bn_beta=jnp.zeros((1, C_FEAT), jnp.float32),
        bn_mean=nrm(ks[1], (1, C_FEAT), 0.1),
        bn_var=jax.random.uniform(ks[2], (1, C_FEAT), jnp.float32, 0.5, 1.5),
        # meta = Sequential(Linear(2,384), ReLU, LayerNorm(384), ResNormLayer(384))
        meta_w1=nrm(ks[3], (2, HID)),
        meta_b1=nrm(ks[4], (1, HID)),
        meta_ln_g=jnp.ones((1, HID), jnp.float32),
        meta_ln_b=jnp.zeros((1, HID), jnp.float32),
        res_w1=nrm(ks[5], (HID, HID)),
        res_b1=nrm(ks[6], (1, HID)),
        res_ln1_g=jnp.ones((1, HID), jnp.float32),
        res_ln1_b=jnp.zeros((1, HID), jnp.float32),
        res_w2=nrm(ks[7], (HID, HID)),
        res_b2=nrm(ks[8], (1, HID)),
        res_ln2_g=jnp.ones((1, HID), jnp.float32),
        res_ln2_b=jnp.zeros((1, HID), jnp.float32),
        # nn.Parameter(torch.rand(33, 1792+384)) and torch.rand(())
        class_weight=jax.random.uniform(ks[9], (NUM_CLASSES, C_FEAT + HID),
                                        jnp.float32),
        logit_scale=jax.random.uniform(ks[10], (), jnp.float32),
    )


if __name__ == "__main__":
    key = jax.random.PRNGKey(0)
    kp, kx, km = jax.random.split(key, 3)
    params = init_params(kp)

    B, H, W = 2, 4, 4
    x_feat = jax.random.normal(kx, (B, C_IN, H, W), jnp.float32)  # NCHW
    meta = jax.random.normal(km, (B, 5), jnp.float32)             # only [:, :2] used

    logits = arc_efficientnet_forward(x_feat, meta, params)
    logits = jax.block_until_ready(logits)

    assert logits.shape == (B, NUM_CLASSES), logits.shape
    assert bool(jnp.all(jnp.isfinite(logits)))
    print("KERNEL_OK")
</pallas_src>

<mosaic_0001>
module attributes {stable_mosaic.version = 11 : i64} {
  func.func @_conv_pool_kernel(%arg0: i32, %arg1: i32, %arg2: memref<1x16x449xbf16, #tpu.memory_space<vmem>>, %arg3: memref<449x1792xbf16, #tpu.memory_space<vmem>>, %arg4: memref<1x1x1792xf32, #tpu.memory_space<vmem>>, %arg5: memref<1x1792xf32, #tpu.memory_space<vmem>>) attributes {dimension_semantics = [#tpu.dimension_semantics<parallel>, #tpu.dimension_semantics<arbitrary>], iteration_bounds = array<i64: 2, 1>, scalar_prefetch = 0 : i64, scratch_operands = 1 : i64, tpu.core_type = #tpu.core_type<tc>, window_params = [{transform_indices = @transform_0, window_bounds = array<i64: 1, 16, 449>}, {pipeline_mode = #tpu.pipeline_mode<synchronous>, transform_indices = @transform_1, window_bounds = array<i64: 449, 1792>}, {transform_indices = @transform_2, window_bounds = array<i64: 1, 1, 1792>}]} {
    %c0_i32 = arith.constant 0 : i32
    %0 = arith.cmpi eq, %arg1, %c0_i32 : i32
    %1 = arith.extui %0 : i1 to i32
    %c0_i32_0 = arith.constant 0 : i32
    %2 = arith.cmpi ne, %1, %c0_i32_0 : i32
    scf.if %2 {
      %cst_53 = arith.constant 0.000000e+00 : f32
      %148 = vector.broadcast %cst_53 : f32 to vector<1x1792xf32>
      %c0_54 = arith.constant 0 : index
      %c0_55 = arith.constant 0 : index
      %149 = vector.load %arg5[%c0_54, %c0_55] : memref<1x1792xf32, #tpu.memory_space<vmem>>, vector<1x1792xf32>
      tpu.vector_store %arg5[%c0_54, %c0_55], %148 {strides = array<i32>} : memref<1x1792xf32, #tpu.memory_space<vmem>>, vector<1x1792xf32>,
    } else {
    }
    %c0 = arith.constant 0 : index
    %c0_1 = arith.constant 0 : index
    %c0_2 = arith.constant 0 : index
    %3 = vector.load %arg2[%c0, %c0_1, %c0_2] : memref<1x16x449xbf16, #tpu.memory_space<vmem>>, vector<1x16x449xbf16>
    %4 = vector.shape_cast %3 : vector<1x16x449xbf16> to vector<16x449xbf16>
    %c0_i32_3 = arith.constant 0 : i32
    %c256_i32 = arith.constant 256 : i32
    %5 = arith.muli %c0_i32_3, %c256_i32 : i32
    %6 = tpu.assume_multiple %5, 256 : i32
    %c0_4 = arith.constant 0 : index
    %7 = arith.index_cast %6 : i32 to index
    %8 = vector.load %arg3[%c0_4, %7] : memref<449x1792xbf16, #tpu.memory_space<vmem>>, vector<449x256xbf16>
    %cst = arith.constant dense<0.000000e+00> : vector<16x256xf32>
    %9 = tpu.matmul %4, %8, %cst {dimension_numbers = #tpu.dot_dimension_numbers<[1], [0], [0], [1], [0, 0, 1, 1], [], []>} : vector<16x449xbf16>, vector<449x256xbf16>, vector<16x256xf32> -> vector<16x256xf32>
    %10 = arith.truncf %9 : vector<16x256xf32> to vector<16x256xbf16>
    %11 = arith.negf %10 : vector<16x256xbf16>
    %12 = math.exp %11 : vector<16x256xbf16>
    %cst_5 = arith.constant 1.000000e+00 : bf16
    %13 = vector.broadcast %cst_5 : bf16 to vector<16x256xbf16>
    %14 = arith.addf %13, %12 : vector<16x256xbf16>
    %15 = arith.divf %13, %14 : vector<16x256xbf16>
    %16 = arith.mulf %10, %15 : vector<16x256xbf16>
    %17 = arith.extf %16 : vector<16x256xbf16> to vector<16x256xf32>
    %c0_6 = arith.constant 0 : index
    %18 = arith.index_cast %6 : i32 to index
    %19 = vector.load %arg5[%c0_6, %18] : memref<1x1792xf32, #tpu.memory_space<vmem>>, vector<1x256xf32>
    %cst_7 = arith.constant dense<0.000000e+00> : vector<256xf32>
    %20 = vector.multi_reduction <add>, %17, %cst_7 [0] : vector<16x256xf32> to vector<256xf32>
    %21 = vector.shape_cast %20 : vector<256xf32> to vector<1x256xf32>
    %22 = arith.addf %19, %21 : vector<1x256xf32>
    %c0_8 = arith.constant 0 : index
    %23 = arith.index_cast %6 : i32 to index
    %24 = vector.load %arg5[%c0_8, %23] : memref<1x1792xf32, #tpu.memory_space<vmem>>, vector<1x256xf32>
    tpu.vector_store %arg5[%c0_8, %23], %22 {strides = array<i32>} : memref<1x1792xf32, #tpu.memory_space<vmem>>, vector<1x256xf32>,
    %c1_i32 = arith.constant 1 : i32
    %c256_i32_9 = arith.constant 256 : i32
    %25 = arith.muli %c1_i32, %c256_i32_9 : i32
    %26 = tpu.assume_multiple %25, 256 : i32
    %c0_10 = arith.constant 0 : index
    %27 = arith.index_cast %26 : i32 to index
    %28 = vector.load %arg3[%c0_10, %27] : memref<449x1792xbf16, #tpu.memory_space<vmem>>, vector<449x256xbf16>
    %cst_11 = arith.constant dense<0.000000e+00> : vector<16x256xf32>
    %29 = tpu.matmul %4, %28, %cst_11 {dimension_numbers = #tpu.dot_dimension_numbers<[1], [0], [0], [1], [0, 0, 1, 1], [], []>} : vector<16x449xbf16>, vector<449x256xbf16>, vector<16x256xf32> -> vector<16x256xf32>
    %30 = arith.truncf %29 : vector<16x256xf32> to vector<16x256xbf16>
    %31 = arith.negf %30 : vector<16x256xbf16>
    %32 = math.exp %31 : vector<16x256xbf16>
    %cst_12 = arith.constant 1.000000e+00 : bf16
    %33 = vector.broadcast %cst_12 : bf16 to vector<16x256xbf16>
    %34 = arith.addf %33, %32 : vector<16x256xbf16>
    %35 = arith.divf %33, %34 : vector<16x256xbf16>
    %36 = arith.mulf %30, %35 : vector<16x256xbf16>
    %37 = arith.extf %36 : vector<16x256xbf16> to vector<16x256xf32>
    %c0_13 = arith.constant 0 : index
    %38 = arith.index_cast %26 : i32 to index
    %39 = vector.load %arg5[%c0_13, %38] : memref<1x1792xf32, #tpu.memory_space<vmem>>, vector<1x256xf32>
    %cst_14 = arith.constant dense<0.000000e+00> : vector<256xf32>
    %40 = vector.multi_reduction <add>, %37, %cst_14 [0] : vector<16x256xf32> to vector<256xf32>
    %41 = vector.shape_cast %40 : vector<256xf32> to vector<1x256xf32>
    %42 = arith.addf %39, %41 : vector<1x256xf32>
    %c0_15 = arith.constant 0 : index
    %43 = arith.index_cast %26 : i32 to index
    %44 = vector.load %arg5[%c0_15, %43] : memref<1x1792xf32, #tpu.memory_space<vmem>>, vector<1x256xf32>
    tpu.vector_store %arg5[%c0_15, %43], %42 {strides = array<i32>} : memref<1x1792xf32, #tpu.memory_space<vmem>>, vector<1x256xf32>,
    %c2_i32 = arith.constant 2 : i32
    %c256_i32_16 = arith.constant 256 : i32
    %45 = arith.muli %c2_i32, %c256_i32_16 : i32
    %46 = tpu.assume_multiple %45, 256 : i32
    %c0_17 = arith.constant 0 : index
    %47 = arith.index_cast %46 : i32 to index
    %48 = vector.load %arg3[%c0_17, %47] : memref<449x1792xbf16, #tpu.memory_space<vmem>>, vector<449x256xbf16>
    %cst_18 = arith.constant dense<0.000000e+00> : vector<16x256xf32>
    %49 = tpu.matmul %4, %48, %cst_18 {dimension_numbers = #tpu.dot_dimension_numbers<[1], [0], [0], [1], [0, 0, 1, 1], [], []>} : vector<16x449xbf16>, vector<449x256xbf16>, vector<16x256xf32> -> vector<16x256xf32>
    %50 = arith.truncf %49 : vector<16x256xf32> to vector<16x256xbf16>
    %51 = arith.negf %50 : vector<16x256xbf16>
    %52 = math.exp %51 : vector<16x256xbf16>
    %cst_19 = arith.constant 1.000000e+00 : bf16
    %53 = vector.broadcast %cst_19 : bf16 to vector<16x256xbf16>
    %54 = arith.addf %53, %52 : vector<16x256xbf16>
    %55 = arith.divf %53, %54 : vector<16x256xbf16>
    %56 = arith.mulf %50, %55 : vector<16x256xbf16>
    %57 = arith.extf %56 : vector<16x256xbf16> to vector<16x256xf32>
    %c0_20 = arith.constant 0 : index
    %58 = arith.index_cast %46 : i32 to index
    %59 = vector.load %arg5[%c0_20, %58] : memref<1x1792xf32, #tpu.memory_space<vmem>>, vector<1x256xf32>
    %cst_21 = arith.constant dense<0.000000e+00> : vector<256xf32>
    %60 = vector.multi_reduction <add>, %57, %cst_21 [0] : vector<16x256xf32> to vector<256xf32>
    %61 = vector.shape_cast %60 : vector<256xf32> to vector<1x256xf32>
    %62 = arith.addf %59, %61 : vector<1x256xf32>
    %c0_22 = arith.constant 0 : index
    %63 = arith.index_cast %46 : i32 to index
    %64 = vector.load %arg5[%c0_22, %63] : memref<1x1792xf32, #tpu.memory_space<vmem>>, vector<1x256xf32>
    tpu.vector_store %arg5[%c0_22, %63], %62 {strides = array<i32>} : memref<1x1792xf32, #tpu.memory_space<vmem>>, vector<1x256xf32>,
    %c3_i32 = arith.constant 3 : i32
    %c256_i32_23 = arith.constant 256 : i32
    %65 = arith.muli %c3_i32, %c256_i32_23 : i32
    %66 = tpu.assume_multiple %65, 256 : i32
    %c0_24 = arith.constant 0 : index
    %67 = arith.index_cast %66 : i32 to index
    %68 = vector.load %arg3[%c0_24, %67] : memref<449x1792xbf16, #tpu.memory_space<vmem>>, vector<449x256xbf16>
    %cst_25 = arith.constant dense<0.000000e+00> : vector<16x256xf32>
    %69 = tpu.matmul %4, %68, %cst_25 {dimension_numbers = #tpu.dot_dimension_numbers<[1], [0], [0], [1], [0, 0, 1, 1], [], []>} : vector<16x449xbf16>, vector<449x256xbf16>, vector<16x256xf32> -> vector<16x256xf32>
    %70 = arith.truncf %69 : vector<16x256xf32> to vector<16x256xbf16>
    %71 = arith.negf %70 : vector<16x256xbf16>
    %72 = math.exp %71 : vector<16x256xbf16>
    %cst_26 = arith.constant 1.000000e+00 : bf16
    %73 = vector.broadcast %cst_26 : bf16 to vector<16x256xbf16>
    %74 = arith.addf %73, %72 : vector<16x256xbf16>
    %75 = arith.divf %73, %74 : vector<16x256xbf16>
    %76 = arith.mulf %70, %75 : vector<16x256xbf16>
    %77 = arith.extf %76 : vector<16x256xbf16> to vector<16x256xf32>
    %c0_27 = arith.constant 0 : index
    %78 = arith.index_cast %66 : i32 to index
    %79 = vector.load %arg5[%c0_27, %78] : memref<1x1792xf32, #tpu.memory_space<vmem>>, vector<1x256xf32>
    %cst_28 = arith.constant dense<0.000000e+00> : vector<256xf32>
    %80 = vector.multi_reduction <add>, %77, %cst_28 [0] : vector<16x256xf32> to vector<256xf32>
    %81 = vector.shape_cast %80 : vector<256xf32> to vector<1x256xf32>
    %82 = arith.addf %79, %81 : vector<1x256xf32>
    %c0_29 = arith.constant 0 : index
    %83 = arith.index_cast %66 : i32 to index
    %84 = vector.load %arg5[%c0_29, %83] : memref<1x1792xf32, #tpu.memory_space<vmem>>, vector<1x256xf32>
    tpu.vector_store %arg5[%c0_29, %83], %82 {strides = array<i32>} : memref<1x1792xf32, #tpu.memory_space<vmem>>, vector<1x256xf32>,
    %c4_i32 = arith.constant 4 : i32
    %c256_i32_30 = arith.constant 256 : i32
    %85 = arith.muli %c4_i32, %c256_i32_30 : i32
    %86 = tpu.assume_multiple %85, 256 : i32
    %c0_31 = arith.constant 0 : index
    %87 = arith.index_cast %86 : i32 to index
    %88 = vector.load %arg3[%c0_31, %87] : memref<449x1792xbf16, #tpu.memory_space<vmem>>, vector<449x256xbf16>
    %cst_32 = arith.constant dense<0.000000e+00> : vector<16x256xf32>
    %89 = tpu.matmul %4, %88, %cst_32 {dimension_numbers = #tpu.dot_dimension_numbers<[1], [0], [0], [1], [0, 0, 1, 1], [], []>} : vector<16x449xbf16>, vector<449x256xbf16>, vector<16x256xf32> -> vector<16x256xf32>
    %90 = arith.truncf %89 : vector<16x256xf32> to vector<16x256xbf16>
    %91 = arith.negf %90 : vector<16x256xbf16>
    %92 = math.exp %91 : vector<16x256xbf16>
    %cst_33 = arith.constant 1.000000e+00 : bf16
    %93 = vector.broadcast %cst_33 : bf16 to vector<16x256xbf16>
    %94 = arith.addf %93, %92 : vector<16x256xbf16>
    %95 = arith.divf %93, %94 : vector<16x256xbf16>
    %96 = arith.mulf %90, %95 : vector<16x256xbf16>
    %97 = arith.extf %96 : vector<16x256xbf16> to vector<16x256xf32>
    %c0_34 = arith.constant 0 : index
    %98 = arith.index_cast %86 : i32 to index
    %99 = vector.load %arg5[%c0_34, %98] : memref<1x1792xf32, #tpu.memory_space<vmem>>, vector<1x256xf32>
    %cst_35 = arith.constant dense<0.000000e+00> : vector<256xf32>
    %100 = vector.multi_reduction <add>, %97, %cst_35 [0] : vector<16x256xf32> to vector<256xf32>
    %101 = vector.shape_cast %100 : vector<256xf32> to vector<1x256xf32>
    %102 = arith.addf %99, %101 : vector<1x256xf32>
    %c0_36 = arith.constant 0 : index
    %103 = arith.index_cast %86 : i32 to index
    %104 = vector.load %arg5[%c0_36, %103] : memref<1x1792xf32, #tpu.memory_space<vmem>>, vector<1x256xf32>
    tpu.vector_store %arg5[%c0_36, %103], %102 {strides = array<i32>} : memref<1x1792xf32, #tpu.memory_space<vmem>>, vector<1x256xf32>,
    %c5_i32 = arith.constant 5 : i32
    %c256_i32_37 = arith.constant 256 : i32
    %105 = arith.muli %c5_i32, %c256_i32_37 : i32
    %106 = tpu.assume_multiple %105, 256 : i32
    %c0_38 = arith.constant 0 : index
    %107 = arith.index_cast %106 : i32 to index
    %108 = vector.load %arg3[%c0_38, %107] : memref<449x1792xbf16, #tpu.memory_space<vmem>>, vector<449x256xbf16>
    %cst_39 = arith.constant dense<0.000000e+00> : vector<16x256xf32>
    %109 = tpu.matmul %4, %108, %cst_39 {dimension_numbers = #tpu.dot_dimension_numbers<[1], [0], [0], [1], [0, 0, 1, 1], [], []>} : vector<16x449xbf16>, vector<449x256xbf16>, vector<16x256xf32> -> vector<16x256xf32>
    %110 = arith.truncf %109 : vector<16x256xf32> to vector<16x256xbf16>
    %111 = arith.negf %110 : vector<16x256xbf16>
    %112 = math.exp %111 : vector<16x256xbf16>
    %cst_40 = arith.constant 1.000000e+00 : bf16
    %113 = vector.broadcast %cst_40 : bf16 to vector<16x256xbf16>
    %114 = arith.addf %113, %112 : vector<16x256xbf16>
    %115 = arith.divf %113, %114 : vector<16x256xbf16>
    %116 = arith.mulf %110, %115 : vector<16x256xbf16>
    %117 = arith.extf %116 : vector<16x256xbf16> to vector<16x256xf32>
    %c0_41 = arith.constant 0 : index
    %118 = arith.index_cast %106 : i32 to index
    %119 = vector.load %arg5[%c0_41, %118] : memref<1x1792xf32, #tpu.memory_space<vmem>>, vector<1x256xf32>
    %cst_42 = arith.constant dense<0.000000e+00> : vector<256xf32>
    %120 = vector.multi_reduction <add>, %117, %cst_42 [0] : vector<16x256xf32> to vector<256xf32>
    %121 = vector.shape_cast %120 : vector<256xf32> to vector<1x256xf32>
    %122 = arith.addf %119, %121 : vector<1x256xf32>
    %c0_43 = arith.constant 0 : index
    %123 = arith.index_cast %106 : i32 to index
    %124 = vector.load %arg5[%c0_43, %123] : memref<1x1792xf32, #tpu.memory_space<vmem>>, vector<1x256xf32>
    tpu.vector_store %arg5[%c0_43, %123], %122 {strides = array<i32>} : memref<1x1792xf32, #tpu.memory_space<vmem>>, vector<1x256xf32>,
    %c6_i32 = arith.constant 6 : i32
    %c256_i32_44 = arith.constant 256 : i32
    %125 = arith.muli %c6_i32, %c256_i32_44 : i32
    %126 = tpu.assume_multiple %125, 256 : i32
    %c0_45 = arith.constant 0 : index
    %127 = arith.index_cast %126 : i32 to index
    %128 = vector.load %arg3[%c0_45, %127] : memref<449x1792xbf16, #tpu.memory_space<vmem>>, vector<449x256xbf16>
    %cst_46 = arith.constant dense<0.000000e+00> : vector<16x256xf32>
    %129 = tpu.matmul %4, %128, %cst_46 {dimension_numbers = #tpu.dot_dimension_numbers<[1], [0], [0], [1], [0, 0, 1, 1], [], []>} : vector<16x449xbf16>, vector<449x256xbf16>, vector<16x256xf32> -> vector<16x256xf32>
    %130 = arith.truncf %129 : vector<16x256xf32> to vector<16x256xbf16>
    %131 = arith.negf %130 : vector<16x256xbf16>
    %132 = math.exp %131 : vector<16x256xbf16>
    %cst_47 = arith.constant 1.000000e+00 : bf16
    %133 = vector.broadcast %cst_47 : bf16 to vector<16x256xbf16>
    %134 = arith.addf %133, %132 : vector<16x256xbf16>
    %135 = arith.divf %133, %134 : vector<16x256xbf16>
    %136 = arith.mulf %130, %135 : vector<16x256xbf16>
    %137 = arith.extf %136 : vector<16x256xbf16> to vector<16x256xf32>
    %c0_48 = arith.constant 0 : index
    %138 = arith.index_cast %126 : i32 to index
    %139 = vector.load %arg5[%c0_48, %138] : memref<1x1792xf32, #tpu.memory_space<vmem>>, vector<1x256xf32>
    %cst_49 = arith.constant dense<0.000000e+00> : vector<256xf32>
    %140 = vector.multi_reduction <add>, %137, %cst_49 [0] : vector<16x256xf32> to vector<256xf32>
    %141 = vector.shape_cast %140 : vector<256xf32> to vector<1x256xf32>
    %142 = arith.addf %139, %141 : vector<1x256xf32>
    %c0_50 = arith.constant 0 : index
    %143 = arith.index_cast %126 : i32 to index
    %144 = vector.load %arg5[%c0_50, %143] : memref<1x1792xf32, #tpu.memory_space<vmem>>, vector<1x256xf32>
    tpu.vector_store %arg5[%c0_50, %143], %142 {strides = array<i32>} : memref<1x1792xf32, #tpu.memory_space<vmem>>, vector<1x256xf32>,
    %c7_i32 = arith.constant 7 : i32
    %c0_i32_51 = arith.constant 0 : i32
    %145 = arith.cmpi eq, %arg1, %c0_i32_51 : i32
    %146 = arith.extui %145 : i1 to i32
    %c0_i32_52 = arith.constant 0 : i32
    %147 = arith.cmpi ne, %146, %c0_i32_52 : i32
    scf.if %147 {
      %c0_53 = arith.constant 0 : index
      %c0_54 = arith.constant 0 : index
      %148 = vector.load %arg5[%c0_53, %c0_54] : memref<1x1792xf32, #tpu.memory_space<vmem>>, vector<1x1792xf32>
      %cst_55 = arith.constant 6.250000e-02 : f32
      %149 = vector.broadcast %cst_55 : f32 to vector<1x1792xf32>
      %150 = arith.mulf %148, %149 : vector<1x1792xf32>
      %c0_56 = arith.constant 0 : index
      %c0_57 = arith.constant 0 : index
      %c0_58 = arith.constant 0 : index
      %151 = vector.load %arg4[%c0_56, %c0_57, %c0_58] : memref<1x1x1792xf32, #tpu.memory_space<vmem>>, vector<1x1x1792xf32>
      %152 = vector.shape_cast %151 : vector<1x1x1792xf32> to vector<1x1792xf32>
      %153 = vector.shape_cast %150 : vector<1x1792xf32> to vector<1x1x1792xf32>
      tpu.vector_store %arg4[%c0_56, %c0_57, %c0_58], %153 {strides = array<i32>} : memref<1x1x1792xf32, #tpu.memory_space<vmem>>, vector<1x1x1792xf32>,
    } else {
    }
    return
  }
  func.func @transform_0(%arg0: i32, %arg1: i32) -> (i32, i32, i32) {
    %c0_i32 = arith.constant 0 : i32
    %c0_i32_0 = arith.constant 0 : i32
    return %arg0, %arg1, %c0_i32 : i32, i32, i32
  }
  func.func @transform_1(%arg0: i32, %arg1: i32) -> (i32, i32) {
    %c0_i32 = arith.constant 0 : i32
    %c0_i32_0 = arith.constant 0 : i32
    %c0_i32_1 = arith.constant 0 : i32
    return %c0_i32, %c0_i32_0 : i32, i32
  }
  func.func @transform_2(%arg0: i32, %arg1: i32) -> (i32, i32, i32) {
    %c0_i32 = arith.constant 0 : i32
    %c0_i32_0 = arith.constant 0 : i32
    %c0_i32_1 = arith.constant 0 : i32
    return %arg0, %c0_i32, %c0_i32_0 : i32, i32, i32
  }
}

</mosaic_0001>

<llo_original>
// kernel: tpu_custom_call.1
$region0: #{tpu_custom_call.1}
  #allocation0 [shape = 'u32[]', space=smem, size = 0x4, offset = 0x4, fixed_abs, tag = 'smem constant byte address 0x4 - core index']
  #allocation1 [shape = 'u32[144,128]{1,0:T(1,128)}', space=vmem, size = 0x12000, scoped, tag = 'internal scratch']
  #allocation2 [shape = 'f32[1,1792]{1,0:T(1,128)}', space=vmem, size = 0x1c00, scoped, tag = 'scratch operand']
  %s0 = inlined_call_operand.hbm [shape: bf16[2,16,449], index: 0, kind: input, shape index: {}]
  %s1 = inlined_call_operand.hbm [shape: bf16[449,1792], index: 1, kind: input, shape index: {}]
  %s2 = inlined_call_operand.hbm [shape: f32[2,1,1792], index: 2, kind: output, shape index: {}]
  %s3 = sld [smem:[#allocation0]]
  $region57: #{tpu_custom_call.1} parent=0
    _
  %s5 = ssub.s32 1, %s3
  %s6 = scalar_select 0, %s5, %s3
  $region1: #{tpu_custom_call.1} parent=0
    #allocation3 [shape = 'u8[32768]{0}', space=vmem, size = 0x8000, scoped, tag = 'input window, operand 0']
    #allocation4 [shape = 's32[2]{0}', space=sflag, size = 0x8, scoped, tag = 'scoped memory for tpu_custom_call.1']
    #allocation5 [shape = 's32[2]{0}', space=sflag, size = 0x8, scoped, tag = 'scoped memory for tpu_custom_call.1']
    #allocation6 [shape = 'u8[1634304]{0}', space=vmem, size = 0x18f000, scoped, tag = 'input window, operand 1, single buffered']
    #allocation7 [shape = 's32[1]{0}', space=sflag, size = 0x4, scoped, tag = 'scoped memory for tpu_custom_call.1']
    #allocation8 [shape = 'u8[14336]{0}', space=vmem, size = 0x3800, scoped, tag = 'output window, operand 0']
    %7 = vsyncpa [#allocation4], 0
    %s8 = scalar_lea.sflag [#allocation4], 1
    %9 = vsyncpa %s8, 0
    %10 = vsyncpa [#allocation7], 0
    %11 = vsyncpa [#allocation5], 0
    %s12 = scalar_lea.sflag [#allocation5], 1
    %13 = vsyncpa %s12, 0
    loop: start=0, step=1, limit=4
    $region2: #{tpu_custom_call.1} parent=1 // loop_pre_header
      _
    $region3: #{tpu_custom_call.1} parent=1 // loop_header
      %s15 = sphi 0, %s19
      %p16 = scmp.ge.s32.totalorder %s15, 4
      %s22 = sphi 0, %s34
      %s23 = sphi 0, %s30
      %s24 = sphi 0, %s22
      %s25 = sphi 0, %s23
      %s26 = sphi 0, %s24
      %s27 = sphi 0, %s25
      %s39 = sphi 0, %s41
      %s42 = sphi 0, %s39
      %s43 = sphi 0, %s42
      %s59 = sphi 0, %s43
      %s63 = sphi 0, %s63
      %s65 = sphi 0, %s63
      %s66 = sphi 0, %s65
      %s80 = sphi 0, %s66
      %s86 = sphi 0, %s88
      %s89 = sphi 0, %s86
      %s90 = sphi 0, %s89
      %s106 = sphi 0, %s90
    $region4: #{tpu_custom_call.1} parent=1 // loop_header_branch
      %18 = sbr.rel (%p16) target = $region8
    $region5: #{tpu_custom_call.1} parent=1 // loop_body
      %s20 = ssub.s32 %s15, 1
      %s21 = ssub.s32 %s15, 2
      %s28 = sadd.s32 1, %s23
      %p29 = scmp.ge.s32.totalorder %s28, 1
      %s30 = scalar_select %p29, 0, %s28
      %s31 = sadd.s32 1, %s22
      %s32 = scalar_select %p29, %s31, %s22
      %p33 = scmp.ge.s32.totalorder %s32, 2
      %s34 = scalar_select %p33, 0, %s32
      %s35 = ssub.s32 %s22, %s34
      %s36 = ssub.s32 %s23, %s30
      %s37 = sor.u32 %s35, %s36
      %p38 = scmp.eq.s32.totalorder %s37, 0
      %s40 = sadd.s32 %s39, 1
      %s41 = scalar_select %p38, %s39, %s40
      %p44 = pneg %p38
      %p45 = scmp.eq.s32.totalorder %s15, 1
      %p46 = por %p44, %p45
      %p47 = scmp.ne.s32.totalorder %s39, %s42
      %p48 = scmp.eq.s32.totalorder %s15, 0
      %p49 = por %p47, %p48
      %p50 = scmp.ne.s32.totalorder %s39, %s42
      %p51 = scmp.eq.s32.totalorder %s20, 1
      %p52 = por %p50, %p51
      %p53 = scmp.ne.s32.totalorder %s42, %s43
      %p54 = scmp.eq.s32.totalorder %s20, 0
      %p55 = por %p53, %p54
      %p56 = scmp.ne.s32.totalorder %s42, %s43
      %p57 = scmp.eq.s32.totalorder %s21, 1
      %p58 = por %p56, %p57
      %p60 = scmp.ne.s32.totalorder %s43, %s59
      %p61 = scmp.eq.s32.totalorder %s21, 0
      %p62 = por %p60, %p61
      %s64 = sadd.s32 %s63, 1
      %p67 = scmp.eq.s32.totalorder %s15, 1
      %p68 = scmp.ne.s32.totalorder %s63, %s65
      %p69 = scmp.eq.s32.totalorder %s15, 0
      %p70 = por %p68, %p69
      %p71 = scmp.ne.s32.totalorder %s63, %s65
      %p72 = scmp.eq.s32.totalorder %s20, 1
      %p73 = por %p71, %p72
      %p74 = scmp.ne.s32.totalorder %s65, %s66
      %p75 = scmp.eq.s32.totalorder %s20, 0
      %p76 = por %p74, %p75
      %p77 = scmp.ne.s32.totalorder %s65, %s66
      %p78 = scmp.eq.s32.totalorder %s21, 1
      %p79 = por %p77, %p78
      %p81 = scmp.ne.s32.totalorder %s66, %s80
      %p82 = scmp.eq.s32.totalorder %s21, 0
      %p83 = por %p81, %p82
      %s84 = ssub.s32 %s22, %s34
      %p85 = scmp.eq.s32.totalorder %s84, 0
      %s87 = sadd.s32 %s86, 1
      %s88 = scalar_select %p85, %s86, %s87
      %p91 = pneg %p85
      %p92 = scmp.eq.s32.totalorder %s15, 1
      %p93 = por %p91, %p92
      %p94 = scmp.ne.s32.totalorder %s86, %s89
      %p95 = scmp.eq.s32.totalorder %s15, 0
      %p96 = por %p94, %p95
      %p97 = scmp.ne.s32.totalorder %s86, %s89
      %p98 = scmp.eq.s32.totalorder %s20, 1
      %p99 = por %p97, %p98
      %p100 = scmp.ne.s32.totalorder %s89, %s90
      %p101 = scmp.eq.s32.totalorder %s20, 0
      %p102 = por %p100, %p101
      %p103 = scmp.ne.s32.totalorder %s89, %s90
      %p104 = scmp.eq.s32.totalorder %s21, 1
      %p105 = por %p103, %p104
      %p107 = scmp.ne.s32.totalorder %s90, %s106
      %p108 = scmp.eq.s32.totalorder %s21, 0
      %p109 = por %p107, %p108
      %p110 = scmp.le.s32.totalorder 1, %s15
      %p111 = scmp.lt.s32.totalorder %s15, 3
      %p112 = pnand %p110, %p111
      %p113 = pneg %p112
      // Predicated region
      $region9: #{tpu_custom_call.1} parent=5 // pred_check
        _
      $region10: #{tpu_custom_call.1} parent=5 // pred_check_branch
        %115 = sbr.rel (%p112) target = $region12
      $region11: #{tpu_custom_call.1} parent=5 // pred_region
        %s116 = ssub.s32 %s15, 1
        // Predicated region
        $region13: #{tpu_custom_call.1} parent=11 // pred_check
          %p117 = pneg %p76
        $region14: #{tpu_custom_call.1} parent=11 // pred_check_branch
          %119 = sbr.rel (%p117) target = $region16
        $region15: #{tpu_custom_call.1} parent=11 // pred_region
          %s121 = ssub.s32 51072, 51072
          %122 = vsyncadd [#allocation7], %s121
          %s123 = sshll.u32 [#allocation6], 4
          %s124 = int_to_ptr.vmem [resolvable:$true] %s123
          %129 = dma.hbm_to_vmem [thread:$0]  %s1, 51072, %s124, [#allocation7], 896, 896, 56
        $region16: #{tpu_custom_call.1} parent=11 // pred_fallthru
          _
      $region12: #{tpu_custom_call.1} parent=5 // pred_fallthru
        _
      %p130 = scmp.lt.s32.totalorder %s15, 2
      // Predicated region
      $region17: #{tpu_custom_call.1} parent=5 // pred_check
        %p131 = pneg %p130
      $region18: #{tpu_custom_call.1} parent=5 // pred_check_branch
        %133 = sbr.rel (%p131) target = $region20
      $region19: #{tpu_custom_call.1} parent=5 // pred_region
        // Predicated region
        $region21: #{tpu_custom_call.1} parent=19 // pred_check
          %p134 = pneg %p49
        $region22: #{tpu_custom_call.1} parent=19 // pred_check_branch
          %136 = sbr.rel (%p134) target = $region24
        $region23: #{tpu_custom_call.1} parent=19 // pred_region
          %s137 = sand.u32 %s39, 1
          %s138 = scalar_lea.sflag [#allocation4], %s137
          %s139 = sand.u32 %s39, 1
          %s140 = smul.addr %s139, 32
          %s141 = scalar_lea.vmem [#allocation3], %s140
          %s142 = smul.u32 2, %s23
          %s144 = ssub.s32 512, 512
          %145 = vsyncadd %s138, %s144
          %s146 = smul.addr %s142, 4
          %s147 = smul.addr %s22, 8
          %s148 = sadd.s32 %s146, %s147
          %s149 = smul.addr %s148, 64
          %s150 = scalar_lea.hbm %s0, %s149
          %s151 = sshll.u32 %s141, 4
          %s152 = int_to_ptr.vmem [resolvable:$true] %s151
          %157 = dma.hbm_to_vmem [thread:$0]  %s150, 512, %s152, %s138, 256, 256, 16
        $region24: #{tpu_custom_call.1} parent=19 // pred_fallthru
          _
      $region20: #{tpu_custom_call.1} parent=5 // pred_fallthru
        _
      %p158 = scmp.le.s32.totalorder 1, %s15
      %p159 = scmp.lt.s32.totalorder %s15, 3
      %p160 = pnand %p158, %p159
      %p161 = pneg %p160
      // Predicated region
      $region25: #{tpu_custom_call.1} parent=5 // pred_check
        _
      $region26: #{tpu_custom_call.1} parent=5 // pred_check_branch
        %163 = sbr.rel (%p160) target = $region28
      $region27: #{tpu_custom_call.1} parent=5 // pred_region
        %s164 = ssub.s32 %s15, 1
        %s165 = sand.u32 %s42, 1
        %s166 = scalar_lea.sflag [#allocation4], %s165
        %s167 = sand.u32 %s42, 1
        %s168 = smul.addr %s167, 32
        %s169 = scalar_lea.vmem [#allocation3], %s168
        // Predicated region
        $region29: #{tpu_custom_call.1} parent=27 // pred_check
          %p170 = pneg %p55
        $region30: #{tpu_custom_call.1} parent=27 // pred_check_branch
          %172 = sbr.rel (%p170) target = $region32
        $region31: #{tpu_custom_call.1} parent=27 // pred_region
          %173 = dma.done %s166, 512
        $region32: #{tpu_custom_call.1} parent=27 // pred_fallthru
          _
        // Predicated region
        $region33: #{tpu_custom_call.1} parent=27 // pred_check
          %p174 = pneg %p76
        $region34: #{tpu_custom_call.1} parent=27 // pred_check_branch
          %176 = sbr.rel (%p174) target = $region36
        $region35: #{tpu_custom_call.1} parent=27 // pred_region
          %177 = dma.done [#allocation7], 51072
        $region36: #{tpu_custom_call.1} parent=27 // pred_fallthru
          _
        %s178 = sand.u32 %s42, 1
        %s179 = scalar_lea.sflag [#allocation4], %s178
        %s180 = sand.u32 %s42, 1
        %s181 = smul.addr %s180, 32
        %s182 = scalar_lea.vmem [#allocation3], %s181
        %p183 = pneg %p55
        %p184 = pneg %p52
        %p185 = pneg %p76
        %p186 = pneg %p73
        %p187 = pneg %p102
        %p188 = pneg %p99
        %s189 = sand.u32 %s89, 1
        %s190 = scalar_lea.sflag [#allocation5], %s189
        %s191 = sand.u32 %s89, 1
        %s192 = smul.addr %s191, 14
        %s193 = scalar_lea.vmem [#allocation8], %s192
        %s194 = smul.u32 2, %s25
        %p197 = scmp.eq.s32.totalorder %s25, 0
        // Predicated region
        $region37: #{tpu_custom_call.1} parent=27 // pred_check
          %p198 = pneg %p197
        $region38: #{tpu_custom_call.1} parent=27 // pred_check_branch
          %200 = sbr.rel (%p198) target = $region40
        $region39: #{tpu_custom_call.1} parent=27 // pred_region
          %201 = vst [vmem:[#allocation2] sm:$0xff] 0.0
          %v202 = vlaneseq
          %vm203 = vcmp.ge.s32.totalorder %v202, 0
          %vm204 = vcmp.lt.s32.totalorder %v202, 768
          %vm205 = vmand %vm203, %vm204
          %206 = vst.msk [vmem:[#allocation2 + $0x8] sm:$0x3f] %vm205, 0.0
        $region40: #{tpu_custom_call.1} parent=27 // pred_fallthru
          _
        %v207 = vld [vmem:[%s169] sm:$0xff]
        %v208 = vld [vmem:[%s169 + $0x8] sm:$0xff]
        %v209 = vld [vmem:[%s169 + $0x10] sm:$0xff]
        %v210 = vld [vmem:[%s169 + $0x18] sm:$0xff]
        %v211 = vld [vmem:[#allocation6] sm:$0xff]
        %v212 = vld [vmem:[#allocation6 + $0x38] sm:$0xff]
        %v213 = vld [vmem:[#allocation6 + $0x70] sm:$0xff]
        %v214 = vld [vmem:[#allocation6 + $0xa8] sm:$0xff]
        %v215 = vld [vmem:[#allocation6 + $0xe0] sm:$0xff]
        %v216 = vld [vmem:[#allocation6 + $0x118] sm:$0xff]
        %v217 = vld [vmem:[#allocation6 + $0x150] sm:$0xff]
        %v218 = vld [vmem:[#allocation6 + $0x188] sm:$0xff]
        %v219 = vld [vmem:[#allocation6 + $0x1c0] sm:$0xff]
        %v220 = vld [vmem:[#allocation6 + $0x1f8] sm:$0xff]
        %v221 = vld [vmem:[#allocation6 + $0x230] sm:$0xff]
        %v222 = vld [vmem:[#allocation6 + $0x268] sm:$0xff]
        %v223 = vld [vmem:[#allocation6 + $0x2a0] sm:$0xff]
        %v224 = vld [vmem:[#allocation6 + $0x2d8] sm:$0xff]
        %v225 = vld [vmem:[#allocation6 + $0x310] sm:$0xff]
        %v226 = vld [vmem:[#allocation6 + $0x348] sm:$0xff]
        %v227 = vld [vmem:[#allocation6 + $0x380] sm:$0xff]
        %v228 = vld [vmem:[#allocation6 + $0x3b8] sm:$0xff]
        %v229 = vld [vmem:[#allocation6 + $0x3f0] sm:$0xff]
        %v230 = vld [vmem:[#allocation6 + $0x428] sm:$0xff]
        %v231 = vld [vmem:[#allocation6 + $0x460] sm:$0xff]
        %v232 = vld [vmem:[#allocation6 + $0x498] sm:$0xff]
        %v233 = vld [vmem:[#allocation6 + $0x4d0] sm:$0xff]
        %v234 = vld [vmem:[#allocation6 + $0x508] sm:$0xff]
        %v235 = vld [vmem:[#allocation6 + $0x540] sm:$0xff]
        %v236 = vld [vmem:[#allocation6 + $0x578] sm:$0xff]
        %v237 = vld [vmem:[#allocation6 + $0x5b0] sm:$0xff]
        %v238 = vld [vmem:[#allocation6 + $0x5e8] sm:$0xff]
        %v239 = vld [vmem:[#allocation6 + $0x620] sm:$0xff]
        %v240 = vld [vmem:[#allocation6 + $0x658] sm:$0xff]
        %v241 = vld [vmem:[#allocation6 + $0x690] sm:$0xff]
        %v242 = vld [vmem:[#allocation6 + $0x6c8] sm:$0xff]
        %v243 = vld [vmem:[#allocation6 + $0x700] sm:$0xff]
        %v244 = vld [vmem:[#allocation6 + $0x738] sm:$0xff]
        %v245 = vld [vmem:[#allocation6 + $0x770] sm:$0xff]
        %v246 = vld [vmem:[#allocation6 + $0x7a8] sm:$0xff]
        %v247 = vld [vmem:[#allocation6 + $0x7e0] sm:$0xff]
        %v248 = vld [vmem:[#allocation6 + $0x818] sm:$0xff]
        %v249 = vld [vmem:[#allocation6 + $0x850] sm:$0xff]
        %v250 = vld [vmem:[#allocation6 + $0x888] sm:$0xff]
        %v251 = vld [vmem:[#allocation6 + $0x8c0] sm:$0xff]
        %v252 = vld [vmem:[#allocation6 + $0x8f8] sm:$0xff]
        %v253 = vld [vmem:[#allocation6 + $0x930] sm:$0xff]
        %v254 = vld [vmem:[#allocation6 + $0x968] sm:$0xff]
        %v255 = vld [vmem:[#allocation6 + $0x9a0] sm:$0xff]
        %v256 = vld [vmem:[#allocation6 + $0x9d8] sm:$0xff]
        %v257 = vld [vmem:[#allocation6 + $0xa10] sm:$0xff]
        %v258 = vld [vmem:[#allocation6 + $0xa48] sm:$0xff]
        %v259 = vld [vmem:[#allocation6 + $0xa80] sm:$0xff]
        %v260 = vld [vmem:[#allocation6 + $0xab8] sm:$0xff]
        %v261 = vld [vmem:[#allocation6 + $0xaf0] sm:$0xff]
        %v262 = vld [vmem:[#allocation6 + $0xb28] sm:$0xff]
        %v263 = vld [vmem:[#allocation6 + $0xb60] sm:$0xff]
        %v264 = vld [vmem:[#allocation6 + $0xb98] sm:$0xff]
        %v265 = vld [vmem:[#allocation6 + $0xbd0] sm:$0xff]
        %v266 = vld [vmem:[#allocation6 + $0xc08] sm:$0xff]
        %v267 = vld [vmem:[#allocation6 + $0xc40] sm:$0x11]
        %v272 = vunpack.c.l.b16 %v207
        %v273 = vunpack.c.h.b16 %v207
        %v274 = vunpack.c.l.b16 %v208
        %v275 = vunpack.c.h.b16 %v208
        %v276 = vunpack.c.l.b16 %v209
        %v277 = vunpack.c.h.b16 %v209
        %v278 = vunpack.c.l.b16 %v210
        %v279 = vunpack.c.h.b16 %v210
        %v280 = vpack.c.b16 %v276, %v272
        %v281 = vpack.c.b16 %v277, %v273
        %v282 = vpack.c.b16 %v278, %v274
        %v283 = vpack.c.b16 %v279, %v275
        %v344 = vunpack.c.l.b16 %v211
        %v345 = vunpack.c.h.b16 %v211
        %v346 = vunpack.c.l.b16 %v212
        %v347 = vunpack.c.h.b16 %v212
        %v348 = vunpack.c.l.b16 %v213
        %v349 = vunpack.c.h.b16 %v213
        %v350 = vunpack.c.l.b16 %v214
        %v351 = vunpack.c.h.b16 %v214
        %v352 = vunpack.c.l.b16 %v215
        %v353 = vunpack.c.h.b16 %v215
        %v354 = vunpack.c.l.b16 %v216
        %v355 = vunpack.c.h.b16 %v216
        %v356 = vunpack.c.l.b16 %v217
        %v357 = vunpack.c.h.b16 %v217
        %v358 = vunpack.c.l.b16 %v218
        %v359 = vunpack.c.h.b16 %v218
        %v360 = vunpack.c.l.b16 %v219
        %v361 = vunpack.c.h.b16 %v219
        %v362 = vunpack.c.l.b16 %v220
        %v363 = vunpack.c.h.b16 %v220
        %v364 = vunpack.c.l.b16 %v221
        %v365 = vunpack.c.h.b16 %v221
        %v366 = vunpack.c.l.b16 %v222
        %v367 = vunpack.c.h.b16 %v222
        %v368 = vunpack.c.l.b16 %v223
        %v369 = vunpack.c.h.b16 %v223
        %v370 = vunpack.c.l.b16 %v224
        %v371 = vunpack.c.h.b16 %v224
        %v372 = vunpack.c.l.b16 %v225
        %v373 = vunpack.c.h.b16 %v225
        %v374 = vunpack.c.l.b16 %v226
        %v375 = vunpack.c.h.b16 %v226
        %v376 = vunpack.c.l.b16 %v227
        %v377 = vunpack.c.h.b16 %v227
        %v378 = vunpack.c.l.b16 %v228
        %v379 = vunpack.c.h.b16 %v228
        %v380 = vunpack.c.l.b16 %v229
        %v381 = vunpack.c.h.b16 %v229
        %v382 = vunpack.c.l.b16 %v230
        %v383 = vunpack.c.h.b16 %v230
        %v384 = vunpack.c.l.b16 %v231
        %v385 = vunpack.c.h.b16 %v231
        %v386 = vunpack.c.l.b16 %v232
        %v387 = vunpack.c.h.b16 %v232
        %v388 = vunpack.c.l.b16 %v233
        %v389 = vunpack.c.h.b16 %v233
        %v390 = vunpack.c.l.b16 %v234
        %v391 = vunpack.c.h.b16 %v234
        %v392 = vunpack.c.l.b16 %v235
        %v393 = vunpack.c.h.b16 %v235
        %v394 = vunpack.c.l.b16 %v236
        %v395 = vunpack.c.h.b16 %v236
        %v396 = vunpack.c.l.b16 %v237
        %v397 = vunpack.c.h.b16 %v237
        %v398 = vunpack.c.l.b16 %v238
        %v399 = vunpack.c.h.b16 %v238
        %v400 = vunpack.c.l.b16 %v239
        %v401 = vunpack.c.h.b16 %v239
        %v402 = vunpack.c.l.b16 %v240
        %v403 = vunpack.c.h.b16 %v240
        %v404 = vunpack.c.l.b16 %v241
        %v405 = vunpack.c.h.b16 %v241
        %v406 = vunpack.c.l.b16 %v242
        %v407 = vunpack.c.h.b16 %v242
        %v408 = vunpack.c.l.b16 %v243
        %v409 = vunpack.c.h.b16 %v243
        %v410 = vunpack.c.l.b16 %v244
        %v411 = vunpack.c.h.b16 %v244
        %v412 = vunpack.c.l.b16 %v245
        %v413 = vunpack.c.h.b16 %v245
        %v414 = vunpack.c.l.b16 %v246
        %v415 = vunpack.c.h.b16 %v246
        %v416 = vunpack.c.l.b16 %v247
        %v417 = vunpack.c.h.b16 %v247
        %v418 = vunpack.c.l.b16 %v248
        %v419 = vunpack.c.h.b16 %v248
        %v420 = vunpack.c.l.b16 %v249
        %v421 = vunpack.c.h.b16 %v249
        %v422 = vunpack.c.l.b16 %v250
        %v423 = vunpack.c.h.b16 %v250
        %v424 = vunpack.c.l.b16 %v251
        %v425 = vunpack.c.h.b16 %v251
        %v426 = vunpack.c.l.b16 %v252
        %v427 = vunpack.c.h.b16 %v252
        %v428 = vunpack.c.l.b16 %v253
        %v429 = vunpack.c.h.b16 %v253
        %v430 = vunpack.c.l.b16 %v254
        %v431 = vunpack.c.h.b16 %v254
        %v432 = vunpack.c.l.b16 %v255
        %v433 = vunpack.c.h.b16 %v255
        %v434 = vunpack.c.l.b16 %v256
        %v435 = vunpack.c.h.b16 %v256
        %v436 = vunpack.c.l.b16 %v257
        %v437 = vunpack.c.h.b16 %v257
        %v438 = vunpack.c.l.b16 %v258
        %v439 = vunpack.c.h.b16 %v258
        %v440 = vunpack.c.l.b16 %v259
        %v441 = vunpack.c.h.b16 %v259
        %v442 = vunpack.c.l.b16 %v260
        %v443 = vunpack.c.h.b16 %v260
        %v444 = vunpack.c.l.b16 %v261
        %v445 = vunpack.c.h.b16 %v261
        %v446 = vunpack.c.l.b16 %v262
        %v447 = vunpack.c.h.b16 %v262
        %v448 = vunpack.c.l.b16 %v263
        %v449 = vunpack.c.h.b16 %v263
        %v450 = vunpack.c.l.b16 %v264
        %v451 = vunpack.c.h.b16 %v264
        %v452 = vunpack.c.l.b16 %v265
        %v453 = vunpack.c.h.b16 %v265
        %v454 = vunpack.c.l.b16 %v266
        %v455 = vunpack.c.h.b16 %v266
        %v456 = vunpack.c.l.b16 %v267
        %v457 = vunpack.c.h.b16 %v267
        %v458 = vpack.c.b16 %v346, %v344
        %v459 = vpack.c.b16 %v347, %v345
        %v460 = vpack.c.b16 %v350, %v348
        %v461 = vpack.c.b16 %v351, %v349
        %v462 = vpack.c.b16 %v354, %v352
        %v463 = vpack.c.b16 %v355, %v353
        %v464 = vpack.c.b16 %v358, %v356
        %v465 = vpack.c.b16 %v359, %v357
        %v466 = vpack.c.b16 %v362, %v360
        %v467 = vpack.c.b16 %v363, %v361
        %v468 = vpack.c.b16 %v366, %v364
        %v469 = vpack.c.b16 %v367, %v365
        %v470 = vpack.c.b16 %v370, %v368
        %v471 = vpack.c.b16 %v371, %v369
        %v472 = vpack.c.b16 %v374, %v372
        %v473 = vpack.c.b16 %v375, %v373
        %v474 = vpack.c.b16 %v378, %v376
        %v475 = vpack.c.b16 %v379, %v377
        %v476 = vpack.c.b16 %v382, %v380
        %v477 = vpack.c.b16 %v383, %v381
        %v478 = vpack.c.b16 %v386, %v384
        %v479 = vpack.c.b16 %v387, %v385
        %v480 = vpack.c.b16 %v390, %v388
        %v481 = vpack.c.b16 %v391, %v389
        %v482 = vpack.c.b16 %v394, %v392
        %v483 = vpack.c.b16 %v395, %v393
        %v484 = vpack.c.b16 %v398, %v396
        %v485 = vpack.c.b16 %v399, %v397
        %v486 = vpack.c.b16 %v402, %v400
        %v487 = vpack.c.b16 %v403, %v401
        %v488 = vpack.c.b16 %v406, %v404
        %v489 = vpack.c.b16 %v407, %v405
        %v490 = vpack.c.b16 %v410, %v408
        %v491 = vpack.c.b16 %v411, %v409
        %v492 = vpack.c.b16 %v414, %v412
        %v493 = vpack.c.b16 %v415, %v413
        %v494 = vpack.c.b16 %v418, %v416
        %v495 = vpack.c.b16 %v419, %v417
        %v496 = vpack.c.b16 %v422, %v420
        %v497 = vpack.c.b16 %v423, %v421
        %v498 = vpack.c.b16 %v426, %v424
        %v499 = vpack.c.b16 %v427, %v425
        %v500 = vpack.c.b16 %v430, %v428
        %v501 = vpack.c.b16 %v431, %v429
        %v502 = vpack.c.b16 %v434, %v432
        %v503 = vpack.c.b16 %v435, %v433
        %v504 = vpack.c.b16 %v438, %v436
        %v505 = vpack.c.b16 %v439, %v437
        %v506 = vpack.c.b16 %v442, %v440
        %v507 = vpack.c.b16 %v443, %v441
        %v508 = vpack.c.b16 %v446, %v444
        %v509 = vpack.c.b16 %v447, %v445
        %v510 = vpack.c.b16 %v450, %v448
        %v511 = vpack.c.b16 %v451, %v449
        %v512 = vpack.c.b16 %v454, %v452
        %v513 = vpack.c.b16 %v455, %v453
        %v514 = vpack.c.b16 %v456, %v456
        %v515 = vpack.c.b16 %v457, %v457
        %vm572 = vcmask 531456
        %v574 = vsel %vm572, %v283, 0
        %vm576 = vcmask 1040384
        %v577 = vsel 0, 4294967295, 65535
        %v578 = vsel %vm576, %v577, 0
        %v580 = vand.u32 %v514, %v578
        %v583 = vand.u32 %v515, %v578
        %585 = vmatprep.subr.bf16.mxu0 %v459
        %586 = vmatpush1.bf16.msra.mxu0 %v458
        %587 = vmatprep.subr.bf16.mxu0 %v461
        %588 = vmatpush1.bf16.msra.mxu0 %v460
        %589 = vmatprep.subr.bf16.mxu0 %v463
        %590 = vmatpush1.bf16.msra.mxu0 %v462
        %591 = vmatprep.subr.bf16.mxu0 %v465
        %592 = vmatpush1.bf16.msra.mxu0 %v464
        %593 = vmatprep.subr.bf16.mxu0 %v467
        %594 = vmatpush1.bf16.msra.mxu0 %v466
        %595 = vmatprep.subr.bf16.mxu0 %v469
        %596 = vmatpush1.bf16.msra.mxu0 %v468
        %597 = vmatprep.subr.bf16.mxu0 %v471
        %598 = vmatpush1.bf16.msra.mxu0 %v470
        %599 = vmatprep.subr.bf16.mxu0 %v473
        %600 = vmatpush1.bf16.msra.mxu0 %v472
        %601 = vmatprep.subr.bf16.mxu0 %v475
        %602 = vmatpush1.bf16.msra.mxu0 %v474
        %603 = vmatprep.subr.bf16.mxu0 %v477
        %604 = vmatpush1.bf16.msra.mxu0 %v476
        %605 = vmatprep.subr.bf16.mxu0 %v479
        %606 = vmatpush1.bf16.msra.mxu0 %v478
        %607 = vmatprep.subr.bf16.mxu0 %v481
        %608 = vmatpush1.bf16.msra.mxu0 %v480
        %609 = vmatprep.subr.bf16.mxu0 %v483
        %610 = vmatpush1.bf16.msra.mxu0 %v482
        %611 = vmatprep.subr.bf16.mxu0 %v485
        %612 = vmatpush1.bf16.msra.mxu0 %v484
        %613 = vmatprep.subr.bf16.mxu0 %v487
        %614 = vmatpush1.bf16.msra.mxu0 %v486
        %615 = vmatprep.subr.bf16.mxu0 %v489
        %616 = vmatpush1.bf16.msra.mxu0 %v488
        %617 = vmatprep.mubr.bf16.mxu0 %v281
        %618 = vmatmul.mubr.bf16.gmra.mrb[0].mxu0 %v280
        %v619 = vpop.f32.mrb[0].mxu0
        %v620 = vadd.f32 0.0, %v619
        %v621 = vpop.f32.mrb[0].mxu0
        %v622 = vadd.f32 0.0, %v621
        %v623 = vpop.f32.mrb[0].mxu0
        %v624 = vadd.f32 0.0, %v623
        %v625 = vpop.f32.mrb[0].mxu0
        %v626 = vadd.f32 0.0, %v625
        %627 = vdwg.mxu0
        %628 = vmatprep.subr.bf16.mxu0 %v491
        %629 = vmatpush1.bf16.msra.mxu0 %v490
        %630 = vmatprep.subr.bf16.mxu0 %v493
        %631 = vmatpush1.bf16.msra.mxu0 %v492
        %632 = vmatprep.subr.bf16.mxu0 %v495
        %633 = vmatpush1.bf16.msra.mxu0 %v494
        %634 = vmatprep.subr.bf16.mxu0 %v497
        %635 = vmatpush1.bf16.msra.mxu0 %v496
        %636 = vmatprep.subr.bf16.mxu0 %v499
        %637 = vmatpush1.bf16.msra.mxu0 %v498
        %638 = vmatprep.subr.bf16.mxu0 %v501
        %639 = vmatpush1.bf16.msra.mxu0 %v500
        %640 = vmatprep.subr.bf16.mxu0 %v503
        %641 = vmatpush1.bf16.msra.mxu0 %v502
        %642 = vmatprep.subr.bf16.mxu0 %v505
        %643 = vmatpush1.bf16.msra.mxu0 %v504
        %644 = vmatprep.subr.bf16.mxu0 %v507
        %645 = vmatpush1.bf16.msra.mxu0 %v506
        %646 = vmatprep.subr.bf16.mxu0 %v509
        %647 = vmatpush1.bf16.msra.mxu0 %v508
        %648 = vmatprep.subr.bf16.mxu0 %v511
        %649 = vmatpush1.bf16.msra.mxu0 %v510
        %650 = vmatprep.subr.bf16.mxu0 %v513
        %651 = vmatpush1.bf16.msra.mxu0 %v512
        %652 = vmatprep.subr.bf16.mxu0 %v583
        %653 = vmatpush1.bf16.msra.mxu0 %v580
        %654 = vmatprep.subr.bf16.mxu0 0
        %655 = vmatpush1.bf16.msra.mxu0 0
        %656 = vmatprep.subr.bf16.mxu0 0
        %657 = vmatpush1.bf16.msra.mxu0 0
        %658 = vmatprep.subr.bf16.mxu0 0
        %659 = vmatpush1.bf16.msra.mxu0 0
        %660 = vmatprep.mubr.bf16.mxu0 %v574
        %661 = vmatmul.mubr.bf16.gmra.mrb[0].mxu0 %v282
        %v662 = vpop.f32.mrb[0].mxu0
        %v663 = vadd.f32 %v620, %v662
        %v664 = vpop.f32.mrb[0].mxu0
        %v665 = vadd.f32 %v622, %v664
        %v666 = vpop.f32.mrb[0].mxu0
        %v667 = vadd.f32 %v624, %v666
        %v668 = vpop.f32.mrb[0].mxu0
        %v669 = vadd.f32 %v626, %v668
        %670 = vdwg.mxu0
        %v671 = vpack.c.bf16 %v667, %v663
        %v672 = vpack.c.bf16 %v669, %v665
        %v673 = vxor.u32 %v671, 2147516416
        %v674 = vxor.u32 %v672, 2147516416
        %v676 = vmul.bf16 %v673, 1069105081
        %v677 = vpow.bf16.pop %v676
        %v679 = vmul.bf16 %v674, 1069105081
        %v680 = vpow.bf16.pop %v679
        %v681 = vadd.bf16 %v677, 1065369472
        %v682 = vadd.bf16 %v680, 1065369472
        %v683 = vrcp.bf16.pop %v681
        %v684 = vmul.bf16 1065369472, %v683
        %v685 = vrcp.bf16.pop %v682
        %v686 = vmul.bf16 1065369472, %v685
        %v687 = vmul.bf16 %v671, %v684
        %v688 = vmul.bf16 %v672, %v686
        %v689 = vunpack.c.l.bf16 %v687
        %v690 = vunpack.c.l.bf16 %v688
        %v691 = vunpack.c.h.bf16 %v687
        %v692 = vunpack.c.h.bf16 %v688
        %v693 = vld [vmem:[#allocation2] sm:$0x3]
        %v694 = vadd.f32 %v689, %v691
        %v695 = vrot.slane %v694, 4
        %v696 = vadd.f32 %v694, %v695
        %v697 = vrot.slane %v696, 2
        %v698 = vadd.f32 %v696, %v697
        %v699 = vrot.slane %v698, 1
        %v700 = vadd.f32 %v698, %v699
        %v701 = vadd.f32 %v690, %v692
        %v702 = vrot.slane %v701, 4
        %v703 = vadd.f32 %v701, %v702
        %v704 = vrot.slane %v703, 2
        %v705 = vadd.f32 %v703, %v704
        %v706 = vrot.slane %v705, 1
        %v707 = vadd.f32 %v705, %v706
        %v710 = vcombine.low %v700, %v707
        %v712 = vunpack.c.l.s4 1966171168
        %v713 = vunpack.c.0.s8 %v712
        %v714 = vlaneseq
        %v715 = vshrl.u32 %v714, 7
        %v716 = vsub.s32 %v713, %v715
        %v717 = vrot.slane %v710, %v716
        %v719 = vunpack.c.l.s4 1966171168
        %v720 = vunpack.c.0.s8 %v719
        %v721 = vlaneseq
        %v722 = vshrl.u32 %v721, 7
        %v723 = vsub.s32 %v720, %v722
        %v724 = vrot.slane %v717, %v723
        %v726 = vadd.f32 %v693, %v724
        %v727 = vlaneseq
        %vm728 = vcmp.ge.s32.totalorder %v727, 0
        %vm729 = vcmp.lt.s32.totalorder %v727, 256
        %vm730 = vmand %vm728, %vm729
        %731 = vst.msk [vmem:[#allocation2] sm:$0x3] %vm730, %v726
        %s732 = scalar_lea.vmem [#allocation6], 8
        %v733 = vld [vmem:[%s732] sm:$0xff]
        %v734 = vld [vmem:[%s732 + $0x38] sm:$0xff]
        %v735 = vld [vmem:[%s732 + $0x70] sm:$0xff]
        %v736 = vld [vmem:[%s732 + $0xa8] sm:$0xff]
        %v737 = vld [vmem:[%s732 + $0xe0] sm:$0xff]
        %v738 = vld [vmem:[%s732 + $0x118] sm:$0xff]
        %v739 = vld [vmem:[%s732 + $0x150] sm:$0xff]
        %v740 = vld [vmem:[%s732 + $0x188] sm:$0xff]
        %v741 = vld [vmem:[%s732 + $0x1c0] sm:$0xff]
        %v742 = vld [vmem:[%s732 + $0x1f8] sm:$0xff]
        %v743 = vld [vmem:[%s732 + $0x230] sm:$0xff]
        %v744 = vld [vmem:[%s732 + $0x268] sm:$0xff]
        %v745 = vld [vmem:[%s732 + $0x2a0] sm:$0xff]
        %v746 = vld [vmem:[%s732 + $0x2d8] sm:$0xff]
        %v747 = vld [vmem:[%s732 + $0x310] sm:$0xff]
        %v748 = vld [vmem:[%s732 + $0x348] sm:$0xff]
        %v749 = vld [vmem:[%s732 + $0x380] sm:$0xff]
        %v750 = vld [vmem:[%s732 + $0x3b8] sm:$0xff]
        %v751 = vld [vmem:[%s732 + $0x3f0] sm:$0xff]
        %v752 = vld [vmem:[%s732 + $0x428] sm:$0xff]
        %v753 = vld [vmem:[%s732 + $0x460] sm:$0xff]
        %v754 = vld [vmem:[%s732 + $0x498] sm:$0xff]
        %v755 = vld [vmem:[%s732 + $0x4d0] sm:$0xff]
        %v756 = vld [vmem:[%s732 + $0x508] sm:$0xff]
        %v757 = vld [vmem:[%s732 + $0x540] sm:$0xff]
        %v758 = vld [vmem:[%s732 + $0x578] sm:$0xff]
        %v759 = vld [vmem:[%s732 + $0x5b0] sm:$0xff]
        %v760 = vld [vmem:[%s732 + $0x5e8] sm:$0xff]
        %v761 = vld [vmem:[%s732 + $0x620] sm:$0xff]
        %v762 = vld [vmem:[%s732 + $0x658] sm:$0xff]
        %v763 = vld [vmem:[%s732 + $0x690] sm:$0xff]
        %v764 = vld [vmem:[%s732 + $0x6c8] sm:$0xff]
        %v765 = vld [vmem:[%s732 + $0x700] sm:$0xff]
        %v766 = vld [vmem:[%s732 + $0x738] sm:$0xff]
        %v767 = vld [vmem:[%s732 + $0x770] sm:$0xff]
        %v768 = vld [vmem:[%s732 + $0x7a8] sm:$0xff]
        %v769 = vld [vmem:[%s732 + $0x7e0] sm:$0xff]
        %v770 = vld [vmem:[%s732 + $0x818] sm:$0xff]
        %v771 = vld [vmem:[%s732 + $0x850] sm:$0xff]
        %v772 = vld [vmem:[%s732 + $0x888] sm:$0xff]
        %v773 = vld [vmem:[%s732 + $0x8c0] sm:$0xff]
        %v774 = vld [vmem:[%s732 + $0x8f8] sm:$0xff]
        %v775 = vld [vmem:[%s732 + $0x930] sm:$0xff]
        %v776 = vld [vmem:[%s732 + $0x968] sm:$0xff]
        %v777 = vld [vmem:[%s732 + $0x9a0] sm:$0xff]
        %v778 = vld [vmem:[%s732 + $0x9d8] sm:$0xff]
        %v779 = vld [vmem:[%s732 + $0xa10] sm:$0xff]
        %v780 = vld [vmem:[%s732 + $0xa48] sm:$0xff]
        %v781 = vld [vmem:[%s732 + $0xa80] sm:$0xff]
        %v782 = vld [vmem:[%s732 + $0xab8] sm:$0xff]
        %v783 = vld [vmem:[%s732 + $0xaf0] sm:$0xff]
        %v784 = vld [vmem:[%s732 + $0xb28] sm:$0xff]
        %v785 = vld [vmem:[%s732 + $0xb60] sm:$0xff]
        %v786 = vld [vmem:[%s732 + $0xb98] sm:$0xff]
        %v787 = vld [vmem:[%s732 + $0xbd0] sm:$0xff]
        %v788 = vld [vmem:[%s732 + $0xc08] sm:$0xff]
        %v789 = vld [vmem:[%s732 + $0xc40] sm:$0x11]
        %v847 = vunpack.c.l.b16 %v733
        %v848 = vunpack.c.h.b16 %v733
        %v849 = vunpack.c.l.b16 %v734
        %v850 = vunpack.c.h.b16 %v734
        %v851 = vunpack.c.l.b16 %v735
        %v852 = vunpack.c.h.b16 %v735
        %v853 = vunpack.c.l.b16 %v736
        %v854 = vunpack.c.h.b16 %v736
        %v855 = vunpack.c.l.b16 %v737
        %v856 = vunpack.c.h.b16 %v737
        %v857 = vunpack.c.l.b16 %v738
        %v858 = vunpack.c.h.b16 %v738
        %v859 = vunpack.c.l.b16 %v739
        %v860 = vunpack.c.h.b16 %v739
        %v861 = vunpack.c.l.b16 %v740
        %v862 = vunpack.c.h.b16 %v740
        %v863 = vunpack.c.l.b16 %v741
        %v864 = vunpack.c.h.b16 %v741
        %v865 = vunpack.c.l.b16 %v742
        %v866 = vunpack.c.h.b16 %v742
        %v867 = vunpack.c.l.b16 %v743
        %v868 = vunpack.c.h.b16 %v743
        %v869 = vunpack.c.l.b16 %v744
        %v870 = vunpack.c.h.b16 %v744
        %v871 = vunpack.c.l.b16 %v745
        %v872 = vunpack.c.h.b16 %v745
        %v873 = vunpack.c.l.b16 %v746
        %v874 = vunpack.c.h.b16 %v746
        %v875 = vunpack.c.l.b16 %v747
        %v876 = vunpack.c.h.b16 %v747
        %v877 = vunpack.c.l.b16 %v748
        %v878 = vunpack.c.h.b16 %v748
        %v879 = vunpack.c.l.b16 %v749
        %v880 = vunpack.c.h.b16 %v749
        %v881 = vunpack.c.l.b16 %v750
        %v882 = vunpack.c.h.b16 %v750
        %v883 = vunpack.c.l.b16 %v751
        %v884 = vunpack.c.h.b16 %v751
        %v885 = vunpack.c.l.b16 %v752
        %v886 = vunpack.c.h.b16 %v752
        %v887 = vunpack.c.l.b16 %v753
        %v888 = vunpack.c.h.b16 %v753
        %v889 = vunpack.c.l.b16 %v754
        %v890 = vunpack.c.h.b16 %v754
        %v891 = vunpack.c.l.b16 %v755
        %v892 = vunpack.c.h.b16 %v755
        %v893 = vunpack.c.l.b16 %v756
        %v894 = vunpack.c.h.b16 %v756
        %v895 = vunpack.c.l.b16 %v757
        %v896 = vunpack.c.h.b16 %v757
        %v897 = vunpack.c.l.b16 %v758
        %v898 = vunpack.c.h.b16 %v758
        %v899 = vunpack.c.l.b16 %v759
        %v900 = vunpack.c.h.b16 %v759
        %v901 = vunpack.c.l.b16 %v760
        %v902 = vunpack.c.h.b16 %v760
        %v903 = vunpack.c.l.b16 %v761
        %v904 = vunpack.c.h.b16 %v761
        %v905 = vunpack.c.l.b16 %v762
        %v906 = vunpack.c.h.b16 %v762
        %v907 = vunpack.c.l.b16 %v763
        %v908 = vunpack.c.h.b16 %v763
        %v909 = vunpack.c.l.b16 %v764
        %v910 = vunpack.c.h.b16 %v764
        %v911 = vunpack.c.l.b16 %v765
        %v912 = vunpack.c.h.b16 %v765
        %v913 = vunpack.c.l.b16 %v766
        %v914 = vunpack.c.h.b16 %v766
        %v915 = vunpack.c.l.b16 %v767
        %v916 = vunpack.c.h.b16 %v767
        %v917 = vunpack.c.l.b16 %v768
        %v918 = vunpack.c.h.b16 %v768
        %v919 = vunpack.c.l.b16 %v769
        %v920 = vunpack.c.h.b16 %v769
        %v921 = vunpack.c.l.b16 %v770
        %v922 = vunpack.c.h.b16 %v770
        %v923 = vunpack.c.l.b16 %v771
        %v924 = vunpack.c.h.b16 %v771
        %v925 = vunpack.c.l.b16 %v772
        %v926 = vunpack.c.h.b16 %v772
        %v927 = vunpack.c.l.b16 %v773
        %v928 = vunpack.c.h.b16 %v773
        %v929 = vunpack.c.l.b16 %v774
        %v930 = vunpack.c.h.b16 %v774
        %v931 = vunpack.c.l.b16 %v775
        %v932 = vunpack.c.h.b16 %v775
        %v933 = vunpack.c.l.b16 %v776
        %v934 = vunpack.c.h.b16 %v776
        %v935 = vunpack.c.l.b16 %v777
        %v936 = vunpack.c.h.b16 %v777
        %v937 = vunpack.c.l.b16 %v778
        %v938 = vunpack.c.h.b16 %v778
        %v939 = vunpack.c.l.b16 %v779
        %v940 = vunpack.c.h.b16 %v779
        %v941 = vunpack.c.l.b16 %v780
        %v942 = vunpack.c.h.b16 %v780
        %v943 = vunpack.c.l.b16 %v781
        %v944 = vunpack.c.h.b16 %v781
        %v945 = vunpack.c.l.b16 %v782
        %v946 = vunpack.c.h.b16 %v782
        %v947 = vunpack.c.l.b16 %v783
        %v948 = vunpack.c.h.b16 %v783
        %v949 = vunpack.c.l.b16 %v784
        %v950 = vunpack.c.h.b16 %v784
        %v951 = vunpack.c.l.b16 %v785
        %v952 = vunpack.c.h.b16 %v785
        %v953 = vunpack.c.l.b16 %v786
        %v954 = vunpack.c.h.b16 %v786
        %v955 = vunpack.c.l.b16 %v787
        %v956 = vunpack.c.h.b16 %v787
        %v957 = vunpack.c.l.b16 %v788
        %v958 = vunpack.c.h.b16 %v788
        %v959 = vunpack.c.l.b16 %v789
        %v960 = vunpack.c.h.b16 %v789
        %v961 = vpack.c.b16 %v849, %v847
        %v962 = vpack.c.b16 %v850, %v848
        %v963 = vpack.c.b16 %v853, %v851
        %v964 = vpack.c.b16 %v854, %v852
        %v965 = vpack.c.b16 %v857, %v855
        %v966 = vpack.c.b16 %v858, %v856
        %v967 = vpack.c.b16 %v861, %v859
        %v968 = vpack.c.b16 %v862, %v860
        %v969 = vpack.c.b16 %v865, %v863
        %v970 = vpack.c.b16 %v866, %v864
        %v971 = vpack.c.b16 %v869, %v867
        %v972 = vpack.c.b16 %v870, %v868
        %v973 = vpack.c.b16 %v873, %v871
        %v974 = vpack.c.b16 %v874, %v872
        %v975 = vpack.c.b16 %v877, %v875
        %v976 = vpack.c.b16 %v878, %v876
        %v977 = vpack.c.b16 %v881, %v879
        %v978 = vpack.c.b16 %v882, %v880
        %v979 = vpack.c.b16 %v885, %v883
        %v980 = vpack.c.b16 %v886, %v884
        %v981 = vpack.c.b16 %v889, %v887
        %v982 = vpack.c.b16 %v890, %v888
        %v983 = vpack.c.b16 %v893, %v891
        %v984 = vpack.c.b16 %v894, %v892
        %v985 = vpack.c.b16 %v897, %v895
        %v986 = vpack.c.b16 %v898, %v896
        %v987 = vpack.c.b16 %v901, %v899
        %v988 = vpack.c.b16 %v902, %v900
        %v989 = vpack.c.b16 %v905, %v903
        %v990 = vpack.c.b16 %v906, %v904
        %v991 = vpack.c.b16 %v909, %v907
        %v992 = vpack.c.b16 %v910, %v908
        %v993 = vpack.c.b16 %v913, %v911
        %v994 = vpack.c.b16 %v914, %v912
        %v995 = vpack.c.b16 %v917, %v915
        %v996 = vpack.c.b16 %v918, %v916
        %v997 = vpack.c.b16 %v921, %v919
        %v998 = vpack.c.b16 %v922, %v920
        %v999 = vpack.c.b16 %v925, %v923
        %v1000 = vpack.c.b16 %v926, %v924
        %v1001 = vpack.c.b16 %v929, %v927
        %v1002 = vpack.c.b16 %v930, %v928
        %v1003 = vpack.c.b16 %v933, %v931
        %v1004 = vpack.c.b16 %v934, %v932
        %v1005 = vpack.c.b16 %v937, %v935
        %v1006 = vpack.c.b16 %v938, %v936
        %v1007 = vpack.c.b16 %v941, %v939
        %v1008 = vpack.c.b16 %v942, %v940
        %v1009 = vpack.c.b16 %v945, %v943
        %v1010 = vpack.c.b16 %v946, %v944
        %v1011 = vpack.c.b16 %v949, %v947
        %v1012 = vpack.c.b16 %v950, %v948
        %v1013 = vpack.c.b16 %v953, %v951
        %v1014 = vpack.c.b16 %v954, %v952
        %v1015 = vpack.c.b16 %v957, %v955
        %v1016 = vpack.c.b16 %v958, %v956
        %v1017 = vpack.c.b16 %v959, %v959
        %v1018 = vpack.c.b16 %v960, %v960
        %v1076 = vand.u32 %v1017, %v578
        %v1079 = vand.u32 %v1018, %v578
        %1081 = vmatprep.subr.bf16.mxu0 %v962
        %1082 = vmatpush1.bf16.msra.mxu0 %v961
        %1083 = vmatprep.subr.bf16.mxu0 %v964
        %1084 = vmatpush1.bf16.msra.mxu0 %v963
        %1085 = vmatprep.subr.bf16.mxu0 %v966
        %1086 = vmatpush1.bf16.msra.mxu0 %v965
        %1087 = vmatprep.subr.bf16.mxu0 %v968
        %1088 = vmatpush1.bf16.msra.mxu0 %v967
        %1089 = vmatprep.subr.bf16.mxu0 %v970
        %1090 = vmatpush1.bf16.msra.mxu0 %v969
        %1091 = vmatprep.subr.bf16.mxu0 %v972
        %1092 = vmatpush1.bf16.msra.mxu0 %v971
        %1093 = vmatprep.subr.bf16.mxu0 %v974
        %1094 = vmatpush1.bf16.msra.mxu0 %v973
        %1095 = vmatprep.subr.bf16.mxu0 %v976
        %1096 = vmatpush1.bf16.msra.mxu0 %v975
        %1097 = vmatprep.subr.bf16.mxu0 %v978
        %1098 = vmatpush1.bf16.msra.mxu0 %v977
        %1099 = vmatprep.subr.bf16.mxu0 %v980
        %1100 = vmatpush1.bf16.msra.mxu0 %v979
        %1101 = vmatprep.subr.bf16.mxu0 %v982
        %1102 = vmatpush1.bf16.msra.mxu0 %v981
        %1103 = vmatprep.subr.bf16.mxu0 %v984
        %1104 = vmatpush1.bf16.msra.mxu0 %v983
        %1105 = vmatprep.subr.bf16.mxu0 %v986
        %1106 = vmatpush1.bf16.msra.mxu0 %v985
        %1107 = vmatprep.subr.bf16.mxu0 %v988
        %1108 = vmatpush1.bf16.msra.mxu0 %v987
        %1109 = vmatprep.subr.bf16.mxu0 %v990
        %1110 = vmatpush1.bf16.msra.mxu0 %v989
        %1111 = vmatprep.subr.bf16.mxu0 %v992
        %1112 = vmatpush1.bf16.msra.mxu0 %v991
        %1113 = vmatprep.mubr.bf16.mxu0 %v281
        %1114 = vmatmul.mubr.bf16.gmra.mrb[0].mxu0 %v280
        %v1115 = vpop.f32.mrb[0].mxu0
        %v1116 = vadd.f32 0.0, %v1115
        %v1117 = vpop.f32.mrb[0].mxu0
        %v1118 = vadd.f32 0.0, %v1117
        %v1119 = vpop.f32.mrb[0].mxu0
        %v1120 = vadd.f32 0.0, %v1119
        %v1121 = vpop.f32.mrb[0].mxu0
        %v1122 = vadd.f32 0.0, %v1121
        %1123 = vdwg.mxu0
        %1124 = vmatprep.subr.bf16.mxu0 %v994
        %1125 = vmatpush1.bf16.msra.mxu0 %v993
        %1126 = vmatprep.subr.bf16.mxu0 %v996
        %1127 = vmatpush1.bf16.msra.mxu0 %v995
        %1128 = vmatprep.subr.bf16.mxu0 %v998
        %1129 = vmatpush1.bf16.msra.mxu0 %v997
        %1130 = vmatprep.subr.bf16.mxu0 %v1000
        %1131 = vmatpush1.bf16.msra.mxu0 %v999
        %1132 = vmatprep.subr.bf16.mxu0 %v1002
        %1133 = vmatpush1.bf16.msra.mxu0 %v1001
        %1134 = vmatprep.subr.bf16.mxu0 %v1004
        %1135 = vmatpush1.bf16.msra.mxu0 %v1003
        %1136 = vmatprep.subr.bf16.mxu0 %v1006
        %1137 = vmatpush1.bf16.msra.mxu0 %v1005
        %1138 = vmatprep.subr.bf16.mxu0 %v1008
        %1139 = vmatpush1.bf16.msra.mxu0 %v1007
        %1140 = vmatprep.subr.bf16.mxu0 %v1010
        %1141 = vmatpush1.bf16.msra.mxu0 %v1009
        %1142 = vmatprep.subr.bf16.mxu0 %v1012
        %1143 = vmatpush1.bf16.msra.mxu0 %v1011
        %1144 = vmatprep.subr.bf16.mxu0 %v1014
        %1145 = vmatpush1.bf16.msra.mxu0 %v1013
        %1146 = vmatprep.subr.bf16.mxu0 %v1016
        %1147 = vmatpush1.bf16.msra.mxu0 %v1015
        %1148 = vmatprep.subr.bf16.mxu0 %v1079
        %1149 = vmatpush1.bf16.msra.mxu0 %v1076
        %1150 = vmatprep.subr.bf16.mxu0 0
        %1151 = vmatpush1.bf16.msra.mxu0 0
        %1152 = vmatprep.subr.bf16.mxu0 0
        %1153 = vmatpush1.bf16.msra.mxu0 0
        %1154 = vmatprep.subr.bf16.mxu0 0
        %1155 = vmatpush1.bf16.msra.mxu0 0
        %1156 = vmatprep.mubr.bf16.mxu0 %v574
        %1157 = vmatmul.mubr.bf16.gmra.mrb[0].mxu0 %v282
        %v1158 = vpop.f32.mrb[0].mxu0
        %v1159 = vadd.f32 %v1116, %v1158
        %v1160 = vpop.f32.mrb[0].mxu0
        %v1161 = vadd.f32 %v1118, %v1160
        %v1162 = vpop.f32.mrb[0].mxu0
        %v1163 = vadd.f32 %v1120, %v1162
        %v1164 = vpop.f32.mrb[0].mxu0
        %v1165 = vadd.f32 %v1122, %v1164
        %1166 = vdwg.mxu0
        %v1167 = vpack.c.bf16 %v1163, %v1159
        %v1168 = vpack.c.bf16 %v1165, %v1161
        %v1169 = vxor.u32 %v1167, 2147516416
        %v1170 = vxor.u32 %v1168, 2147516416
        %v1172 = vmul.bf16 %v1169, 1069105081
        %v1173 = vpow.bf16.pop %v1172
        %v1175 = vmul.bf16 %v1170, 1069105081
        %v1176 = vpow.bf16.pop %v1175
        %v1177 = vadd.bf16 %v1173, 1065369472
        %v1178 = vadd.bf16 %v1176, 1065369472
        %v1179 = vrcp.bf16.pop %v1177
        %v1180 = vmul.bf16 1065369472, %v1179
        %v1181 = vrcp.bf16.pop %v1178
        %v1182 = vmul.bf16 1065369472, %v1181
        %v1183 = vmul.bf16 %v1167, %v1180
        %v1184 = vmul.bf16 %v1168, %v1182
        %v1185 = vunpack.c.l.bf16 %v1183
        %v1186 = vunpack.c.l.bf16 %v1184
        %v1187 = vunpack.c.h.bf16 %v1183
        %v1188 = vunpack.c.h.bf16 %v1184
        %s1189 = scalar_lea.vmem [#allocation2], 2
        %v1190 = vld [vmem:[%s1189] sm:$0x3]
        %v1191 = vadd.f32 %v1185, %v1187
        %v1192 = vrot.slane %v1191, 4
        %v1193 = vadd.f32 %v1191, %v1192
        %v1194 = vrot.slane %v1193, 2
        %v1195 = vadd.f32 %v1193, %v1194
        %v1196 = vrot.slane %v1195, 1
        %v1197 = vadd.f32 %v1195, %v1196
        %v1198 = vadd.f32 %v1186, %v1188
        %v1199 = vrot.slane %v1198, 4
        %v1200 = vadd.f32 %v1198, %v1199
        %v1201 = vrot.slane %v1200, 2
        %v1202 = vadd.f32 %v1200, %v1201
        %v1203 = vrot.slane %v1202, 1
        %v1204 = vadd.f32 %v1202, %v1203
        %v1207 = vcombine.low %v1197, %v1204
        %v1209 = vunpack.c.l.s4 1966171168
        %v1210 = vunpack.c.0.s8 %v1209
        %v1211 = vlaneseq
        %v1212 = vshrl.u32 %v1211, 7
        %v1213 = vsub.s32 %v1210, %v1212
        %v1214 = vrot.slane %v1207, %v1213
        %v1216 = vunpack.c.l.s4 1966171168
        %v1217 = vunpack.c.0.s8 %v1216
        %v1218 = vlaneseq
        %v1219 = vshrl.u32 %v1218, 7
        %v1220 = vsub.s32 %v1217, %v1219
        %v1221 = vrot.slane %v1214, %v1220
        %v1223 = vadd.f32 %v1190, %v1221
        %1224 = vst.msk [vmem:[%s1189] sm:$0x3] %vm730, %v1223
        %s1225 = scalar_lea.vmem [#allocation6], 16
        %v1226 = vld [vmem:[%s1225] sm:$0xff]
        %v1227 = vld [vmem:[%s1225 + $0x38] sm:$0xff]
        %v1228 = vld [vmem:[%s1225 + $0x70] sm:$0xff]
        %v1229 = vld [vmem:[%s1225 + $0xa8] sm:$0xff]
        %v1230 = vld [vmem:[%s1225 + $0xe0] sm:$0xff]
        %v1231 = vld [vmem:[%s1225 + $0x118] sm:$0xff]
        %v1232 = vld [vmem:[%s1225 + $0x150] sm:$0xff]
        %v1233 = vld [vmem:[%s1225 + $0x188] sm:$0xff]
        %v1234 = vld [vmem:[%s1225 + $0x1c0] sm:$0xff]
        %v1235 = vld [vmem:[%s1225 + $0x1f8] sm:$0xff]
        %v1236 = vld [vmem:[%s1225 + $0x230] sm:$0xff]
        %v1237 = vld [vmem:[%s1225 + $0x268] sm:$0xff]
        %v1238 = vld [vmem:[%s1225 + $0x2a0] sm:$0xff]
        %v1239 = vld [vmem:[%s1225 + $0x2d8] sm:$0xff]
        %v1240 = vld [vmem:[%s1225 + $0x310] sm:$0xff]
        %v1241 = vld [vmem:[%s1225 + $0x348] sm:$0xff]
        %v1242 = vld [vmem:[%s1225 + $0x380] sm:$0xff]
        %v1243 = vld [vmem:[%s1225 + $0x3b8] sm:$0xff]
        %v1244 = vld [vmem:[%s1225 + $0x3f0] sm:$0xff]
        %v1245 = vld [vmem:[%s1225 + $0x428] sm:$0xff]
        %v1246 = vld [vmem:[%s1225 + $0x460] sm:$0xff]
        %v1247 = vld [vmem:[%s1225 + $0x498] sm:$0xff]
        %v1248 = vld [vmem:[%s1225 + $0x4d0] sm:$0xff]
        %v1249 = vld [vmem:[%s1225 + $0x508] sm:$0xff]
        %v1250 = vld [vmem:[%s1225 + $0x540] sm:$0xff]
        %v1251 = vld [vmem:[%s1225 + $0x578] sm:$0xff]
        %v1252 = vld [vmem:[%s1225 + $0x5b0] sm:$0xff]
        %v1253 = vld [vmem:[%s1225 + $0x5e8] sm:$0xff]
        %v1254 = vld [vmem:[%s1225 + $0x620] sm:$0xff]
        %v1255 = vld [vmem:[%s1225 + $0x658] sm:$0xff]
        %v1256 = vld [vmem:[%s1225 + $0x690] sm:$0xff]
        %v1257 = vld [vmem:[%s1225 + $0x6c8] sm:$0xff]
        %v1258 = vld [vmem:[%s1225 + $0x700] sm:$0xff]
        %v1259 = vld [vmem:[%s1225 + $0x738] sm:$0xff]
        %v1260 = vld [vmem:[%s1225 + $0x770] sm:$0xff]
        %v1261 = vld [vmem:[%s1225 + $0x7a8] sm:$0xff]
        %v1262 = vld [vmem:[%s1225 + $0x7e0] sm:$0xff]
        %v1263 = vld [vmem:[%s1225 + $0x818] sm:$0xff]
        %v1264 = vld [vmem:[%s1225 + $0x850] sm:$0xff]
        %v1265 = vld [vmem:[%s1225 + $0x888] sm:$0xff]
        %v1266 = vld [vmem:[%s1225 + $0x8c0] sm:$0xff]
        %v1267 = vld [vmem:[%s1225 + $0x8f8] sm:$0xff]
        %v1268 = vld [vmem:[%s1225 + $0x930] sm:$0xff]
        %v1269 = vld [vmem:[%s1225 + $0x968] sm:$0xff]
        %v1270 = vld [vmem:[%s1225 + $0x9a0] sm:$0xff]
        %v1271 = vld [vmem:[%s1225 + $0x9d8] sm:$0xff]
        %v1272 = vld [vmem:[%s1225 + $0xa10] sm:$0xff]
        %v1273 = vld [vmem:[%s1225 + $0xa48] sm:$0xff]
        %v1274 = vld [vmem:[%s1225 + $0xa80] sm:$0xff]
        %v1275 = vld [vmem:[%s1225 + $0xab8] sm:$0xff]
        %v1276 = vld [vmem:[%s1225 + $0xaf0] sm:$0xff]
        %v1277 = vld [vmem:[%s1225 + $0xb28] sm:$0xff]
        %v1278 = vld [vmem:[%s1225 + $0xb60] sm:$0xff]
        %v1279 = vld [vmem:[%s1225 + $0xb98] sm:$0xff]
        %v1280 = vld [vmem:[%s1225 + $0xbd0] sm:$0xff]
        %v1281 = vld [vmem:[%s1225 + $0xc08] sm:$0xff]
        %v1282 = vld [vmem:[%s1225 + $0xc40] sm:$0x11]
        %v1340 = vunpack.c.l.b16 %v1226
        %v1341 = vunpack.c.h.b16 %v1226
        %v1342 = vunpack.c.l.b16 %v1227
        %v1343 = vunpack.c.h.b16 %v1227
        %v1344 = vunpack.c.l.b16 %v1228
        %v1345 = vunpack.c.h.b16 %v1228
        %v1346 = vunpack.c.l.b16 %v1229
        %v1347 = vunpack.c.h.b16 %v1229
        %v1348 = vunpack.c.l.b16 %v1230
        %v1349 = vunpack.c.h.b16 %v1230
        %v1350 = vunpack.c.l.b16 %v1231
        %v1351 = vunpack.c.h.b16 %v1231
        %v1352 = vunpack.c.l.b16 %v1232
        %v1353 = vunpack.c.h.b16 %v1232
        %v1354 = vunpack.c.l.b16 %v1233
        %v1355 = vunpack.c.h.b16 %v1233
        %v1356 = vunpack.c.l.b16 %v1234
        %v1357 = vunpack.c.h.b16 %v1234
        %v1358 = vunpack.c.l.b16 %v1235
        %v1359 = vunpack.c.h.b16 %v1235
        %v1360 = vunpack.c.l.b16 %v1236
        %v1361 = vunpack.c.h.b16 %v1236
        %v1362 = vunpack.c.l.b16 %v1237
        %v1363 = vunpack.c.h.b16 %v1237
        %v1364 = vunpack.c.l.b16 %v1238
        %v1365 = vunpack.c.h.b16 %v1238
        %v1366 = vunpack.c.l.b16 %v1239
        %v1367 = vunpack.c.h.b16 %v1239
        %v1368 = vunpack.c.l.b16 %v1240
        %v1369 = vunpack.c.h.b16 %v1240
        %v1370 = vunpack.c.l.b16 %v1241
        %v1371 = vunpack.c.h.b16 %v1241
        %v1372 = vunpack.c.l.b16 %v1242
        %v1373 = vunpack.c.h.b16 %v1242
        %v1374 = vunpack.c.l.b16 %v1243
        %v1375 = vunpack.c.h.b16 %v1243
        %v1376 = vunpack.c.l.b16 %v1244
        %v1377 = vunpack.c.h.b16 %v1244
        %v1378 = vunpack.c.l.b16 %v1245
        %v1379 = vunpack.c.h.b16 %v1245
        %v1380 = vunpack.c.l.b16 %v1246
        %v1381 = vunpack.c.h.b16 %v1246
        %v1382 = vunpack.c.l.b16 %v1247
        %v1383 = vunpack.c.h.b16 %v1247
        %v1384 = vunpack.c.l.b16 %v1248
        %v1385 = vunpack.c.h.b16 %v1248
        %v1386 = vunpack.c.l.b16 %v1249
        %v1387 = vunpack.c.h.b16 %v1249
        %v1388 = vunpack.c.l.b16 %v1250
        %v1389 = vunpack.c.h.b16 %v1250
        %v1390 = vunpack.c.l.b16 %v1251
        %v1391 = vunpack.c.h.b16 %v1251
        %v1392 = vunpack.c.l.b16 %v1252
        %v1393 = vunpack.c.h.b16 %v1252
        %v1394 = vunpack.c.l.b16 %v1253
        %v1395 = vunpack.c.h.b16 %v1253
        %v1396 = vunpack.c.l.b16 %v1254
        %v1397 = vunpack.c.h.b16 %v1254
        %v1398 = vunpack.c.l.b16 %v1255
        %v1399 = vunpack.c.h.b16 %v1255
        %v1400 = vunpack.c.l.b16 %v1256
        %v1401 = vunpack.c.h.b16 %v1256
        %v1402 = vunpack.c.l.b16 %v1257
        %v1403 = vunpack.c.h.b16 %v1257
        %v1404 = vunpack.c.l.b16 %v1258
        %v1405 = vunpack.c.h.b16 %v1258
        %v1406 = vunpack.c.l.b16 %v1259
        %v1407 = vunpack.c.h.b16 %v1259
        %v1408 = vunpack.c.l.b16 %v1260
        %v1409 = vunpack.c.h.b16 %v1260
        %v1410 = vunpack.c.l.b16 %v1261
        %v1411 = vunpack.c.h.b16 %v1261
        %v1412 = vunpack.c.l.b16 %v1262
        %v1413 = vunpack.c.h.b16 %v1262
        %v1414 = vunpack.c.l.b16 %v1263
        %v1415 = vunpack.c.h.b16 %v1263
        %v1416 = vunpack.c.l.b16 %v1264
        %v1417 = vunpack.c.h.b16 %v1264
        %v1418 = vunpack.c.l.b16 %v1265
        %v1419 = vunpack.c.h.b16 %v1265
        %v1420 = vunpack.c.l.b16 %v1266
        %v1421 = vunpack.c.h.b16 %v1266
        %v1422 = vunpack.c.l.b16 %v1267
        %v1423 = vunpack.c.h.b16 %v1267
        %v1424 = vunpack.c.l.b16 %v1268
        %v1425 = vunpack.c.h.b16 %v1268
        %v1426 = vunpack.c.l.b16 %v1269
        %v1427 = vunpack.c.h.b16 %v1269
        %v1428 = vunpack.c.l.b16 %v1270
        %v1429 = vunpack.c.h.b16 %v1270
        %v1430 = vunpack.c.l.b16 %v1271
        %v1431 = vunpack.c.h.b16 %v1271
        %v1432 = vunpack.c.l.b16 %v1272
        %v1433 = vunpack.c.h.b16 %v1272
        %v1434 = vunpack.c.l.b16 %v1273
        %v1435 = vunpack.c.h.b16 %v1273
        %v1436 = vunpack.c.l.b16 %v1274
        %v1437 = vunpack.c.h.b16 %v1274
        %v1438 = vunpack.c.l.b16 %v1275
        %v1439 = vunpack.c.h.b16 %v1275
        %v1440 = vunpack.c.l.b16 %v1276
        %v1441 = vunpack.c.h.b16 %v1276
        %v1442 = vunpack.c.l.b16 %v1277
        %v1443 = vunpack.c.h.b16 %v1277
        %v1444 = vunpack.c.l.b16 %v1278
        %v1445 = vunpack.c.h.b16 %v1278
        %v1446 = vunpack.c.l.b16 %v1279
        %v1447 = vunpack.c.h.b16 %v1279
        %v1448 = vunpack.c.l.b16 %v1280
        %v1449 = vunpack.c.h.b16 %v1280
        %v1450 = vunpack.c.l.b16 %v1281
        %v1451 = vunpack.c.h.b16 %v1281
        %v1452 = vunpack.c.l.b16 %v1282
        %v1453 = vunpack.c.h.b16 %v1282
        %v1454 = vpack.c.b16 %v1342, %v1340
        %v1455 = vpack.c.b16 %v1343, %v1341
        %v1456 = vpack.c.b16 %v1346, %v1344
        %v1457 = vpack.c.b16 %v1347, %v1345
        %v1458 = vpack.c.b16 %v1350, %v1348
        %v1459 = vpack.c.b16 %v1351, %v1349
        %v1460 = vpack.c.b16 %v1354, %v1352
        %v1461 = vpack.c.b16 %v1355, %v1353
        %v1462 = vpack.c.b16 %v1358, %v1356
        %v1463 = vpack.c.b16 %v1359, %v1357
        %v1464 = vpack.c.b16 %v1362, %v1360
        %v1465 = vpack.c.b16 %v1363, %v1361
        %v1466 = vpack.c.b16 %v1366, %v1364
        %v1467 = vpack.c.b16 %v1367, %v1365
        %v1468 = vpack.c.b16 %v1370, %v1368
        %v1469 = vpack.c.b16 %v1371, %v1369
        %v1470 = vpack.c.b16 %v1374, %v1372
        %v1471 = vpack.c.b16 %v1375, %v1373
        %v1472 = vpack.c.b16 %v1378, %v1376
        %v1473 = vpack.c.b16 %v1379, %v1377
        %v1474 = vpack.c.b16 %v1382, %v1380
        %v1475 = vpack.c.b16 %v1383, %v1381
        %v1476 = vpack.c.b16 %v1386, %v1384
        %v1477 = vpack.c.b16 %v1387, %v1385
        %v1478 = vpack.c.b16 %v1390, %v1388
        %v1479 = vpack.c.b16 %v1391, %v1389
        %v1480 = vpack.c.b16 %v1394, %v1392
        %v1481 = vpack.c.b16 %v1395, %v1393
        %v1482 = vpack.c.b16 %v1398, %v1396
        %v1483 = vpack.c.b16 %v1399, %v1397
        %v1484 = vpack.c.b16 %v1402, %v1400
        %v1485 = vpack.c.b16 %v1403, %v1401
        %v1486 = vpack.c.b16 %v1406, %v1404
        %v1487 = vpack.c.b16 %v1407, %v1405
        %v1488 = vpack.c.b16 %v1410, %v1408
        %v1489 = vpack.c.b16 %v1411, %v1409
        %v1490 = vpack.c.b16 %v1414, %v1412
        %v1491 = vpack.c.b16 %v1415, %v1413
        %v1492 = vpack.c.b16 %v1418, %v1416
        %v1493 = vpack.c.b16 %v1419, %v1417
        %v1494 = vpack.c.b16 %v1422, %v1420
        %v1495 = vpack.c.b16 %v1423, %v1421
        %v1496 = vpack.c.b16 %v1426, %v1424
        %v1497 = vpack.c.b16 %v1427, %v1425
        %v1498 = vpack.c.b16 %v1430, %v1428
        %v1499 = vpack.c.b16 %v1431, %v1429
        %v1500 = vpack.c.b16 %v1434, %v1432
        %v1501 = vpack.c.b16 %v1435, %v1433
        %v1502 = vpack.c.b16 %v1438, %v1436
        %v1503 = vpack.c.b16 %v1439, %v1437
        %v1504 = vpack.c.b16 %v1442, %v1440
        %v1505 = vpack.c.b16 %v1443, %v1441
        %v1506 = vpack.c.b16 %v1446, %v1444
        %v1507 = vpack.c.b16 %v1447, %v1445
        %v1508 = vpack.c.b16 %v1450, %v1448
        %v1509 = vpack.c.b16 %v1451, %v1449
        %v1510 = vpack.c.b16 %v1452, %v1452
        %v1511 = vpack.c.b16 %v1453, %v1453
        %v1569 = vand.u32 %v1510, %v578
        %v1572 = vand.u32 %v1511, %v578
        %1574 = vmatprep.subr.bf16.mxu0 %v1455
        %1575 = vmatpush1.bf16.msra.mxu0 %v1454
        %1576 = vmatprep.subr.bf16.mxu0 %v1457
        %1577 = vmatpush1.bf16.msra.mxu0 %v1456
        %1578 = vmatprep.subr.bf16.mxu0 %v1459
        %1579 = vmatpush1.bf16.msra.mxu0 %v1458
        %1580 = vmatprep.subr.bf16.mxu0 %v1461
        %1581 = vmatpush1.bf16.msra.mxu0 %v1460
        %1582 = vmatprep.subr.bf16.mxu0 %v1463
        %1583 = vmatpush1.bf16.msra.mxu0 %v1462
        %1584 = vmatprep.subr.bf16.mxu0 %v1465
        %1585 = vmatpush1.bf16.msra.mxu0 %v1464
        %1586 = vmatprep.subr.bf16.mxu0 %v1467
        %1587 = vmatpush1.bf16.msra.mxu0 %v1466
        %1588 = vmatprep.subr.bf16.mxu0 %v1469
        %1589 = vmatpush1.bf16.msra.mxu0 %v1468
        %1590 = vmatprep.subr.bf16.mxu0 %v1471
        %1591 = vmatpush1.bf16.msra.mxu0 %v1470
        %1592 = vmatprep.subr.bf16.mxu0 %v1473
        %1593 = vmatpush1.bf16.msra.mxu0 %v1472
        %1594 = vmatprep.subr.bf16.mxu0 %v1475
        %1595 = vmatpush1.bf16.msra.mxu0 %v1474
        %1596 = vmatprep.subr.bf16.mxu0 %v1477
        %1597 = vmatpush1.bf16.msra.mxu0 %v1476
        %1598 = vmatprep.subr.bf16.mxu0 %v1479
        %1599 = vmatpush1.bf16.msra.mxu0 %v1478
        %1600 = vmatprep.subr.bf16.mxu0 %v1481
        %1601 = vmatpush1.bf16.msra.mxu0 %v1480
        %1602 = vmatprep.subr.bf16.mxu0 %v1483
        %1603 = vmatpush1.bf16.msra.mxu0 %v1482
        %1604 = vmatprep.subr.bf16.mxu0 %v1485
        %1605 = vmatpush1.bf16.msra.mxu0 %v1484
        %1606 = vmatprep.mubr.bf16.mxu0 %v281
        %1607 = vmatmul.mubr.bf16.gmra.mrb[0].mxu0 %v280
        %v1608 = vpop.f32.mrb[0].mxu0
        %v1609 = vadd.f32 0.0, %v1608
        %v1610 = vpop.f32.mrb[0].mxu0
        %v1611 = vadd.f32 0.0, %v1610
        %v1612 = vpop.f32.mrb[0].mxu0
        %v1613 = vadd.f32 0.0, %v1612
        %v1614 = vpop.f32.mrb[0].mxu0
        %v1615 = vadd.f32 0.0, %v1614
        %1616 = vdwg.mxu0
        %1617 = vmatprep.subr.bf16.mxu0 %v1487
        %1618 = vmatpush1.bf16.msra.mxu0 %v1486
        %1619 = vmatprep.subr.bf16.mxu0 %v1489
        %1620 = vmatpush1.bf16.msra.mxu0 %v1488
        %1621 = vmatprep.subr.bf16.mxu0 %v1491
        %1622 = vmatpush1.bf16.msra.mxu0 %v1490
        %1623 = vmatprep.subr.bf16.mxu0 %v1493
        %1624 = vmatpush1.bf16.msra.mxu0 %v1492
        %1625 = vmatprep.subr.bf16.mxu0 %v1495
        %1626 = vmatpush1.bf16.msra.mxu0 %v1494
        %1627 = vmatprep.subr.bf16.mxu0 %v1497
        %1628 = vmatpush1.bf16.msra.mxu0 %v1496
        %1629 = vmatprep.subr.bf16.mxu0 %v1499
        %1630 = vmatpush1.bf16.msra.mxu0 %v1498
        %1631 = vmatprep.subr.bf16.mxu0 %v1501
        %1632 = vmatpush1.bf16.msra.mxu0 %v1500
        %1633 = vmatprep.subr.bf16.mxu0 %v1503
        %1634 = vmatpush1.bf16.msra.mxu0 %v1502
        %1635 = vmatprep.subr.bf16.mxu0 %v1505
        %1636 = vmatpush1.bf16.msra.mxu0 %v1504
        %1637 = vmatprep.subr.bf16.mxu0 %v1507
        %1638 = vmatpush1.bf16.msra.mxu0 %v1506
        %1639 = vmatprep.subr.bf16.mxu0 %v1509
        %1640 = vmatpush1.bf16.msra.mxu0 %v1508
        %1641 = vmatprep.subr.bf16.mxu0 %v1572
        %1642 = vmatpush1.bf16.msra.mxu0 %v1569
        %1643 = vmatprep.subr.bf16.mxu0 0
        %1644 = vmatpush1.bf16.msra.mxu0 0
        %1645 = vmatprep.subr.bf16.mxu0 0
        %1646 = vmatpush1.bf16.msra.mxu0 0
        %1647 = vmatprep.subr.bf16.mxu0 0
        %1648 = vmatpush1.bf16.msra.mxu0 0
        %1649 = vmatprep.mubr.bf16.mxu0 %v574
        %1650 = vmatmul.mubr.bf16.gmra.mrb[0].mxu0 %v282
        %v1651 = vpop.f32.mrb[0].mxu0
        %v1652 = vadd.f32 %v1609, %v1651
        %v1653 = vpop.f32.mrb[0].mxu0
        %v1654 = vadd.f32 %v1611, %v1653
        %v1655 = vpop.f32.mrb[0].mxu0
        %v1656 = vadd.f32 %v1613, %v1655
        %v1657 = vpop.f32.mrb[0].mxu0
        %v1658 = vadd.f32 %v1615, %v1657
        %1659 = vdwg.mxu0
        %v1660 = vpack.c.bf16 %v1656, %v1652
        %v1661 = vpack.c.bf16 %v1658, %v1654
        %v1662 = vxor.u32 %v1660, 2147516416
        %v1663 = vxor.u32 %v1661, 2147516416
        %v1665 = vmul.bf16 %v1662, 1069105081
        %v1666 = vpow.bf16.pop %v1665
        %v1668 = vmul.bf16 %v1663, 1069105081
        %v1669 = vpow.bf16.pop %v1668
        %v1670 = vadd.bf16 %v1666, 1065369472
        %v1671 = vadd.bf16 %v1669, 1065369472
        %v1672 = vrcp.bf16.pop %v1670
        %v1673 = vmul.bf16 1065369472, %v1672
        %v1674 = vrcp.bf16.pop %v1671
        %v1675 = vmul.bf16 1065369472, %v1674
        %v1676 = vmul.bf16 %v1660, %v1673
        %v1677 = vmul.bf16 %v1661, %v1675
        %v1678 = vunpack.c.l.bf16 %v1676
        %v1679 = vunpack.c.l.bf16 %v1677
        %v1680 = vunpack.c.h.bf16 %v1676
        %v1681 = vunpack.c.h.bf16 %v1677
        %s1682 = scalar_lea.vmem [#allocation2], 4
        %v1683 = vld [vmem:[%s1682] sm:$0x3]
        %v1684 = vadd.f32 %v1678, %v1680
        %v1685 = vrot.slane %v1684, 4
        %v1686 = vadd.f32 %v1684, %v1685
        %v1687 = vrot.slane %v1686, 2
        %v1688 = vadd.f32 %v1686, %v1687
        %v1689 = vrot.slane %v1688, 1
        %v1690 = vadd.f32 %v1688, %v1689
        %v1691 = vadd.f32 %v1679, %v1681
        %v1692 = vrot.slane %v1691, 4
        %v1693 = vadd.f32 %v1691, %v1692
        %v1694 = vrot.slane %v1693, 2
        %v1695 = vadd.f32 %v1693, %v1694
        %v1696 = vrot.slane %v1695, 1
        %v1697 = vadd.f32 %v1695, %v1696
        %v1700 = vcombine.low %v1690, %v1697
        %v1702 = vunpack.c.l.s4 1966171168
        %v1703 = vunpack.c.0.s8 %v1702
        %v1704 = vlaneseq
        %v1705 = vshrl.u32 %v1704, 7
        %v1706 = vsub.s32 %v1703, %v1705
        %v1707 = vrot.slane %v1700, %v1706
        %v1709 = vunpack.c.l.s4 1966171168
        %v1710 = vunpack.c.0.s8 %v1709
        %v1711 = vlaneseq
        %v1712 = vshrl.u32 %v1711, 7
        %v1713 = vsub.s32 %v1710, %v1712
        %v1714 = vrot.slane %v1707, %v1713
        %v1716 = vadd.f32 %v1683, %v1714
        %1717 = vst.msk [vmem:[%s1682] sm:$0x3] %vm730, %v1716
        %s1718 = scalar_lea.vmem [#allocation6], 24
        %v1719 = vld [vmem:[%s1718] sm:$0xff]
        %v1720 = vld [vmem:[%s1718 + $0x38] sm:$0xff]
        %v1721 = vld [vmem:[%s1718 + $0x70] sm:$0xff]
        %v1722 = vld [vmem:[%s1718 + $0xa8] sm:$0xff]
        %v1723 = vld [vmem:[%s1718 + $0xe0] sm:$0xff]
        %v1724 = vld [vmem:[%s1718 + $0x118] sm:$0xff]
        %v1725 = vld [vmem:[%s1718 + $0x150] sm:$0xff]
        %v1726 = vld [vmem:[%s1718 + $0x188] sm:$0xff]
        %v1727 = vld [vmem:[%s1718 + $0x1c0] sm:$0xff]
        %v1728 = vld [vmem:[%s1718 + $0x1f8] sm:$0xff]
        %v1729 = vld [vmem:[%s1718 + $0x230] sm:$0xff]
        %v1730 = vld [vmem:[%s1718 + $0x268] sm:$0xff]
        %v1731 = vld [vmem:[%s1718 + $0x2a0] sm:$0xff]
        %v1732 = vld [vmem:[%s1718 + $0x2d8] sm:$0xff]
        %v1733 = vld [vmem:[%s1718 + $0x310] sm:$0xff]
        %v1734 = vld [vmem:[%s1718 + $0x348] sm:$0xff]
        %v1735 = vld [vmem:[%s1718 + $0x380] sm:$0xff]
        %v1736 = vld [vmem:[%s1718 + $0x3b8] sm:$0xff]
        %v1737 = vld [vmem:[%s1718 + $0x3f0] sm:$0xff]
        %v1738 = vld [vmem:[%s1718 + $0x428] sm:$0xff]
        %v1739 = vld [vmem:[%s1718 + $0x460] sm:$0xff]
        %v1740 = vld [vmem:[%s1718 + $0x498] sm:$0xff]
        %v1741 = vld [vmem:[%s1718 + $0x4d0] sm:$0xff]
        %v1742 = vld [vmem:[%s1718 + $0x508] sm:$0xff]
        %v1743 = vld [vmem:[%s1718 + $0x540] sm:$0xff]
        %v1744 = vld [vmem:[%s1718 + $0x578] sm:$0xff]
        %v1745 = vld [vmem:[%s1718 + $0x5b0] sm:$0xff]
        %v1746 = vld [vmem:[%s1718 + $0x5e8] sm:$0xff]
        %v1747 = vld [vmem:[%s1718 + $0x620] sm:$0xff]
        %v1748 = vld [vmem:[%s1718 + $0x658] sm:$0xff]
        %v1749 = vld [vmem:[%s1718 + $0x690] sm:$0xff]
        %v1750 = vld [vmem:[%s1718 + $0x6c8] sm:$0xff]
        %v1751 = vld [vmem:[%s1718 + $0x700] sm:$0xff]
        %v1752 = vld [vmem:[%s1718 + $0x738] sm:$0xff]
        %v1753 = vld [vmem:[%s1718 + $0x770] sm:$0xff]
        %v1754 = vld [vmem:[%s1718 + $0x7a8] sm:$0xff]
        %v1755 = vld [vmem:[%s1718 + $0x7e0] sm:$0xff]
        %v1756 = vld [vmem:[%s1718 + $0x818] sm:$0xff]
        %v1757 = vld [vmem:[%s1718 + $0x850] sm:$0xff]
        %v1758 = vld [vmem:[%s1718 + $0x888] sm:$0xff]
        %v1759 = vld [vmem:[%s1718 + $0x8c0] sm:$0xff]
        %v1760 = vld [vmem:[%s1718 + $0x8f8] sm:$0xff]
        %v1761 = vld [vmem:[%s1718 + $0x930] sm:$0xff]
        %v1762 = vld [vmem:[%s1718 + $0x968] sm:$0xff]
        %v1763 = vld [vmem:[%s1718 + $0x9a0] sm:$0xff]
        %v1764 = vld [vmem:[%s1718 + $0x9d8] sm:$0xff]
        %v1765 = vld [vmem:[%s1718 + $0xa10] sm:$0xff]
        %v1766 = vld [vmem:[%s1718 + $0xa48] sm:$0xff]
        %v1767 = vld [vmem:[%s1718 + $0xa80] sm:$0xff]
        %v1768 = vld [vmem:[%s1718 + $0xab8] sm:$0xff]
        %v1769 = vld [vmem:[%s1718 + $0xaf0] sm:$0xff]
        %v1770 = vld [vmem:[%s1718 + $0xb28] sm:$0xff]
        %v1771 = vld [vmem:[%s1718 + $0xb60] sm:$0xff]
        %v1772 = vld [vmem:[%s1718 + $0xb98] sm:$0xff]
        %v1773 = vld [vmem:[%s1718 + $0xbd0] sm:$0xff]
        %v1774 = vld [vmem:[%s1718 + $0xc08] sm:$0xff]
        %v1775 = vld [vmem:[%s1718 + $0xc40] sm:$0x11]
        %v1833 = vunpack.c.l.b16 %v1719
        %v1834 = vunpack.c.h.b16 %v1719
        %v1835 = vunpack.c.l.b16 %v1720
        %v1836 = vunpack.c.h.b16 %v1720
        %v1837 = vunpack.c.l.b16 %v1721
        %v1838 = vunpack.c.h.b16 %v1721
        %v1839 = vunpack.c.l.b16 %v1722
        %v1840 = vunpack.c.h.b16 %v1722
        %v1841 = vunpack.c.l.b16 %v1723
        %v1842 = vunpack.c.h.b16 %v1723
        %v1843 = vunpack.c.l.b16 %v1724
        %v1844 = vunpack.c.h.b16 %v1724
        %v1845 = vunpack.c.l.b16 %v1725
        %v1846 = vunpack.c.h.b16 %v1725
        %v1847 = vunpack.c.l.b16 %v1726
        %v1848 = vunpack.c.h.b16 %v1726
        %v1849 = vunpack.c.l.b16 %v1727
        %v1850 = vunpack.c.h.b16 %v1727
        %v1851 = vunpack.c.l.b16 %v1728
        %v1852 = vunpack.c.h.b16 %v1728
        %v1853 = vunpack.c.l.b16 %v1729
        %v1854 = vunpack.c.h.b16 %v1729
        %v1855 = vunpack.c.l.b16 %v1730
        %v1856 = vunpack.c.h.b16 %v1730
        %v1857 = vunpack.c.l.b16 %v1731
        %v1858 = vunpack.c.h.b16 %v1731
        %v1859 = vunpack.c.l.b16 %v1732
        %v1860 = vunpack.c.h.b16 %v1732
        %v1861 = vunpack.c.l.b16 %v1733
        %v1862 = vunpack.c.h.b16 %v1733
        %v1863 = vunpack.c.l.b16 %v1734
        %v1864 = vunpack.c.h.b16 %v1734
        %v1865 = vunpack.c.l.b16 %v1735
        %v1866 = vunpack.c.h.b16 %v1735
        %v1867 = vunpack.c.l.b16 %v1736
        %v1868 = vunpack.c.h.b16 %v1736
        %v1869 = vunpack.c.l.b16 %v1737
        %v1870 = vunpack.c.h.b16 %v1737
        %v1871 = vunpack.c.l.b16 %v1738
        %v1872 = vunpack.c.h.b16 %v1738
        %v1873 = vunpack.c.l.b16 %v1739
        %v1874 = vunpack.c.h.b16 %v1739
        %v1875 = vunpack.c.l.b16 %v1740
        %v1876 = vunpack.c.h.b16 %v1740
        %v1877 = vunpack.c.l.b16 %v1741
        %v1878 = vunpack.c.h.b16 %v1741
        %v1879 = vunpack.c.l.b16 %v1742
        %v1880 = vunpack.c.h.b16 %v1742
        %v1881 = vunpack.c.l.b16 %v1743
        %v1882 = vunpack.c.h.b16 %v1743
        %v1883 = vunpack.c.l.b16 %v1744
        %v1884 = vunpack.c.h.b16 %v1744
        %v1885 = vunpack.c.l.b16 %v1745
        %v1886 = vunpack.c.h.b16 %v1745
        %v1887 = vunpack.c.l.b16 %v1746
        %v1888 = vunpack.c.h.b16 %v1746
        %v1889 = vunpack.c.l.b16 %v1747
        %v1890 = vunpack.c.h.b16 %v1747
        %v1891 = vunpack.c.l.b16 %v1748
        %v1892 = vunpack.c.h.b16 %v1748
        %v1893 = vunpack.c.l.b16 %v1749
        %v1894 = vunpack.c.h.b16 %v1749
        %v1895 = vunpack.c.l.b16 %v1750
        %v1896 = vunpack.c.h.b16 %v1750
        %v1897 = vunpack.c.l.b16 %v1751
        %v1898 = vunpack.c.h.b16 %v1751
        %v1899 = vunpack.c.l.b16 %v1752
        %v1900 = vunpack.c.h.b16 %v1752
        %v1901 = vunpack.c.l.b16 %v1753
        %v1902 = vunpack.c.h.b16 %v1753
        %v1903 = vunpack.c.l.b16 %v1754
        %v1904 = vunpack.c.h.b16 %v1754
        %v1905 = vunpack.c.l.b16 %v1755
        %v1906 = vunpack.c.h.b16 %v1755
        %v1907 = vunpack.c.l.b16 %v1756
        %v1908 = vunpack.c.h.b16 %v1756
        %v1909 = vunpack.c.l.b16 %v1757
        %v1910 = vunpack.c.h.b16 %v1757
        %v1911 = vunpack.c.l.b16 %v1758
        %v1912 = vunpack.c.h.b16 %v1758
        %v1913 = vunpack.c.l.b16 %v1759
        %v1914 = vunpack.c.h.b16 %v1759
        %v1915 = vunpack.c.l.b16 %v1760
        %v1916 = vunpack.c.h.b16 %v1760
        %v1917 = vunpack.c.l.b16 %v1761
        %v1918 = vunpack.c.h.b16 %v1761
        %v1919 = vunpack.c.l.b16 %v1762
        %v1920 = vunpack.c.h.b16 %v1762
        %v1921 = vunpack.c.l.b16 %v1763
        %v1922 = vunpack.c.h.b16 %v1763
        %v1923 = vunpack.c.l.b16 %v1764
        %v1924 = vunpack.c.h.b16 %v1764
        %v1925 = vunpack.c.l.b16 %v1765
        %v1926 = vunpack.c.h.b16 %v1765
        %v1927 = vunpack.c.l.b16 %v1766
        %v1928 = vunpack.c.h.b16 %v1766
        %v1929 = vunpack.c.l.b16 %v1767
        %v1930 = vunpack.c.h.b16 %v1767
        %v1931 = vunpack.c.l.b16 %v1768
        %v1932 = vunpack.c.h.b16 %v1768
        %v1933 = vunpack.c.l.b16 %v1769
        %v1934 = vunpack.c.h.b16 %v1769
        %v1935 = vunpack.c.l.b16 %v1770
        %v1936 = vunpack.c.h.b16 %v1770
        %v1937 = vunpack.c.l.b16 %v1771
        %v1938 = vunpack.c.h.b16 %v1771
        %v1939 = vunpack.c.l.b16 %v1772
        %v1940 = vunpack.c.h.b16 %v1772
        %v1941 = vunpack.c.l.b16 %v1773
        %v1942 = vunpack.c.h.b16 %v1773
        %v1943 = vunpack.c.l.b16 %v1774
        %v1944 = vunpack.c.h.b16 %v1774
        %v1945 = vunpack.c.l.b16 %v1775
        %v1946 = vunpack.c.h.b16 %v1775
        %v1947 = vpack.c.b16 %v1835, %v1833
        %v1948 = vpack.c.b16 %v1836, %v1834
        %v1949 = vpack.c.b16 %v1839, %v1837
        %v1950 = vpack.c.b16 %v1840, %v1838
        %v1951 = vpack.c.b16 %v1843, %v1841
        %v1952 = vpack.c.b16 %v1844, %v1842
        %v1953 = vpack.c.b16 %v1847, %v1845
        %v1954 = vpack.c.b16 %v1848, %v1846
        %v1955 = vpack.c.b16 %v1851, %v1849
        %v1956 = vpack.c.b16 %v1852, %v1850
        %v1957 = vpack.c.b16 %v1855, %v1853
        %v1958 = vpack.c.b16 %v1856, %v1854
        %v1959 = vpack.c.b16 %v1859, %v1857
        %v1960 = vpack.c.b16 %v1860, %v1858
        %v1961 = vpack.c.b16 %v1863, %v1861
        %v1962 = vpack.c.b16 %v1864, %v1862
        %v1963 = vpack.c.b16 %v1867, %v1865
        %v1964 = vpack.c.b16 %v1868, %v1866
        %v1965 = vpack.c.b16 %v1871, %v1869
        %v1966 = vpack.c.b16 %v1872, %v1870
        %v1967 = vpack.c.b16 %v1875, %v1873
        %v1968 = vpack.c.b16 %v1876, %v1874
        %v1969 = vpack.c.b16 %v1879, %v1877
        %v1970 = vpack.c.b16 %v1880, %v1878
        %v1971 = vpack.c.b16 %v1883, %v1881
        %v1972 = vpack.c.b16 %v1884, %v1882
        %v1973 = vpack.c.b16 %v1887, %v1885
        %v1974 = vpack.c.b16 %v1888, %v1886
        %v1975 = vpack.c.b16 %v1891, %v1889
        %v1976 = vpack.c.b16 %v1892, %v1890
        %v1977 = vpack.c.b16 %v1895, %v1893
        %v1978 = vpack.c.b16 %v1896, %v1894
        %v1979 = vpack.c.b16 %v1899, %v1897
        %v1980 = vpack.c.b16 %v1900, %v1898
        %v1981 = vpack.c.b16 %v1903, %v1901
        %v1982 = vpack.c.b16 %v1904, %v1902
        %v1983 = vpack.c.b16 %v1907, %v1905
        %v1984 = vpack.c.b16 %v1908, %v1906
        %v1985 = vpack.c.b16 %v1911, %v1909
        %v1986 = vpack.c.b16 %v1912, %v1910
        %v1987 = vpack.c.b16 %v1915, %v1913
        %v1988 = vpack.c.b16 %v1916, %v1914
        %v1989 = vpack.c.b16 %v1919, %v1917
        %v1990 = vpack.c.b16 %v1920, %v1918
        %v1991 = vpack.c.b16 %v1923, %v1921
        %v1992 = vpack.c.b16 %v1924, %v1922
        %v1993 = vpack.c.b16 %v1927, %v1925
        %v1994 = vpack.c.b16 %v1928, %v1926
        %v1995 = vpack.c.b16 %v1931, %v1929
        %v1996 = vpack.c.b16 %v1932, %v1930
        %v1997 = vpack.c.b16 %v1935, %v1933
        %v1998 = vpack.c.b16 %v1936, %v1934
        %v1999 = vpack.c.b16 %v1939, %v1937
        %v2000 = vpack.c.b16 %v1940, %v1938
        %v2001 = vpack.c.b16 %v1943, %v1941
        %v2002 = vpack.c.b16 %v1944, %v1942
        %v2003 = vpack.c.b16 %v1945, %v1945
        %v2004 = vpack.c.b16 %v1946, %v1946
        %v2062 = vand.u32 %v2003, %v578
        %v2065 = vand.u32 %v2004, %v578
        %2067 = vmatprep.subr.bf16.mxu0 %v1948
        %2068 = vmatpush1.bf16.msra.mxu0 %v1947
        %2069 = vmatprep.subr.bf16.mxu0 %v1950
        %2070 = vmatpush1.bf16.msra.mxu0 %v1949
        %2071 = vmatprep.subr.bf16.mxu0 %v1952
        %2072 = vmatpush1.bf16.msra.mxu0 %v1951
        %2073 = vmatprep.subr.bf16.mxu0 %v1954
        %2074 = vmatpush1.bf16.msra.mxu0 %v1953
        %2075 = vmatprep.subr.bf16.mxu0 %v1956
        %2076 = vmatpush1.bf16.msra.mxu0 %v1955
        %2077 = vmatprep.subr.bf16.mxu0 %v1958
        %2078 = vmatpush1.bf16.msra.mxu0 %v1957
        %2079 = vmatprep.subr.bf16.mxu0 %v1960
        %2080 = vmatpush1.bf16.msra.mxu0 %v1959
        %2081 = vmatprep.subr.bf16.mxu0 %v1962
        %2082 = vmatpush1.bf16.msra.mxu0 %v1961
        %2083 = vmatprep.subr.bf16.mxu0 %v1964
        %2084 = vmatpush1.bf16.msra.mxu0 %v1963
        %2085 = vmatprep.subr.bf16.mxu0 %v1966
        %2086 = vmatpush1.bf16.msra.mxu0 %v1965
        %2087 = vmatprep.subr.bf16.mxu0 %v1968
        %2088 = vmatpush1.bf16.msra.mxu0 %v1967
        %2089 = vmatprep.subr.bf16.mxu0 %v1970
        %2090 = vmatpush1.bf16.msra.mxu0 %v1969
        %2091 = vmatprep.subr.bf16.mxu0 %v1972
        %2092 = vmatpush1.bf16.msra.mxu0 %v1971
        %2093 = vmatprep.subr.bf16.mxu0 %v1974
        %2094 = vmatpush1.bf16.msra.mxu0 %v1973
        %2095 = vmatprep.subr.bf16.mxu0 %v1976
        %2096 = vmatpush1.bf16.msra.mxu0 %v1975
        %2097 = vmatprep.subr.bf16.mxu0 %v1978
        %2098 = vmatpush1.bf16.msra.mxu0 %v1977
        %2099 = vmatprep.mubr.bf16.mxu0 %v281
        %2100 = vmatmul.mubr.bf16.gmra.mrb[0].mxu0 %v280
        %v2101 = vpop.f32.mrb[0].mxu0
        %v2102 = vadd.f32 0.0, %v2101
        %v2103 = vpop.f32.mrb[0].mxu0
        %v2104 = vadd.f32 0.0, %v2103
        %v2105 = vpop.f32.mrb[0].mxu0
        %v2106 = vadd.f32 0.0, %v2105
        %v2107 = vpop.f32.mrb[0].mxu0
        %v2108 = vadd.f32 0.0, %v2107
        %2109 = vdwg.mxu0
        %2110 = vmatprep.subr.bf16.mxu0 %v1980
        %2111 = vmatpush1.bf16.msra.mxu0 %v1979
        %2112 = vmatprep.subr.bf16.mxu0 %v1982
        %2113 = vmatpush1.bf16.msra.mxu0 %v1981
        %2114 = vmatprep.subr.bf16.mxu0 %v1984
        %2115 = vmatpush1.bf16.msra.mxu0 %v1983
        %2116 = vmatprep.subr.bf16.mxu0 %v1986
        %2117 = vmatpush1.bf16.msra.mxu0 %v1985
        %2118 = vmatprep.subr.bf16.mxu0 %v1988
        %2119 = vmatpush1.bf16.msra.mxu0 %v1987
        %2120 = vmatprep.subr.bf16.mxu0 %v1990
        %2121 = vmatpush1.bf16.msra.mxu0 %v1989
        %2122 = vmatprep.subr.bf16.mxu0 %v1992
        %2123 = vmatpush1.bf16.msra.mxu0 %v1991
        %2124 = vmatprep.subr.bf16.mxu0 %v1994
        %2125 = vmatpush1.bf16.msra.mxu0 %v1993
        %2126 = vmatprep.subr.bf16.mxu0 %v1996
        %2127 = vmatpush1.bf16.msra.mxu0 %v1995
        %2128 = vmatprep.subr.bf16.mxu0 %v1998
        %2129 = vmatpush1.bf16.msra.mxu0 %v1997
        %2130 = vmatprep.subr.bf16.mxu0 %v2000
        %2131 = vmatpush1.bf16.msra.mxu0 %v1999
        %2132 = vmatprep.subr.bf16.mxu0 %v2002
        %2133 = vmatpush1.bf16.msra.mxu0 %v2001
        %2134 = vmatprep.subr.bf16.mxu0 %v2065
        %2135 = vmatpush1.bf16.msra.mxu0 %v2062
        %2136 = vmatprep.subr.bf16.mxu0 0
        %2137 = vmatpush1.bf16.msra.mxu0 0
        %2138 = vmatprep.subr.bf16.mxu0 0
        %2139 = vmatpush1.bf16.msra.mxu0 0
        %2140 = vmatprep.subr.bf16.mxu0 0
        %2141 = vmatpush1.bf16.msra.mxu0 0
        %2142 = vmatprep.mubr.bf16.mxu0 %v574
        %2143 = vmatmul.mubr.bf16.gmra.mrb[0].mxu0 %v282
        %v2144 = vpop.f32.mrb[0].mxu0
        %v2145 = vadd.f32 %v2102, %v2144
        %v2146 = vpop.f32.mrb[0].mxu0
        %v2147 = vadd.f32 %v2104, %v2146
        %v2148 = vpop.f32.mrb[0].mxu0
        %v2149 = vadd.f32 %v2106, %v2148
        %v2150 = vpop.f32.mrb[0].mxu0
        %v2151 = vadd.f32 %v2108, %v2150
        %2152 = vdwg.mxu0
        %v2153 = vpack.c.bf16 %v2149, %v2145
        %v2154 = vpack.c.bf16 %v2151, %v2147
        %v2155 = vxor.u32 %v2153, 2147516416
        %v2156 = vxor.u32 %v2154, 2147516416
        %v2158 = vmul.bf16 %v2155, 1069105081
        %v2159 = vpow.bf16.pop %v2158
        %v2161 = vmul.bf16 %v2156, 1069105081
        %v2162 = vpow.bf16.pop %v2161
        %v2163 = vadd.bf16 %v2159, 1065369472
        %v2164 = vadd.bf16 %v2162, 1065369472
        %v2165 = vrcp.bf16.pop %v2163
        %v2166 = vmul.bf16 1065369472, %v2165
        %v2167 = vrcp.bf16.pop %v2164
        %v2168 = vmul.bf16 1065369472, %v2167
        %v2169 = vmul.bf16 %v2153, %v2166
        %v2170 = vmul.bf16 %v2154, %v2168
        %v2171 = vunpack.c.l.bf16 %v2169
        %v2172 = vunpack.c.l.bf16 %v2170
        %v2173 = vunpack.c.h.bf16 %v2169
        %v2174 = vunpack.c.h.bf16 %v2170
        %s2175 = scalar_lea.vmem [#allocation2], 6
        %v2176 = vld [vmem:[%s2175] sm:$0x3]
        %v2177 = vadd.f32 %v2171, %v2173
        %v2178 = vrot.slane %v2177, 4
        %v2179 = vadd.f32 %v2177, %v2178
        %v2180 = vrot.slane %v2179, 2
        %v2181 = vadd.f32 %v2179, %v2180
        %v2182 = vrot.slane %v2181, 1
        %v2183 = vadd.f32 %v2181, %v2182
        %v2184 = vadd.f32 %v2172, %v2174
        %v2185 = vrot.slane %v2184, 4
        %v2186 = vadd.f32 %v2184, %v2185
        %v2187 = vrot.slane %v2186, 2
        %v2188 = vadd.f32 %v2186, %v2187
        %v2189 = vrot.slane %v2188, 1
        %v2190 = vadd.f32 %v2188, %v2189
        %v2193 = vcombine.low %v2183, %v2190
        %v2195 = vunpack.c.l.s4 1966171168
        %v2196 = vunpack.c.0.s8 %v2195
        %v2197 = vlaneseq
        %v2198 = vshrl.u32 %v2197, 7
        %v2199 = vsub.s32 %v2196, %v2198
        %v2200 = vrot.slane %v2193, %v2199
        %v2202 = vunpack.c.l.s4 1966171168
        %v2203 = vunpack.c.0.s8 %v2202
        %v2204 = vlaneseq
        %v2205 = vshrl.u32 %v2204, 7
        %v2206 = vsub.s32 %v2203, %v2205
        %v2207 = vrot.slane %v2200, %v2206
        %v2209 = vadd.f32 %v2176, %v2207
        %2210 = vst.msk [vmem:[%s2175] sm:$0x3] %vm730, %v2209
        %s2211 = scalar_lea.vmem [#allocation6], 32
        %v2212 = vld [vmem:[%s2211] sm:$0xff]
        %v2213 = vld [vmem:[%s2211 + $0x38] sm:$0xff]
        %v2214 = vld [vmem:[%s2211 + $0x70] sm:$0xff]
        %v2215 = vld [vmem:[%s2211 + $0xa8] sm:$0xff]
        %v2216 = vld [vmem:[%s2211 + $0xe0] sm:$0xff]
        %v2217 = vld [vmem:[%s2211 + $0x118] sm:$0xff]
        %v2218 = vld [vmem:[%s2211 + $0x150] sm:$0xff]
        %v2219 = vld [vmem:[%s2211 + $0x188] sm:$0xff]
        %v2220 = vld [vmem:[%s2211 + $0x1c0] sm:$0xff]
        %v2221 = vld [vmem:[%s2211 + $0x1f8] sm:$0xff]
        %v2222 = vld [vmem:[%s2211 + $0x230] sm:$0xff]
        %v2223 = vld [vmem:[%s2211 + $0x268] sm:$0xff]
        %v2224 = vld [vmem:[%s2211 + $0x2a0] sm:$0xff]
        %v2225 = vld [vmem:[%s2211 + $0x2d8] sm:$0xff]
        %v2226 = vld [vmem:[%s2211 + $0x310] sm:$0xff]
        %v2227 = vld [vmem:[%s2211 + $0x348] sm:$0xff]
        %v2228 = vld [vmem:[%s2211 + $0x380] sm:$0xff]
        %v2229 = vld [vmem:[%s2211 + $0x3b8] sm:$0xff]
        %v2230 = vld [vmem:[%s2211 + $0x3f0] sm:$0xff]
        %v2231 = vld [vmem:[%s2211 + $0x428] sm:$0xff]
        %v2232 = vld [vmem:[%s2211 + $0x460] sm:$0xff]
        %v2233 = vld [vmem:[%s2211 + $0x498] sm:$0xff]
        %v2234 = vld [vmem:[%s2211 + $0x4d0] sm:$0xff]
        %v2235 = vld [vmem:[%s2211 + $0x508] sm:$0xff]
        %v2236 = vld [vmem:[%s2211 + $0x540] sm:$0xff]
        %v2237 = vld [vmem:[%s2211 + $0x578] sm:$0xff]
        %v2238 = vld [vmem:[%s2211 + $0x5b0] sm:$0xff]
        %v2239 = vld [vmem:[%s2211 + $0x5e8] sm:$0xff]
        %v2240 = vld [vmem:[%s2211 + $0x620] sm:$0xff]
        %v2241 = vld [vmem:[%s2211 + $0x658] sm:$0xff]
        %v2242 = vld [vmem:[%s2211 + $0x690] sm:$0xff]
        %v2243 = vld [vmem:[%s2211 + $0x6c8] sm:$0xff]
        %v2244 = vld [vmem:[%s2211 + $0x700] sm:$0xff]
        %v2245 = vld [vmem:[%s2211 + $0x738] sm:$0xff]
        %v2246 = vld [vmem:[%s2211 + $0x770] sm:$0xff]
        %v2247 = vld [vmem:[%s2211 + $0x7a8] sm:$0xff]
        %v2248 = vld [vmem:[%s2211 + $0x7e0] sm:$0xff]
        %v2249 = vld [vmem:[%s2211 + $0x818] sm:$0xff]
        %v2250 = vld [vmem:[%s2211 + $0x850] sm:$0xff]
        %v2251 = vld [vmem:[%s2211 + $0x888] sm:$0xff]
        %v2252 = vld [vmem:[%s2211 + $0x8c0] sm:$0xff]
        %v2253 = vld [vmem:[%s2211 + $0x8f8] sm:$0xff]
        %v2254 = vld [vmem:[%s2211 + $0x930] sm:$0xff]
        %v2255 = vld [vmem:[%s2211 + $0x968] sm:$0xff]
        %v2256 = vld [vmem:[%s2211 + $0x9a0] sm:$0xff]
        %v2257 = vld [vmem:[%s2211 + $0x9d8] sm:$0xff]
        %v2258 = vld [vmem:[%s2211 + $0xa10] sm:$0xff]
        %v2259 = vld [vmem:[%s2211 + $0xa48] sm:$0xff]
        %v2260 = vld [vmem:[%s2211 + $0xa80] sm:$0xff]
        %v2261 = vld [vmem:[%s2211 + $0xab8] sm:$0xff]
        %v2262 = vld [vmem:[%s2211 + $0xaf0] sm:$0xff]
        %v2263 = vld [vmem:[%s2211 + $0xb28] sm:$0xff]
        %v2264 = vld [vmem:[%s2211 + $0xb60] sm:$0xff]
        %v2265 = vld [vmem:[%s2211 + $0xb98] sm:$0xff]
        %v2266 = vld [vmem:[%s2211 + $0xbd0] sm:$0xff]
        %v2267 = vld [vmem:[%s2211 + $0xc08] sm:$0xff]
        %v2268 = vld [vmem:[%s2211 + $0xc40] sm:$0x11]
        %v2326 = vunpack.c.l.b16 %v2212
        %v2327 = vunpack.c.h.b16 %v2212
        %v2328 = vunpack.c.l.b16 %v2213
        %v2329 = vunpack.c.h.b16 %v2213
        %v2330 = vunpack.c.l.b16 %v2214
        %v2331 = vunpack.c.h.b16 %v2214
        %v2332 = vunpack.c.l.b16 %v2215
        %v2333 = vunpack.c.h.b16 %v2215
        %v2334 = vunpack.c.l.b16 %v2216
        %v2335 = vunpack.c.h.b16 %v2216
        %v2336 = vunpack.c.l.b16 %v2217
        %v2337 = vunpack.c.h.b16 %v2217
        %v2338 = vunpack.c.l.b16 %v2218
        %v2339 = vunpack.c.h.b16 %v2218
        %v2340 = vunpack.c.l.b16 %v2219
        %v2341 = vunpack.c.h.b16 %v2219
        %v2342 = vunpack.c.l.b16 %v2220
        %v2343 = vunpack.c.h.b16 %v2220
        %v2344 = vunpack.c.l.b16 %v2221
        %v2345 = vunpack.c.h.b16 %v2221
        %v2346 = vunpack.c.l.b16 %v2222
        %v2347 = vunpack.c.h.b16 %v2222
        %v2348 = vunpack.c.l.b16 %v2223
        %v2349 = vunpack.c.h.b16 %v2223
        %v2350 = vunpack.c.l.b16 %v2224
        %v2351 = vunpack.c.h.b16 %v2224
        %v2352 = vunpack.c.l.b16 %v2225
        %v2353 = vunpack.c.h.b16 %v2225
        %v2354 = vunpack.c.l.b16 %v2226
        %v2355 = vunpack.c.h.b16 %v2226
        %v2356 = vunpack.c.l.b16 %v2227
        %v2357 = vunpack.c.h.b16 %v2227
        %v2358 = vunpack.c.l.b16 %v2228
        %v2359 = vunpack.c.h.b16 %v2228
        %v2360 = vunpack.c.l.b16 %v2229
        %v2361 = vunpack.c.h.b16 %v2229
        %v2362 = vunpack.c.l.b16 %v2230
        %v2363 = vunpack.c.h.b16 %v2230
        %v2364 = vunpack.c.l.b16 %v2231
        %v2365 = vunpack.c.h.b16 %v2231
        %v2366 = vunpack.c.l.b16 %v2232
        %v2367 = vunpack.c.h.b16 %v2232
        %v2368 = vunpack.c.l.b16 %v2233
        %v2369 = vunpack.c.h.b16 %v2233
        %v2370 = vunpack.c.l.b16 %v2234
        %v2371 = vunpack.c.h.b16 %v2234
        %v2372 = vunpack.c.l.b16 %v2235
        %v2373 = vunpack.c.h.b16 %v2235
        %v2374 = vunpack.c.l.b16 %v2236
        %v2375 = vunpack.c.h.b16 %v2236
        %v2376 = vunpack.c.l.b16 %v2237
        %v2377 = vunpack.c.h.b16 %v2237
        %v2378 = vunpack.c.l.b16 %v2238
        %v2379 = vunpack.c.h.b16 %v2238
        %v2380 = vunpack.c.l.b16 %v2239
        %v2381 = vunpack.c.h.b16 %v2239
        %v2382 = vunpack.c.l.b16 %v2240
        %v2383 = vunpack.c.h.b16 %v2240
        %v2384 = vunpack.c.l.b16 %v2241
        %v2385 = vunpack.c.h.b16 %v2241
        %v2386 = vunpack.c.l.b16 %v2242
        %v2387 = vunpack.c.h.b16 %v2242
        %v2388 = vunpack.c.l.b16 %v2243
        %v2389 = vunpack.c.h.b16 %v2243
        %v2390 = vunpack.c.l.b16 %v2244
        %v2391 = vunpack.c.h.b16 %v2244
        %v2392 = vunpack.c.l.b16 %v2245
        %v2393 = vunpack.c.h.b16 %v2245
        %v2394 = vunpack.c.l.b16 %v2246
        %v2395 = vunpack.c.h.b16 %v2246
        %v2396 = vunpack.c.l.b16 %v2247
        %v2397 = vunpack.c.h.b16 %v2247
        %v2398 = vunpack.c.l.b16 %v2248
        %v2399 = vunpack.c.h.b16 %v2248
        %v2400 = vunpack.c.l.b16 %v2249
        %v2401 = vunpack.c.h.b16 %v2249
        %v2402 = vunpack.c.l.b16 %v2250
        %v2403 = vunpack.c.h.b16 %v2250
        %v2404 = vunpack.c.l.b16 %v2251
        %v2405 = vunpack.c.h.b16 %v2251
        %v2406 = vunpack.c.l.b16 %v2252
        %v2407 = vunpack.c.h.b16 %v2252
        %v2408 = vunpack.c.l.b16 %v2253
        %v2409 = vunpack.c.h.b16 %v2253
        %v2410 = vunpack.c.l.b16 %v2254
        %v2411 = vunpack.c.h.b16 %v2254
        %v2412 = vunpack.c.l.b16 %v2255
        %v2413 = vunpack.c.h.b16 %v2255
        %v2414 = vunpack.c.l.b16 %v2256
        %v2415 = vunpack.c.h.b16 %v2256
        %v2416 = vunpack.c.l.b16 %v2257
        %v2417 = vunpack.c.h.b16 %v2257
        %v2418 = vunpack.c.l.b16 %v2258
        %v2419 = vunpack.c.h.b16 %v2258
        %v2420 = vunpack.c.l.b16 %v2259
        %v2421 = vunpack.c.h.b16 %v2259
        %v2422 = vunpack.c.l.b16 %v2260
        %v2423 = vunpack.c.h.b16 %v2260
        %v2424 = vunpack.c.l.b16 %v2261
        %v2425 = vunpack.c.h.b16 %v2261
        %v2426 = vunpack.c.l.b16 %v2262
        %v2427 = vunpack.c.h.b16 %v2262
        %v2428 = vunpack.c.l.b16 %v2263
        %v2429 = vunpack.c.h.b16 %v2263
        %v2430 = vunpack.c.l.b16 %v2264
        %v2431 = vunpack.c.h.b16 %v2264
        %v2432 = vunpack.c.l.b16 %v2265
        %v2433 = vunpack.c.h.b16 %v2265
        %v2434 = vunpack.c.l.b16 %v2266
        %v2435 = vunpack.c.h.b16 %v2266
        %v2436 = vunpack.c.l.b16 %v2267
        %v2437 = vunpack.c.h.b16 %v2267
        %v2438 = vunpack.c.l.b16 %v2268
        %v2439 = vunpack.c.h.b16 %v2268
        %v2440 = vpack.c.b16 %v2328, %v2326
        %v2441 = vpack.c.b16 %v2329, %v2327
        %v2442 = vpack.c.b16 %v2332, %v2330
        %v2443 = vpack.c.b16 %v2333, %v2331
        %v2444 = vpack.c.b16 %v2336, %v2334
        %v2445 = vpack.c.b16 %v2337, %v2335
        %v2446 = vpack.c.b16 %v2340, %v2338
        %v2447 = vpack.c.b16 %v2341, %v2339
        %v2448 = vpack.c.b16 %v2344, %v2342
        %v2449 = vpack.c.b16 %v2345, %v2343
        %v2450 = vpack.c.b16 %v2348, %v2346
        %v2451 = vpack.c.b16 %v2349, %v2347
        %v2452 = vpack.c.b16 %v2352, %v2350
        %v2453 = vpack.c.b16 %v2353, %v2351
        %v2454 = vpack.c.b16 %v2356, %v2354
        %v2455 = vpack.c.b16 %v2357, %v2355
        %v2456 = vpack.c.b16 %v2360, %v2358
        %v2457 = vpack.c.b16 %v2361, %v2359
        %v2458 = vpack.c.b16 %v2364, %v2362
        %v2459 = vpack.c.b16 %v2365, %v2363
        %v2460 = vpack.c.b16 %v2368, %v2366
        %v2461 = vpack.c.b16 %v2369, %v2367
        %v2462 = vpack.c.b16 %v2372, %v2370
        %v2463 = vpack.c.b16 %v2373, %v2371
        %v2464 = vpack.c.b16 %v2376, %v2374
        %v2465 = vpack.c.b16 %v2377, %v2375
        %v2466 = vpack.c.b16 %v2380, %v2378
        %v2467 = vpack.c.b16 %v2381, %v2379
        %v2468 = vpack.c.b16 %v2384, %v2382
        %v2469 = vpack.c.b16 %v2385, %v2383
        %v2470 = vpack.c.b16 %v2388, %v2386
        %v2471 = vpack.c.b16 %v2389, %v2387
        %v2472 = vpack.c.b16 %v2392, %v2390
        %v2473 = vpack.c.b16 %v2393, %v2391
        %v2474 = vpack.c.b16 %v2396, %v2394
        %v2475 = vpack.c.b16 %v2397, %v2395
        %v2476 = vpack.c.b16 %v2400, %v2398
        %v2477 = vpack.c.b16 %v2401, %v2399
        %v2478 = vpack.c.b16 %v2404, %v2402
        %v2479 = vpack.c.b16 %v2405, %v2403
        %v2480 = vpack.c.b16 %v2408, %v2406
        %v2481 = vpack.c.b16 %v2409, %v2407
        %v2482 = vpack.c.b16 %v2412, %v2410
        %v2483 = vpack.c.b16 %v2413, %v2411
        %v2484 = vpack.c.b16 %v2416, %v2414
        %v2485 = vpack.c.b16 %v2417, %v2415
        %v2486 = vpack.c.b16 %v2420, %v2418
        %v2487 = vpack.c.b16 %v2421, %v2419
        %v2488 = vpack.c.b16 %v2424, %v2422
        %v2489 = vpack.c.b16 %v2425, %v2423
        %v2490 = vpack.c.b16 %v2428, %v2426
        %v2491 = vpack.c.b16 %v2429, %v2427
        %v2492 = vpack.c.b16 %v2432, %v2430
        %v2493 = vpack.c.b16 %v2433, %v2431
        %v2494 = vpack.c.b16 %v2436, %v2434
        %v2495 = vpack.c.b16 %v2437, %v2435
        %v2496 = vpack.c.b16 %v2438, %v2438
        %v2497 = vpack.c.b16 %v2439, %v2439
        %v2555 = vand.u32 %v2496, %v578
        %v2558 = vand.u32 %v2497, %v578
        %2560 = vmatprep.subr.bf16.mxu0 %v2441
        %2561 = vmatpush1.bf16.msra.mxu0 %v2440
        %2562 = vmatprep.subr.bf16.mxu0 %v2443
        %2563 = vmatpush1.bf16.msra.mxu0 %v2442
        %2564 = vmatprep.subr.bf16.mxu0 %v2445
        %2565 = vmatpush1.bf16.msra.mxu0 %v2444
        %2566 = vmatprep.subr.bf16.mxu0 %v2447
        %2567 = vmatpush1.bf16.msra.mxu0 %v2446
        %2568 = vmatprep.subr.bf16.mxu0 %v2449
        %2569 = vmatpush1.bf16.msra.mxu0 %v2448
        %2570 = vmatprep.subr.bf16.mxu0 %v2451
        %2571 = vmatpush1.bf16.msra.mxu0 %v2450
        %2572 = vmatprep.subr.bf16.mxu0 %v2453
        %2573 = vmatpush1.bf16.msra.mxu0 %v2452
        %2574 = vmatprep.subr.bf16.mxu0 %v2455
        %2575 = vmatpush1.bf16.msra.mxu0 %v2454
        %2576 = vmatprep.subr.bf16.mxu0 %v2457
        %2577 = vmatpush1.bf16.msra.mxu0 %v2456
        %2578 = vmatprep.subr.bf16.mxu0 %v2459
        %2579 = vmatpush1.bf16.msra.mxu0 %v2458
        %2580 = vmatprep.subr.bf16.mxu0 %v2461
        %2581 = vmatpush1.bf16.msra.mxu0 %v2460
        %2582 = vmatprep.subr.bf16.mxu0 %v2463
        %2583 = vmatpush1.bf16.msra.mxu0 %v2462
        %2584 = vmatprep.subr.bf16.mxu0 %v2465
        %2585 = vmatpush1.bf16.msra.mxu0 %v2464
        %2586 = vmatprep.subr.bf16.mxu0 %v2467
        %2587 = vmatpush1.bf16.msra.mxu0 %v2466
        %2588 = vmatprep.subr.bf16.mxu0 %v2469
        %2589 = vmatpush1.bf16.msra.mxu0 %v2468
        %2590 = vmatprep.subr.bf16.mxu0 %v2471
        %2591 = vmatpush1.bf16.msra.mxu0 %v2470
        %2592 = vmatprep.mubr.bf16.mxu0 %v281
        %2593 = vmatmul.mubr.bf16.gmra.mrb[0].mxu0 %v280
        %v2594 = vpop.f32.mrb[0].mxu0
        %v2595 = vadd.f32 0.0, %v2594
        %v2596 = vpop.f32.mrb[0].mxu0
        %v2597 = vadd.f32 0.0, %v2596
        %v2598 = vpop.f32.mrb[0].mxu0
        %v2599 = vadd.f32 0.0, %v2598
        %v2600 = vpop.f32.mrb[0].mxu0
        %v2601 = vadd.f32 0.0, %v2600
        %2602 = vdwg.mxu0
        %2603 = vmatprep.subr.bf16.mxu0 %v2473
        %2604 = vmatpush1.bf16.msra.mxu0 %v2472
        %2605 = vmatprep.subr.bf16.mxu0 %v2475
        %2606 = vmatpush1.bf16.msra.mxu0 %v2474
        %2607 = vmatprep.subr.bf16.mxu0 %v2477
        %2608 = vmatpush1.bf16.msra.mxu0 %v2476
        %2609 = vmatprep.subr.bf16.mxu0 %v2479
        %2610 = vmatpush1.bf16.msra.mxu0 %v2478
        %2611 = vmatprep.subr.bf16.mxu0 %v2481
        %2612 = vmatpush1.bf16.msra.mxu0 %v2480
        %2613 = vmatprep.subr.bf16.mxu0 %v2483
        %2614 = vmatpush1.bf16.msra.mxu0 %v2482
        %2615 = vmatprep.subr.bf16.mxu0 %v2485
        %2616 = vmatpush1.bf16.msra.mxu0 %v2484
        %2617 = vmatprep.subr.bf16.mxu0 %v2487
        %2618 = vmatpush1.bf16.msra.mxu0 %v2486
        %2619 = vmatprep.subr.bf16.mxu0 %v2489
        %2620 = vmatpush1.bf16.msra.mxu0 %v2488
        %2621 = vmatprep.subr.bf16.mxu0 %v2491
        %2622 = vmatpush1.bf16.msra.mxu0 %v2490
        %2623 = vmatprep.subr.bf16.mxu0 %v2493
        %2624 = vmatpush1.bf16.msra.mxu0 %v2492
        %2625 = vmatprep.subr.bf16.mxu0 %v2495
        %2626 = vmatpush1.bf16.msra.mxu0 %v2494
        %2627 = vmatprep.subr.bf16.mxu0 %v2558
        %2628 = vmatpush1.bf16.msra.mxu0 %v2555
        %2629 = vmatprep.subr.bf16.mxu0 0
        %2630 = vmatpush1.bf16.msra.mxu0 0
        %2631 = vmatprep.subr.bf16.mxu0 0
        %2632 = vmatpush1.bf16.msra.mxu0 0
        %2633 = vmatprep.subr.bf16.mxu0 0
        %2634 = vmatpush1.bf16.msra.mxu0 0
        %2635 = vmatprep.mubr.bf16.mxu0 %v574
        %2636 = vmatmul.mubr.bf16.gmra.mrb[0].mxu0 %v282
        %v2637 = vpop.f32.mrb[0].mxu0
        %v2638 = vadd.f32 %v2595, %v2637
        %v2639 = vpop.f32.mrb[0].mxu0
        %v2640 = vadd.f32 %v2597, %v2639
        %v2641 = vpop.f32.mrb[0].mxu0
        %v2642 = vadd.f32 %v2599, %v2641
        %v2643 = vpop.f32.mrb[0].mxu0
        %v2644 = vadd.f32 %v2601, %v2643
        %2645 = vdwg.mxu0
        %v2646 = vpack.c.bf16 %v2642, %v2638
        %v2647 = vpack.c.bf16 %v2644, %v2640
        %v2648 = vxor.u32 %v2646, 2147516416
        %v2649 = vxor.u32 %v2647, 2147516416
        %v2651 = vmul.bf16 %v2648, 1069105081
        %v2652 = vpow.bf16.pop %v2651
        %v2654 = vmul.bf16 %v2649, 1069105081
        %v2655 = vpow.bf16.pop %v2654
        %v2656 = vadd.bf16 %v2652, 1065369472
        %v2657 = vadd.bf16 %v2655, 1065369472
        %v2658 = vrcp.bf16.pop %v2656
        %v2659 = vmul.bf16 1065369472, %v2658
        %v2660 = vrcp.bf16.pop %v2657
        %v2661 = vmul.bf16 1065369472, %v2660
        %v2662 = vmul.bf16 %v2646, %v2659
        %v2663 = vmul.bf16 %v2647, %v2661
        %v2664 = vunpack.c.l.bf16 %v2662
        %v2665 = vunpack.c.l.bf16 %v2663
        %v2666 = vunpack.c.h.bf16 %v2662
        %v2667 = vunpack.c.h.bf16 %v2663
        %s2668 = scalar_lea.vmem [#allocation2], 8
        %v2669 = vld [vmem:[%s2668] sm:$0x3]
        %v2670 = vadd.f32 %v2664, %v2666
        %v2671 = vrot.slane %v2670, 4
        %v2672 = vadd.f32 %v2670, %v2671
        %v2673 = vrot.slane %v2672, 2
        %v2674 = vadd.f32 %v2672, %v2673
        %v2675 = vrot.slane %v2674, 1
        %v2676 = vadd.f32 %v2674, %v2675
        %v2677 = vadd.f32 %v2665, %v2667
        %v2678 = vrot.slane %v2677, 4
        %v2679 = vadd.f32 %v2677, %v2678
        %v2680 = vrot.slane %v2679, 2
        %v2681 = vadd.f32 %v2679, %v2680
        %v2682 = vrot.slane %v2681, 1
        %v2683 = vadd.f32 %v2681, %v2682
        %v2686 = vcombine.low %v2676, %v2683
        %v2688 = vunpack.c.l.s4 1966171168
        %v2689 = vunpack.c.0.s8 %v2688
        %v2690 = vlaneseq
        %v2691 = vshrl.u32 %v2690, 7
        %v2692 = vsub.s32 %v2689, %v2691
        %v2693 = vrot.slane %v2686, %v2692
        %v2695 = vunpack.c.l.s4 1966171168
        %v2696 = vunpack.c.0.s8 %v2695
        %v2697 = vlaneseq
        %v2698 = vshrl.u32 %v2697, 7
        %v2699 = vsub.s32 %v2696, %v2698
        %v2700 = vrot.slane %v2693, %v2699
        %v2702 = vadd.f32 %v2669, %v2700
        %2703 = vst.msk [vmem:[%s2668] sm:$0x3] %vm730, %v2702
        %s2704 = scalar_lea.vmem [#allocation6], 40
        %v2705 = vld [vmem:[%s2704] sm:$0xff]
        %v2706 = vld [vmem:[%s2704 + $0x38] sm:$0xff]
        %v2707 = vld [vmem:[%s2704 + $0x70] sm:$0xff]
        %v2708 = vld [vmem:[%s2704 + $0xa8] sm:$0xff]
        %v2709 = vld [vmem:[%s2704 + $0xe0] sm:$0xff]
        %v2710 = vld [vmem:[%s2704 + $0x118] sm:$0xff]
        %v2711 = vld [vmem:[%s2704 + $0x150] sm:$0xff]
        %v2712 = vld [vmem:[%s2704 + $0x188] sm:$0xff]
        %v2713 = vld [vmem:[%s2704 + $0x1c0] sm:$0xff]
        %v2714 = vld [vmem:[%s2704 + $0x1f8] sm:$0xff]
        %v2715 = vld [vmem:[%s2704 + $0x230] sm:$0xff]
        %v2716 = vld [vmem:[%s2704 + $0x268] sm:$0xff]
        %v2717 = vld [vmem:[%s2704 + $0x2a0] sm:$0xff]
        %v2718 = vld [vmem:[%s2704 + $0x2d8] sm:$0xff]
        %v2719 = vld [vmem:[%s2704 + $0x310] sm:$0xff]
        %v2720 = vld [vmem:[%s2704 + $0x348] sm:$0xff]
        %v2721 = vld [vmem:[%s2704 + $0x380] sm:$0xff]
        %v2722 = vld [vmem:[%s2704 + $0x3b8] sm:$0xff]
        %v2723 = vld [vmem:[%s2704 + $0x3f0] sm:$0xff]
        %v2724 = vld [vmem:[%s2704 + $0x428] sm:$0xff]
        %v2725 = vld [vmem:[%s2704 + $0x460] sm:$0xff]
        %v2726 = vld [vmem:[%s2704 + $0x498] sm:$0xff]
        %v2727 = vld [vmem:[%s2704 + $0x4d0] sm:$0xff]
        %v2728 = vld [vmem:[%s2704 + $0x508] sm:$0xff]
        %v2729 = vld [vmem:[%s2704 + $0x540] sm:$0xff]
        %v2730 = vld [vmem:[%s2704 + $0x578] sm:$0xff]
        %v2731 = vld [vmem:[%s2704 + $0x5b0] sm:$0xff]
        %v2732 = vld [vmem:[%s2704 + $0x5e8] sm:$0xff]
        %v2733 = vld [vmem:[%s2704 + $0x620] sm:$0xff]
        %v2734 = vld [vmem:[%s2704 + $0x658] sm:$0xff]
        %v2735 = vld [vmem:[%s2704 + $0x690] sm:$0xff]
        %v2736 = vld [vmem:[%s2704 + $0x6c8] sm:$0xff]
        %v2737 = vld [vmem:[%s2704 + $0x700] sm:$0xff]
        %v2738 = vld [vmem:[%s2704 + $0x738] sm:$0xff]
        %v2739 = vld [vmem:[%s2704 + $0x770] sm:$0xff]
        %v2740 = vld [vmem:[%s2704 + $0x7a8] sm:$0xff]
        %v2741 = vld [vmem:[%s2704 + $0x7e0] sm:$0xff]
        %v2742 = vld [vmem:[%s2704 + $0x818] sm:$0xff]
        %v2743 = vld [vmem:[%s2704 + $0x850] sm:$0xff]
        %v2744 = vld [vmem:[%s2704 + $0x888] sm:$0xff]
        %v2745 = vld [vmem:[%s2704 + $0x8c0] sm:$0xff]
        %v2746 = vld [vmem:[%s2704 + $0x8f8] sm:$0xff]
        %v2747 = vld [vmem:[%s2704 + $0x930] sm:$0xff]
        %v2748 = vld [vmem:[%s2704 + $0x968] sm:$0xff]
        %v2749 = vld [vmem:[%s2704 + $0x9a0] sm:$0xff]
        %v2750 = vld [vmem:[%s2704 + $0x9d8] sm:$0xff]
        %v2751 = vld [vmem:[%s2704 + $0xa10] sm:$0xff]
        %v2752 = vld [vmem:[%s2704 + $0xa48] sm:$0xff]
        %v2753 = vld [vmem:[%s2704 + $0xa80] sm:$0xff]
        %v2754 = vld [vmem:[%s2704 + $0xab8] sm:$0xff]
        %v2755 = vld [vmem:[%s2704 + $0xaf0] sm:$0xff]
        %v2756 = vld [vmem:[%s2704 + $0xb28] sm:$0xff]
        %v2757 = vld [vmem:[%s2704 + $0xb60] sm:$0xff]
        %v2758 = vld [vmem:[%s2704 + $0xb98] sm:$0xff]
        %v2759 = vld [vmem:[%s2704 + $0xbd0] sm:$0xff]
        %v2760 = vld [vmem:[%s2704 + $0xc08] sm:$0xff]
        %v2761 = vld [vmem:[%s2704 + $0xc40] sm:$0x11]
        %v2819 = vunpack.c.l.b16 %v2705
        %v2820 = vunpack.c.h.b16 %v2705
        %v2821 = vunpack.c.l.b16 %v2706
        %v2822 = vunpack.c.h.b16 %v2706
        %v2823 = vunpack.c.l.b16 %v2707
        %v2824 = vunpack.c.h.b16 %v2707
        %v2825 = vunpack.c.l.b16 %v2708
        %v2826 = vunpack.c.h.b16 %v2708
        %v2827 = vunpack.c.l.b16 %v2709
        %v2828 = vunpack.c.h.b16 %v2709
        %v2829 = vunpack.c.l.b16 %v2710
        %v2830 = vunpack.c.h.b16 %v2710
        %v2831 = vunpack.c.l.b16 %v2711
        %v2832 = vunpack.c.h.b16 %v2711
        %v2833 = vunpack.c.l.b16 %v2712
        %v2834 = vunpack.c.h.b16 %v2712
        %v2835 = vunpack.c.l.b16 %v2713
        %v2836 = vunpack.c.h.b16 %v2713
        %v2837 = vunpack.c.l.b16 %v2714
        %v2838 = vunpack.c.h.b16 %v2714
        %v2839 = vunpack.c.l.b16 %v2715
        %v2840 = vunpack.c.h.b16 %v2715
        %v2841 = vunpack.c.l.b16 %v2716
        %v2842 = vunpack.c.h.b16 %v2716
        %v2843 = vunpack.c.l.b16 %v2717
        %v2844 = vunpack.c.h.b16 %v2717
        %v2845 = vunpack.c.l.b16 %v2718
        %v2846 = vunpack.c.h.b16 %v2718
        %v2847 = vunpack.c.l.b16 %v2719
        %v2848 = vunpack.c.h.b16 %v2719
        %v2849 = vunpack.c.l.b16 %v2720
        %v2850 = vunpack.c.h.b16 %v2720
        %v2851 = vunpack.c.l.b16 %v2721
        %v2852 = vunpack.c.h.b16 %v2721
        %v2853 = vunpack.c.l.b16 %v2722
        %v2854 = vunpack.c.h.b16 %v2722
        %v2855 = vunpack.c.l.b16 %v2723
        %v2856 = vunpack.c.h.b16 %v2723
        %v2857 = vunpack.c.l.b16 %v2724
        %v2858 = vunpack.c.h.b16 %v2724
        %v2859 = vunpack.c.l.b16 %v2725
        %v2860 = vunpack.c.h.b16 %v2725
        %v2861 = vunpack.c.l.b16 %v2726
        %v2862 = vunpack.c.h.b16 %v2726
        %v2863 = vunpack.c.l.b16 %v2727
        %v2864 = vunpack.c.h.b16 %v2727
        %v2865 = vunpack.c.l.b16 %v2728
        %v2866 = vunpack.c.h.b16 %v2728
        %v2867 = vunpack.c.l.b16 %v2729
        %v2868 = vunpack.c.h.b16 %v2729
        %v2869 = vunpack.c.l.b16 %v2730
        %v2870 = vunpack.c.h.b16 %v2730
        %v2871 = vunpack.c.l.b16 %v2731
        %v2872 = vunpack.c.h.b16 %v2731
        %v2873 = vunpack.c.l.b16 %v2732
        %v2874 = vunpack.c.h.b16 %v2732
        %v2875 = vunpack.c.l.b16 %v2733
        %v2876 = vunpack.c.h.b16 %v2733
        %v2877 = vunpack.c.l.b16 %v2734
        %v2878 = vunpack.c.h.b16 %v2734
        %v2879 = vunpack.c.l.b16 %v2735
        %v2880 = vunpack.c.h.b16 %v2735
        %v2881 = vunpack.c.l.b16 %v2736
        %v2882 = vunpack.c.h.b16 %v2736
        %v2883 = vunpack.c.l.b16 %v2737
        %v2884 = vunpack.c.h.b16 %v2737
        %v2885 = vunpack.c.l.b16 %v2738
        %v2886 = vunpack.c.h.b16 %v2738
        %v2887 = vunpack.c.l.b16 %v2739
        %v2888 = vunpack.c.h.b16 %v2739
        %v2889 = vunpack.c.l.b16 %v2740
        %v2890 = vunpack.c.h.b16 %v2740
        %v2891 = vunpack.c.l.b16 %v2741
        %v2892 = vunpack.c.h.b16 %v2741
        %v2893 = vunpack.c.l.b16 %v2742
        %v2894 = vunpack.c.h.b16 %v2742
        %v2895 = vunpack.c.l.b16 %v2743
        %v2896 = vunpack.c.h.b16 %v2743
        %v2897 = vunpack.c.l.b16 %v2744
        %v2898 = vunpack.c.h.b16 %v2744
        %v2899 = vunpack.c.l.b16 %v2745
        %v2900 = vunpack.c.h.b16 %v2745
        %v2901 = vunpack.c.l.b16 %v2746
        %v2902 = vunpack.c.h.b16 %v2746
        %v2903 = vunpack.c.l.b16 %v2747
        %v2904 = vunpack.c.h.b16 %v2747
        %v2905 = vunpack.c.l.b16 %v2748
        %v2906 = vunpack.c.h.b16 %v2748
        %v2907 = vunpack.c.l.b16 %v2749
        %v2908 = vunpack.c.h.b16 %v2749
        %v2909 = vunpack.c.l.b16 %v2750
        %v2910 = vunpack.c.h.b16 %v2750
        %v2911 = vunpack.c.l.b16 %v2751
        %v2912 = vunpack.c.h.b16 %v2751
        %v2913 = vunpack.c.l.b16 %v2752
        %v2914 = vunpack.c.h.b16 %v2752
        %v2915 = vunpack.c.l.b16 %v2753
        %v2916 = vunpack.c.h.b16 %v2753
        %v2917 = vunpack.c.l.b16 %v2754
        %v2918 = vunpack.c.h.b16 %v2754
        %v2919 = vunpack.c.l.b16 %v2755
        %v2920 = vunpack.c.h.b16 %v2755
        %v2921 = vunpack.c.l.b16 %v2756
        %v2922 = vunpack.c.h.b16 %v2756
        %v2923 = vunpack.c.l.b16 %v2757
        %v2924 = vunpack.c.h.b16 %v2757
        %v2925 = vunpack.c.l.b16 %v2758
        %v2926 = vunpack.c.h.b16 %v2758
        %v2927 = vunpack.c.l.b16 %v2759
        %v2928 = vunpack.c.h.b16 %v2759
        %v2929 = vunpack.c.l.b16 %v2760
        %v2930 = vunpack.c.h.b16 %v2760
        %v2931 = vunpack.c.l.b16 %v2761
        %v2932 = vunpack.c.h.b16 %v2761
        %v2933 = vpack.c.b16 %v2821, %v2819
        %v2934 = vpack.c.b16 %v2822, %v2820
        %v2935 = vpack.c.b16 %v2825, %v2823
        %v2936 = vpack.c.b16 %v2826, %v2824
        %v2937 = vpack.c.b16 %v2829, %v2827
        %v2938 = vpack.c.b16 %v2830, %v2828
        %v2939 = vpack.c.b16 %v2833, %v2831
        %v2940 = vpack.c.b16 %v2834, %v2832
        %v2941 = vpack.c.b16 %v2837, %v2835
        %v2942 = vpack.c.b16 %v2838, %v2836
        %v2943 = vpack.c.b16 %v2841, %v2839
        %v2944 = vpack.c.b16 %v2842, %v2840
        %v2945 = vpack.c.b16 %v2845, %v2843
        %v2946 = vpack.c.b16 %v2846, %v2844
        %v2947 = vpack.c.b16 %v2849, %v2847
        %v2948 = vpack.c.b16 %v2850, %v2848
        %v2949 = vpack.c.b16 %v2853, %v2851
        %v2950 = vpack.c.b16 %v2854, %v2852
        %v2951 = vpack.c.b16 %v2857, %v2855
        %v2952 = vpack.c.b16 %v2858, %v2856
        %v2953 = vpack.c.b16 %v2861, %v2859
        %v2954 = vpack.c.b16 %v2862, %v2860
        %v2955 = vpack.c.b16 %v2865, %v2863
        %v2956 = vpack.c.b16 %v2866, %v2864
        %v2957 = vpack.c.b16 %v2869, %v2867
        %v2958 = vpack.c.b16 %v2870, %v2868
        %v2959 = vpack.c.b16 %v2873, %v2871
        %v2960 = vpack.c.b16 %v2874, %v2872
        %v2961 = vpack.c.b16 %v2877, %v2875
        %v2962 = vpack.c.b16 %v2878, %v2876
        %v2963 = vpack.c.b16 %v2881, %v2879
        %v2964 = vpack.c.b16 %v2882, %v2880
        %v2965 = vpack.c.b16 %v2885, %v2883
        %v2966 = vpack.c.b16 %v2886, %v2884
        %v2967 = vpack.c.b16 %v2889, %v2887
        %v2968 = vpack.c.b16 %v2890, %v2888
        %v2969 = vpack.c.b16 %v2893, %v2891
        %v2970 = vpack.c.b16 %v2894, %v2892
        %v2971 = vpack.c.b16 %v2897, %v2895
        %v2972 = vpack.c.b16 %v2898, %v2896
        %v2973 = vpack.c.b16 %v2901, %v2899
        %v2974 = vpack.c.b16 %v2902, %v2900
        %v2975 = vpack.c.b16 %v2905, %v2903
        %v2976 = vpack.c.b16 %v2906, %v2904
        %v2977 = vpack.c.b16 %v2909, %v2907
        %v2978 = vpack.c.b16 %v2910, %v2908
        %v2979 = vpack.c.b16 %v2913, %v2911
        %v2980 = vpack.c.b16 %v2914, %v2912
        %v2981 = vpack.c.b16 %v2917, %v2915
        %v2982 = vpack.c.b16 %v2918, %v2916
        %v2983 = vpack.c.b16 %v2921, %v2919
        %v2984 = vpack.c.b16 %v2922, %v2920
        %v2985 = vpack.c.b16 %v2925, %v2923
        %v2986 = vpack.c.b16 %v2926, %v2924
        %v2987 = vpack.c.b16 %v2929, %v2927
        %v2988 = vpack.c.b16 %v2930, %v2928
        %v2989 = vpack.c.b16 %v2931, %v2931
        %v2990 = vpack.c.b16 %v2932, %v2932
        %v3048 = vand.u32 %v2989, %v578
        %v3051 = vand.u32 %v2990, %v578
        %3053 = vmatprep.subr.bf16.mxu0 %v2934
        %3054 = vmatpush1.bf16.msra.mxu0 %v2933
        %3055 = vmatprep.subr.bf16.mxu0 %v2936
        %3056 = vmatpush1.bf16.msra.mxu0 %v2935
        %3057 = vmatprep.subr.bf16.mxu0 %v2938
        %3058 = vmatpush1.bf16.msra.mxu0 %v2937
        %3059 = vmatprep.subr.bf16.mxu0 %v2940
        %3060 = vmatpush1.bf16.msra.mxu0 %v2939
        %3061 = vmatprep.subr.bf16.mxu0 %v2942
        %3062 = vmatpush1.bf16.msra.mxu0 %v2941
        %3063 = vmatprep.subr.bf16.mxu0 %v2944
        %3064 = vmatpush1.bf16.msra.mxu0 %v2943
        %3065 = vmatprep.subr.bf16.mxu0 %v2946
        %3066 = vmatpush1.bf16.msra.mxu0 %v2945
        %3067 = vmatprep.subr.bf16.mxu0 %v2948
        %3068 = vmatpush1.bf16.msra.mxu0 %v2947
        %3069 = vmatprep.subr.bf16.mxu0 %v2950
        %3070 = vmatpush1.bf16.msra.mxu0 %v2949
        %3071 = vmatprep.subr.bf16.mxu0 %v2952
        %3072 = vmatpush1.bf16.msra.mxu0 %v2951
        %3073 = vmatprep.subr.bf16.mxu0 %v2954
        %3074 = vmatpush1.bf16.msra.mxu0 %v2953
        %3075 = vmatprep.subr.bf16.mxu0 %v2956
        %3076 = vmatpush1.bf16.msra.mxu0 %v2955
        %3077 = vmatprep.subr.bf16.mxu0 %v2958
        %3078 = vmatpush1.bf16.msra.mxu0 %v2957
        %3079 = vmatprep.subr.bf16.mxu0 %v2960
        %3080 = vmatpush1.bf16.msra.mxu0 %v2959
        %3081 = vmatprep.subr.bf16.mxu0 %v2962
        %3082 = vmatpush1.bf16.msra.mxu0 %v2961
        %3083 = vmatprep.subr.bf16.mxu0 %v2964
        %3084 = vmatpush1.bf16.msra.mxu0 %v2963
        %3085 = vmatprep.mubr.bf16.mxu0 %v281
        %3086 = vmatmul.mubr.bf16.gmra.mrb[0].mxu0 %v280
        %v3087 = vpop.f32.mrb[0].mxu0
        %v3088 = vadd.f32 0.0, %v3087
        %v3089 = vpop.f32.mrb[0].mxu0
        %v3090 = vadd.f32 0.0, %v3089
        %v3091 = vpop.f32.mrb[0].mxu0
        %v3092 = vadd.f32 0.0, %v3091
        %v3093 = vpop.f32.mrb[0].mxu0
        %v3094 = vadd.f32 0.0, %v3093
        %3095 = vdwg.mxu0
        %3096 = vmatprep.subr.bf16.mxu0 %v2966
        %3097 = vmatpush1.bf16.msra.mxu0 %v2965
        %3098 = vmatprep.subr.bf16.mxu0 %v2968
        %3099 = vmatpush1.bf16.msra.mxu0 %v2967
        %3100 = vmatprep.subr.bf16.mxu0 %v2970
        %3101 = vmatpush1.bf16.msra.mxu0 %v2969
        %3102 = vmatprep.subr.bf16.mxu0 %v2972
        %3103 = vmatpush1.bf16.msra.mxu0 %v2971
        %3104 = vmatprep.subr.bf16.mxu0 %v2974
        %3105 = vmatpush1.bf16.msra.mxu0 %v2973
        %3106 = vmatprep.subr.bf16.mxu0 %v2976
        %3107 = vmatpush1.bf16.msra.mxu0 %v2975
        %3108 = vmatprep.subr.bf16.mxu0 %v2978
        %3109 = vmatpush1.bf16.msra.mxu0 %v2977
        %3110 = vmatprep.subr.bf16.mxu0 %v2980
        %3111 = vmatpush1.bf16.msra.mxu0 %v2979
        %3112 = vmatprep.subr.bf16.mxu0 %v2982
        %3113 = vmatpush1.bf16.msra.mxu0 %v2981
        %3114 = vmatprep.subr.bf16.mxu0 %v2984
        %3115 = vmatpush1.bf16.msra.mxu0 %v2983
        %3116 = vmatprep.subr.bf16.mxu0 %v2986
        %3117 = vmatpush1.bf16.msra.mxu0 %v2985
        %3118 = vmatprep.subr.bf16.mxu0 %v2988
        %3119 = vmatpush1.bf16.msra.mxu0 %v2987
        %3120 = vmatprep.subr.bf16.mxu0 %v3051
        %3121 = vmatpush1.bf16.msra.mxu0 %v3048
        %3122 = vmatprep.subr.bf16.mxu0 0
        %3123 = vmatpush1.bf16.msra.mxu0 0
        %3124 = vmatprep.subr.bf16.mxu0 0
        %3125 = vmatpush1.bf16.msra.mxu0 0
        %3126 = vmatprep.subr.bf16.mxu0 0
        %3127 = vmatpush1.bf16.msra.mxu0 0
        %3128 = vmatprep.mubr.bf16.mxu0 %v574
        %3129 = vmatmul.mubr.bf16.gmra.mrb[0].mxu0 %v282
        %v3130 = vpop.f32.mrb[0].mxu0
        %v3131 = vadd.f32 %v3088, %v3130
        %v3132 = vpop.f32.mrb[0].mxu0
        %v3133 = vadd.f32 %v3090, %v3132
        %v3134 = vpop.f32.mrb[0].mxu0
        %v3135 = vadd.f32 %v3092, %v3134
        %v3136 = vpop.f32.mrb[0].mxu0
        %v3137 = vadd.f32 %v3094, %v3136
        %3138 = vdwg.mxu0
        %v3139 = vpack.c.bf16 %v3135, %v3131
        %v3140 = vpack.c.bf16 %v3137, %v3133
        %v3141 = vxor.u32 %v3139, 2147516416
        %v3142 = vxor.u32 %v3140, 2147516416
        %v3144 = vmul.bf16 %v3141, 1069105081
        %v3145 = vpow.bf16.pop %v3144
        %v3147 = vmul.bf16 %v3142, 1069105081
        %v3148 = vpow.bf16.pop %v3147
        %v3149 = vadd.bf16 %v3145, 1065369472
        %v3150 = vadd.bf16 %v3148, 1065369472
        %v3151 = vrcp.bf16.pop %v3149
        %v3152 = vmul.bf16 1065369472, %v3151
        %v3153 = vrcp.bf16.pop %v3150
        %v3154 = vmul.bf16 1065369472, %v3153
        %v3155 = vmul.bf16 %v3139, %v3152
        %v3156 = vmul.bf16 %v3140, %v3154
        %v3157 = vunpack.c.l.bf16 %v3155
        %v3158 = vunpack.c.l.bf16 %v3156
        %v3159 = vunpack.c.h.bf16 %v3155
        %v3160 = vunpack.c.h.bf16 %v3156
        %s3161 = scalar_lea.vmem [#allocation2], 10
        %v3162 = vld [vmem:[%s3161] sm:$0x3]
        %v3163 = vadd.f32 %v3157, %v3159
        %v3164 = vrot.slane %v3163, 4
        %v3165 = vadd.f32 %v3163, %v3164
        %v3166 = vrot.slane %v3165, 2
        %v3167 = vadd.f32 %v3165, %v3166
        %v3168 = vrot.slane %v3167, 1
        %v3169 = vadd.f32 %v3167, %v3168
        %v3170 = vadd.f32 %v3158, %v3160
        %v3171 = vrot.slane %v3170, 4
        %v3172 = vadd.f32 %v3170, %v3171
        %v3173 = vrot.slane %v3172, 2
        %v3174 = vadd.f32 %v3172, %v3173
        %v3175 = vrot.slane %v3174, 1
        %v3176 = vadd.f32 %v3174, %v3175
        %v3179 = vcombine.low %v3169, %v3176
        %v3181 = vunpack.c.l.s4 1966171168
        %v3182 = vunpack.c.0.s8 %v3181
        %v3183 = vlaneseq
        %v3184 = vshrl.u32 %v3183, 7
        %v3185 = vsub.s32 %v3182, %v3184
        %v3186 = vrot.slane %v3179, %v3185
        %v3188 = vunpack.c.l.s4 1966171168
        %v3189 = vunpack.c.0.s8 %v3188
        %v3190 = vlaneseq
        %v3191 = vshrl.u32 %v3190, 7
        %v3192 = vsub.s32 %v3189, %v3191
        %v3193 = vrot.slane %v3186, %v3192
        %v3195 = vadd.f32 %v3162, %v3193
        %3196 = vst.msk [vmem:[%s3161] sm:$0x3] %vm730, %v3195
        %s3197 = scalar_lea.vmem [#allocation6], 48
        %v3198 = vld [vmem:[%s3197] sm:$0xff]
        %v3199 = vld [vmem:[%s3197 + $0x38] sm:$0xff]
        %v3200 = vld [vmem:[%s3197 + $0x70] sm:$0xff]
        %v3201 = vld [vmem:[%s3197 + $0xa8] sm:$0xff]
        %v3202 = vld [vmem:[%s3197 + $0xe0] sm:$0xff]
        %v3203 = vld [vmem:[%s3197 + $0x118] sm:$0xff]
        %v3204 = vld [vmem:[%s3197 + $0x150] sm:$0xff]
        %v3205 = vld [vmem:[%s3197 + $0x188] sm:$0xff]
        %v3206 = vld [vmem:[%s3197 + $0x1c0] sm:$0xff]
        %v3207 = vld [vmem:[%s3197 + $0x1f8] sm:$0xff]
        %v3208 = vld [vmem:[%s3197 + $0x230] sm:$0xff]
        %v3209 = vld [vmem:[%s3197 + $0x268] sm:$0xff]
        %v3210 = vld [vmem:[%s3197 + $0x2a0] sm:$0xff]
        %v3211 = vld [vmem:[%s3197 + $0x2d8] sm:$0xff]
        %v3212 = vld [vmem:[%s3197 + $0x310] sm:$0xff]
        %v3213 = vld [vmem:[%s3197 + $0x348] sm:$0xff]
        %v3214 = vld [vmem:[%s3197 + $0x380] sm:$0xff]
        %v3215 = vld [vmem:[%s3197 + $0x3b8] sm:$0xff]
        %v3216 = vld [vmem:[%s3197 + $0x3f0] sm:$0xff]
        %v3217 = vld [vmem:[%s3197 + $0x428] sm:$0xff]
        %v3218 = vld [vmem:[%s3197 + $0x460] sm:$0xff]
        %v3219 = vld [vmem:[%s3197 + $0x498] sm:$0xff]
        %v3220 = vld [vmem:[%s3197 + $0x4d0] sm:$0xff]
        %v3221 = vld [vmem:[%s3197 + $0x508] sm:$0xff]
        %v3222 = vld [vmem:[%s3197 + $0x540] sm:$0xff]
        %v3223 = vld [vmem:[%s3197 + $0x578] sm:$0xff]
        %v3224 = vld [vmem:[%s3197 + $0x5b0] sm:$0xff]
        %v3225 = vld [vmem:[%s3197 + $0x5e8] sm:$0xff]
        %v3226 = vld [vmem:[%s3197 + $0x620] sm:$0xff]
        %v3227 = vld [vmem:[%s3197 + $0x658] sm:$0xff]
        %v3228 = vld [vmem:[%s3197 + $0x690] sm:$0xff]
        %v3229 = vld [vmem:[%s3197 + $0x6c8] sm:$0xff]
        %v3230 = vld [vmem:[%s3197 + $0x700] sm:$0xff]
        %v3231 = vld [vmem:[%s3197 + $0x738] sm:$0xff]
        %v3232 = vld [vmem:[%s3197 + $0x770] sm:$0xff]
        %v3233 = vld [vmem:[%s3197 + $0x7a8] sm:$0xff]
        %v3234 = vld [vmem:[%s3197 + $0x7e0] sm:$0xff]
        %v3235 = vld [vmem:[%s3197 + $0x818] sm:$0xff]
        %v3236 = vld [vmem:[%s3197 + $0x850] sm:$0xff]
        %v3237 = vld [vmem:[%s3197 + $0x888] sm:$0xff]
        %v3238 = vld [vmem:[%s3197 + $0x8c0] sm:$0xff]
        %v3239 = vld [vmem:[%s3197 + $0x8f8] sm:$0xff]
        %v3240 = vld [vmem:[%s3197 + $0x930] sm:$0xff]
        %v3241 = vld [vmem:[%s3197 + $0x968] sm:$0xff]
        %v3242 = vld [vmem:[%s3197 + $0x9a0] sm:$0xff]
        %v3243 = vld [vmem:[%s3197 + $0x9d8] sm:$0xff]
        %v3244 = vld [vmem:[%s3197 + $0xa10] sm:$0xff]
        %v3245 = vld [vmem:[%s3197 + $0xa48] sm:$0xff]
        %v3246 = vld [vmem:[%s3197 + $0xa80] sm:$0xff]
        %v3247 = vld [vmem:[%s3197 + $0xab8] sm:$0xff]
        %v3248 = vld [vmem:[%s3197 + $0xaf0] sm:$0xff]
        %v3249 = vld [vmem:[%s3197 + $0xb28] sm:$0xff]
        %v3250 = vld [vmem:[%s3197 + $0xb60] sm:$0xff]
        %v3251 = vld [vmem:[%s3197 + $0xb98] sm:$0xff]
        %v3252 = vld [vmem:[%s3197 + $0xbd0] sm:$0xff]
        %v3253 = vld [vmem:[%s3197 + $0xc08] sm:$0xff]
        %v3254 = vld [vmem:[%s3197 + $0xc40] sm:$0x11]
        %v3312 = vunpack.c.l.b16 %v3198
        %v3313 = vunpack.c.h.b16 %v3198
        %v3314 = vunpack.c.l.b16 %v3199
        %v3315 = vunpack.c.h.b16 %v3199
        %v3316 = vunpack.c.l.b16 %v3200
        %v3317 = vunpack.c.h.b16 %v3200
        %v3318 = vunpack.c.l.b16 %v3201
        %v3319 = vunpack.c.h.b16 %v3201
        %v3320 = vunpack.c.l.b16 %v3202
        %v3321 = vunpack.c.h.b16 %v3202
        %v3322 = vunpack.c.l.b16 %v3203
        %v3323 = vunpack.c.h.b16 %v3203
        %v3324 = vunpack.c.l.b16 %v3204
        %v3325 = vunpack.c.h.b16 %v3204
        %v3326 = vunpack.c.l.b16 %v3205
        %v3327 = vunpack.c.h.b16 %v3205
        %v3328 = vunpack.c.l.b16 %v3206
        %v3329 = vunpack.c.h.b16 %v3206
        %v3330 = vunpack.c.l.b16 %v3207
        %v3331 = vunpack.c.h.b16 %v3207
        %v3332 = vunpack.c.l.b16 %v3208
        %v3333 = vunpack.c.h.b16 %v3208
        %v3334 = vunpack.c.l.b16 %v3209
        %v3335 = vunpack.c.h.b16 %v3209
        %v3336 = vunpack.c.l.b16 %v3210
        %v3337 = vunpack.c.h.b16 %v3210
        %v3338 = vunpack.c.l.b16 %v3211
        %v3339 = vunpack.c.h.b16 %v3211
        %v3340 = vunpack.c.l.b16 %v3212
        %v3341 = vunpack.c.h.b16 %v3212
        %v3342 = vunpack.c.l.b16 %v3213
        %v3343 = vunpack.c.h.b16 %v3213
        %v3344 = vunpack.c.l.b16 %v3214
        %v3345 = vunpack.c.h.b16 %v3214
        %v3346 = vunpack.c.l.b16 %v3215
        %v3347 = vunpack.c.h.b16 %v3215
        %v3348 = vunpack.c.l.b16 %v3216
        %v3349 = vunpack.c.h.b16 %v3216
        %v3350 = vunpack.c.l.b16 %v3217
        %v3351 = vunpack.c.h.b16 %v3217
        %v3352 = vunpack.c.l.b16 %v3218
        %v3353 = vunpack.c.h.b16 %v3218
        %v3354 = vunpack.c.l.b16 %v3219
        %v3355 = vunpack.c.h.b16 %v3219
        %v3356 = vunpack.c.l.b16 %v3220
        %v3357 = vunpack.c.h.b16 %v3220
        %v3358 = vunpack.c.l.b16 %v3221
        %v3359 = vunpack.c.h.b16 %v3221
        %v3360 = vunpack.c.l.b16 %v3222
        %v3361 = vunpack.c.h.b16 %v3222
        %v3362 = vunpack.c.l.b16 %v3223
        %v3363 = vunpack.c.h.b16 %v3223
        %v3364 = vunpack.c.l.b16 %v3224
        %v3365 = vunpack.c.h.b16 %v3224
        %v3366 = vunpack.c.l.b16 %v3225
        %v3367 = vunpack.c.h.b16 %v3225
        %v3368 = vunpack.c.l.b16 %v3226
        %v3369 = vunpack.c.h.b16 %v3226
        %v3370 = vunpack.c.l.b16 %v3227
        %v3371 = vunpack.c.h.b16 %v3227
        %v3372 = vunpack.c.l.b16 %v3228
        %v3373 = vunpack.c.h.b16 %v3228
        %v3374 = vunpack.c.l.b16 %v3229
        %v3375 = vunpack.c.h.b16 %v3229
        %v3376 = vunpack.c.l.b16 %v3230
        %v3377 = vunpack.c.h.b16 %v3230
        %v3378 = vunpack.c.l.b16 %v3231
        %v3379 = vunpack.c.h.b16 %v3231
        %v3380 = vunpack.c.l.b16 %v3232
        %v3381 = vunpack.c.h.b16 %v3232
        %v3382 = vunpack.c.l.b16 %v3233
        %v3383 = vunpack.c.h.b16 %v3233
        %v3384 = vunpack.c.l.b16 %v3234
        %v3385 = vunpack.c.h.b16 %v3234
        %v3386 = vunpack.c.l.b16 %v3235
        %v3387 = vunpack.c.h.b16 %v3235
        %v3388 = vunpack.c.l.b16 %v3236
        %v3389 = vunpack.c.h.b16 %v3236
        %v3390 = vunpack.c.l.b16 %v3237
        %v3391 = vunpack.c.h.b16 %v3237
        %v3392 = vunpack.c.l.b16 %v3238
        %v3393 = vunpack.c.h.b16 %v3238
        %v3394 = vunpack.c.l.b16 %v3239
        %v3395 = vunpack.c.h.b16 %v3239
        %v3396 = vunpack.c.l.b16 %v3240
        %v3397 = vunpack.c.h.b16 %v3240
        %v3398 = vunpack.c.l.b16 %v3241
        %v3399 = vunpack.c.h.b16 %v3241
        %v3400 = vunpack.c.l.b16 %v3242
        %v3401 = vunpack.c.h.b16 %v3242
        %v3402 = vunpack.c.l.b16 %v3243
        %v3403 = vunpack.c.h.b16 %v3243
        %v3404 = vunpack.c.l.b16 %v3244
        %v3405 = vunpack.c.h.b16 %v3244
        %v3406 = vunpack.c.l.b16 %v3245
        %v3407 = vunpack.c.h.b16 %v3245
        %v3408 = vunpack.c.l.b16 %v3246
        %v3409 = vunpack.c.h.b16 %v3246
        %v3410 = vunpack.c.l.b16 %v3247
        %v3411 = vunpack.c.h.b16 %v3247
        %v3412 = vunpack.c.l.b16 %v3248
        %v3413 = vunpack.c.h.b16 %v3248
        %v3414 = vunpack.c.l.b16 %v3249
        %v3415 = vunpack.c.h.b16 %v3249
        %v3416 = vunpack.c.l.b16 %v3250
        %v3417 = vunpack.c.h.b16 %v3250
        %v3418 = vunpack.c.l.b16 %v3251
        %v3419 = vunpack.c.h.b16 %v3251
        %v3420 = vunpack.c.l.b16 %v3252
        %v3421 = vunpack.c.h.b16 %v3252
        %v3422 = vunpack.c.l.b16 %v3253
        %v3423 = vunpack.c.h.b16 %v3253
        %v3424 = vunpack.c.l.b16 %v3254
        %v3425 = vunpack.c.h.b16 %v3254
        %v3426 = vpack.c.b16 %v3314, %v3312
        %v3427 = vpack.c.b16 %v3315, %v3313
        %v3428 = vpack.c.b16 %v3318, %v3316
        %v3429 = vpack.c.b16 %v3319, %v3317
        %v3430 = vpack.c.b16 %v3322, %v3320
        %v3431 = vpack.c.b16 %v3323, %v3321
        %v3432 = vpack.c.b16 %v3326, %v3324
        %v3433 = vpack.c.b16 %v3327, %v3325
        %v3434 = vpack.c.b16 %v3330, %v3328
        %v3435 = vpack.c.b16 %v3331, %v3329
        %v3436 = vpack.c.b16 %v3334, %v3332
        %v3437 = vpack.c.b16 %v3335, %v3333
        %v3438 = vpack.c.b16 %v3338, %v3336
        %v3439 = vpack.c.b16 %v3339, %v3337
        %v3440 = vpack.c.b16 %v3342, %v3340
        %v3441 = vpack.c.b16 %v3343, %v3341
        %v3442 = vpack.c.b16 %v3346, %v3344
        %v3443 = vpack.c.b16 %v3347, %v3345
        %v3444 = vpack.c.b16 %v3350, %v3348
        %v3445 = vpack.c.b16 %v3351, %v3349
        %v3446 = vpack.c.b16 %v3354, %v3352
        %v3447 = vpack.c.b16 %v3355, %v3353
        %v3448 = vpack.c.b16 %v3358, %v3356
        %v3449 = vpack.c.b16 %v3359, %v3357
        %v3450 = vpack.c.b16 %v3362, %v3360
        %v3451 = vpack.c.b16 %v3363, %v3361
        %v3452 = vpack.c.b16 %v3366, %v3364
        %v3453 = vpack.c.b16 %v3367, %v3365
        %v3454 = vpack.c.b16 %v3370, %v3368
        %v3455 = vpack.c.b16 %v3371, %v3369
        %v3456 = vpack.c.b16 %v3374, %v3372
        %v3457 = vpack.c.b16 %v3375, %v3373
        %v3458 = vpack.c.b16 %v3378, %v3376
        %v3459 = vpack.c.b16 %v3379, %v3377
        %v3460 = vpack.c.b16 %v3382, %v3380
        %v3461 = vpack.c.b16 %v3383, %v3381
        %v3462 = vpack.c.b16 %v3386, %v3384
        %v3463 = vpack.c.b16 %v3387, %v3385
        %v3464 = vpack.c.b16 %v3390, %v3388
        %v3465 = vpack.c.b16 %v3391, %v3389
        %v3466 = vpack.c.b16 %v3394, %v3392
        %v3467 = vpack.c.b16 %v3395, %v3393
        %v3468 = vpack.c.b16 %v3398, %v3396
        %v3469 = vpack.c.b16 %v3399, %v3397
        %v3470 = vpack.c.b16 %v3402, %v3400
        %v3471 = vpack.c.b16 %v3403, %v3401
        %v3472 = vpack.c.b16 %v3406, %v3404
        %v3473 = vpack.c.b16 %v3407, %v3405
        %v3474 = vpack.c.b16 %v3410, %v3408
        %v3475 = vpack.c.b16 %v3411, %v3409
        %v3476 = vpack.c.b16 %v3414, %v3412
        %v3477 = vpack.c.b16 %v3415, %v3413
        %v3478 = vpack.c.b16 %v3418, %v3416
        %v3479 = vpack.c.b16 %v3419, %v3417
        %v3480 = vpack.c.b16 %v3422, %v3420
        %v3481 = vpack.c.b16 %v3423, %v3421
        %v3482 = vpack.c.b16 %v3424, %v3424
        %v3483 = vpack.c.b16 %v3425, %v3425
        %v3541 = vand.u32 %v3482, %v578
        %v3544 = vand.u32 %v3483, %v578
        %3546 = vmatprep.subr.bf16.mxu0 %v3427
        %3547 = vmatpush1.bf16.msra.mxu0 %v3426
        %3548 = vmatprep.subr.bf16.mxu0 %v3429
        %3549 = vmatpush1.bf16.msra.mxu0 %v3428
        %3550 = vmatprep.subr.bf16.mxu0 %v3431
        %3551 = vmatpush1.bf16.msra.mxu0 %v3430
        %3552 = vmatprep.subr.bf16.mxu0 %v3433
        %3553 = vmatpush1.bf16.msra.mxu0 %v3432
        %3554 = vmatprep.subr.bf16.mxu0 %v3435
        %3555 = vmatpush1.bf16.msra.mxu0 %v3434
        %3556 = vmatprep.subr.bf16.mxu0 %v3437
        %3557 = vmatpush1.bf16.msra.mxu0 %v3436
        %3558 = vmatprep.subr.bf16.mxu0 %v3439
        %3559 = vmatpush1.bf16.msra.mxu0 %v3438
        %3560 = vmatprep.subr.bf16.mxu0 %v3441
        %3561 = vmatpush1.bf16.msra.mxu0 %v3440
        %3562 = vmatprep.subr.bf16.mxu0 %v3443
        %3563 = vmatpush1.bf16.msra.mxu0 %v3442
        %3564 = vmatprep.subr.bf16.mxu0 %v3445
        %3565 = vmatpush1.bf16.msra.mxu0 %v3444
        %3566 = vmatprep.subr.bf16.mxu0 %v3447
        %3567 = vmatpush1.bf16.msra.mxu0 %v3446
        %3568 = vmatprep.subr.bf16.mxu0 %v3449
        %3569 = vmatpush1.bf16.msra.mxu0 %v3448
        %3570 = vmatprep.subr.bf16.mxu0 %v3451
        %3571 = vmatpush1.bf16.msra.mxu0 %v3450
        %3572 = vmatprep.subr.bf16.mxu0 %v3453
        %3573 = vmatpush1.bf16.msra.mxu0 %v3452
        %3574 = vmatprep.subr.bf16.mxu0 %v3455
        %3575 = vmatpush1.bf16.msra.mxu0 %v3454
        %3576 = vmatprep.subr.bf16.mxu0 %v3457
        %3577 = vmatpush1.bf16.msra.mxu0 %v3456
        %3578 = vmatprep.mubr.bf16.mxu0 %v281
        %3579 = vmatmul.mubr.bf16.gmra.mrb[0].mxu0 %v280
        %v3580 = vpop.f32.mrb[0].mxu0
        %v3581 = vadd.f32 0.0, %v3580
        %v3582 = vpop.f32.mrb[0].mxu0
        %v3583 = vadd.f32 0.0, %v3582
        %v3584 = vpop.f32.mrb[0].mxu0
        %v3585 = vadd.f32 0.0, %v3584
        %v3586 = vpop.f32.mrb[0].mxu0
        %v3587 = vadd.f32 0.0, %v3586
        %3588 = vdwg.mxu0
        %3589 = vmatprep.subr.bf16.mxu0 %v3459
        %3590 = vmatpush1.bf16.msra.mxu0 %v3458
        %3591 = vmatprep.subr.bf16.mxu0 %v3461
        %3592 = vmatpush1.bf16.msra.mxu0 %v3460
        %3593 = vmatprep.subr.bf16.mxu0 %v3463
        %3594 = vmatpush1.bf16.msra.mxu0 %v3462
        %3595 = vmatprep.subr.bf16.mxu0 %v3465
        %3596 = vmatpush1.bf16.msra.mxu0 %v3464
        %3597 = vmatprep.subr.bf16.mxu0 %v3467
        %3598 = vmatpush1.bf16.msra.mxu0 %v3466
        %3599 = vmatprep.subr.bf16.mxu0 %v3469
        %3600 = vmatpush1.bf16.msra.mxu0 %v3468
        %3601 = vmatprep.subr.bf16.mxu0 %v3471
        %3602 = vmatpush1.bf16.msra.mxu0 %v3470
        %3603 = vmatprep.subr.bf16.mxu0 %v3473
        %3604 = vmatpush1.bf16.msra.mxu0 %v3472
        %3605 = vmatprep.subr.bf16.mxu0 %v3475
        %3606 = vmatpush1.bf16.msra.mxu0 %v3474
        %3607 = vmatprep.subr.bf16.mxu0 %v3477
        %3608 = vmatpush1.bf16.msra.mxu0 %v3476
        %3609 = vmatprep.subr.bf16.mxu0 %v3479
        %3610 = vmatpush1.bf16.msra.mxu0 %v3478
        %3611 = vmatprep.subr.bf16.mxu0 %v3481
        %3612 = vmatpush1.bf16.msra.mxu0 %v3480
        %3613 = vmatprep.subr.bf16.mxu0 %v3544
        %3614 = vmatpush1.bf16.msra.mxu0 %v3541
        %3615 = vmatprep.subr.bf16.mxu0 0
        %3616 = vmatpush1.bf16.msra.mxu0 0
        %3617 = vmatprep.subr.bf16.mxu0 0
        %3618 = vmatpush1.bf16.msra.mxu0 0
        %3619 = vmatprep.subr.bf16.mxu0 0
        %3620 = vmatpush1.bf16.msra.mxu0 0
        %3621 = vmatprep.mubr.bf16.mxu0 %v574
        %3622 = vmatmul.mubr.bf16.gmra.mrb[0].mxu0 %v282
        %v3623 = vpop.f32.mrb[0].mxu0
        %v3624 = vadd.f32 %v3581, %v3623
        %v3625 = vpop.f32.mrb[0].mxu0
        %v3626 = vadd.f32 %v3583, %v3625
        %v3627 = vpop.f32.mrb[0].mxu0
        %v3628 = vadd.f32 %v3585, %v3627
        %v3629 = vpop.f32.mrb[0].mxu0
        %v3630 = vadd.f32 %v3587, %v3629
        %3631 = vdwg.mxu0
        %v3632 = vpack.c.bf16 %v3628, %v3624
        %v3633 = vpack.c.bf16 %v3630, %v3626
        %v3634 = vxor.u32 %v3632, 2147516416
        %v3635 = vxor.u32 %v3633, 2147516416
        %v3637 = vmul.bf16 %v3634, 1069105081
        %v3638 = vpow.bf16.pop %v3637
        %v3640 = vmul.bf16 %v3635, 1069105081
        %v3641 = vpow.bf16.pop %v3640
        %v3642 = vadd.bf16 %v3638, 1065369472
        %v3643 = vadd.bf16 %v3641, 1065369472
        %v3644 = vrcp.bf16.pop %v3642
        %v3645 = vmul.bf16 1065369472, %v3644
        %v3646 = vrcp.bf16.pop %v3643
        %v3647 = vmul.bf16 1065369472, %v3646
        %v3648 = vmul.bf16 %v3632, %v3645
        %v3649 = vmul.bf16 %v3633, %v3647
        %v3650 = vunpack.c.l.bf16 %v3648
        %v3651 = vunpack.c.l.bf16 %v3649
        %v3652 = vunpack.c.h.bf16 %v3648
        %v3653 = vunpack.c.h.bf16 %v3649
        %s3654 = scalar_lea.vmem [#allocation2], 12
        %v3655 = vld [vmem:[%s3654] sm:$0x3]
        %v3656 = vadd.f32 %v3650, %v3652
        %v3657 = vrot.slane %v3656, 4
        %v3658 = vadd.f32 %v3656, %v3657
        %v3659 = vrot.slane %v3658, 2
        %v3660 = vadd.f32 %v3658, %v3659
        %v3661 = vrot.slane %v3660, 1
        %v3662 = vadd.f32 %v3660, %v3661
        %v3663 = vadd.f32 %v3651, %v3653
        %v3664 = vrot.slane %v3663, 4
        %v3665 = vadd.f32 %v3663, %v3664
        %v3666 = vrot.slane %v3665, 2
        %v3667 = vadd.f32 %v3665, %v3666
        %v3668 = vrot.slane %v3667, 1
        %v3669 = vadd.f32 %v3667, %v3668
        %v3672 = vcombine.low %v3662, %v3669
        %v3674 = vunpack.c.l.s4 1966171168
        %v3675 = vunpack.c.0.s8 %v3674
        %v3676 = vlaneseq
        %v3677 = vshrl.u32 %v3676, 7
        %v3678 = vsub.s32 %v3675, %v3677
        %v3679 = vrot.slane %v3672, %v3678
        %v3681 = vunpack.c.l.s4 1966171168
        %v3682 = vunpack.c.0.s8 %v3681
        %v3683 = vlaneseq
        %v3684 = vshrl.u32 %v3683, 7
        %v3685 = vsub.s32 %v3682, %v3684
        %v3686 = vrot.slane %v3679, %v3685
        %v3688 = vadd.f32 %v3655, %v3686
        %3689 = vst.msk [vmem:[%s3654] sm:$0x3] %vm730, %v3688
        // Predicated region
        $region41: #{tpu_custom_call.1} parent=27 // pred_check
          %p3690 = pneg %p197
        $region42: #{tpu_custom_call.1} parent=27 // pred_check_branch
          %3692 = sbr.rel (%p3690) target = $region44
        $region43: #{tpu_custom_call.1} parent=27 // pred_region
          %v3693 = vld [vmem:[#allocation2] sm:$0xff]
          %v3694 = vld [vmem:[#allocation2 + $0x8] sm:$0x3f]
          %v3695 = vmul.f32 %v3693, 0.0625
          %v3696 = vmul.f32 %v3694, 0.0625
          %3697 = vst [vmem:[%s193] sm:$0xff] %v3695
          %vm3698 = vcmp.lt.s32.totalorder %v727, 768
          %vm3699 = vmand %vm728, %vm3698
          %3700 = vst.msk [vmem:[%s193 + $0x8] sm:$0x3f] %vm3699, %v3696
        $region44: #{tpu_custom_call.1} parent=27 // pred_fallthru
          _
        %s3701 = sand.u32 %s89, 1
        %s3702 = scalar_lea.sflag [#allocation5], %s3701
        %s3703 = sand.u32 %s89, 1
        %s3704 = smul.addr %s3703, 14
        %s3705 = scalar_lea.vmem [#allocation8], %s3704
        // Predicated region
        $region45: #{tpu_custom_call.1} parent=27 // pred_check
          %p3706 = pneg %p99
        $region46: #{tpu_custom_call.1} parent=27 // pred_check_branch
          %3708 = sbr.rel (%p3706) target = $region48
        $region47: #{tpu_custom_call.1} parent=27 // pred_region
          %s3710 = ssub.s32 224, 224
          %3711 = vsyncadd %s3702, %s3710
          %s3712 = smul.addr %s24, 14
          %s3713 = smul.addr %s3712, 16
          %s3714 = scalar_lea.hbm %s2, %s3713
          %s3716 = sshll.u32 %s3705, 4
          %s3717 = int_to_ptr.vmem [resolvable:$true] %s3716
          %3719 = dma.vmem_to_hbm [thread:$0]  %s3717, 224, %s3714, %s3702
        $region48: #{tpu_custom_call.1} parent=27 // pred_fallthru
          _
      $region28: #{tpu_custom_call.1} parent=5 // pred_fallthru
        _
      %p3720 = scmp.le.s32.totalorder 2, %s15
      // Predicated region
      $region49: #{tpu_custom_call.1} parent=5 // pred_check
        %p3721 = pneg %p3720
      $region50: #{tpu_custom_call.1} parent=5 // pred_check_branch
        %3723 = sbr.rel (%p3721) target = $region52
      $region51: #{tpu_custom_call.1} parent=5 // pred_region
        %s3724 = ssub.s32 %s15, 2
        // Predicated region
        $region53: #{tpu_custom_call.1} parent=51 // pred_check
          %p3725 = pneg %p105
        $region54: #{tpu_custom_call.1} parent=51 // pred_check_branch
          %3727 = sbr.rel (%p3725) target = $region56
        $region55: #{tpu_custom_call.1} parent=51 // pred_region
          %s3728 = sand.u32 %s90, 1
          %s3729 = scalar_lea.sflag [#allocation5], %s3728
          %s3730 = sand.u32 %s90, 1
          %s3731 = smul.addr %s3730, 14
          %s3732 = scalar_lea.vmem [#allocation8], %s3731
          %3733 = dma.done %s3729, 224
        $region56: #{tpu_custom_call.1} parent=51 // pred_fallthru
          _
      $region52: #{tpu_custom_call.1} parent=5 // pred_fallthru
        _
    $region6: #{tpu_custom_call.1} parent=1 // loop_footer
      %s19 = sadd.s32 1, %s15
    $region7: #{tpu_custom_call.1} parent=1 // loop_footer_branch
      %14 = sbr.rel target = $region3
    $region8: #{tpu_custom_call.1} parent=1 // loop_exit
      _
    %3734 = vsyncpa [#allocation4], 1
    %s3735 = scalar_lea.sflag [#allocation4], 1
    %3736 = vsyncpa %s3735, 1
    %3737 = vsyncpa [#allocation7], 1
    %3738 = vsyncpa [#allocation5], 1
    %s3739 = scalar_lea.sflag [#allocation5], 1
    %3740 = vsyncpa %s3739, 1

</llo_original>
